<compile_context>
chip_gen: v6e
topology: v6e:2x2x1
jax: 0.10.0
libtpu: 0.0.40
codegen_flags: <defaults>
</compile_context>

<pallas_src>
import math
from functools import partial

import jax
import jax.numpy as jnp
from jax.experimental import pallas as pl
from jax.experimental.pallas import tpu as pltpu

EPS = 1e-5
NUM_HEADS = 4
NEG_INF = -1e9

_CPARAMS = pltpu.CompilerParams(
    dimension_semantics=("parallel",),
    vmem_limit_bytes=32 * 1024 * 1024,
)


# ----------------------------- in-kernel helpers -----------------------------

def _layernorm(x, g, b):
    x = x.astype(jnp.float32)
    mean = jnp.mean(x, axis=-1, keepdims=True)
    var = jnp.mean(jnp.square(x - mean), axis=-1, keepdims=True)
    return (x - mean) * jax.lax.rsqrt(var + EPS) * g + b


def _proj_rope(x, w, bias, cos, sin):
    # y = x @ w + b, then rotate-half RoPE with shared (S, D/2) tables.
    y = jnp.dot(x, w, preferred_element_type=jnp.float32) + bias
    half = y.shape[-1] // 2
    y1 = y[:, :half]
    y2 = y[:, half:]
    return jnp.concatenate([y1 * cos - y2 * sin, y2 * cos + y1 * sin], axis=-1)


# ----------------------------- Pallas kernels -----------------------------

def ln_qk_rope_kernel(x_ref, g_ref, b_ref, wq_ref, bq_ref, wk_ref, bk_ref,
                      cos_ref, sin_ref, xn_ref, q_ref, k_ref):
    """LayerNorm + two projections + RoPE, one batch per grid step."""
    xn = _layernorm(x_ref[0], g_ref[...], b_ref[...])
    xn_ref[0] = xn.astype(xn_ref.dtype)
    cos = cos_ref[...]
    sin = sin_ref[...]
    q_ref[0] = _proj_rope(xn, wq_ref[...], bq_ref[...], cos, sin).astype(q_ref.dtype)
    k_ref[0] = _proj_rope(xn, wk_ref[...], bk_ref[...], cos, sin).astype(k_ref.dtype)


def ln_q_rope_kernel(x_ref, g_ref, b_ref, wq_ref, bq_ref, cos_ref, sin_ref,
                     xn_ref, q_ref):
    """LayerNorm + one projection + RoPE (cross-attention query path)."""
    xn = _layernorm(x_ref[0], g_ref[...], b_ref[...])
    xn_ref[0] = xn.astype(xn_ref.dtype)
    q_ref[0] = _proj_rope(xn, wq_ref[...], bq_ref[...], cos_ref[...],
                          sin_ref[...]).astype(q_ref.dtype)


def proj_rope_kernel(x_ref, w_ref, b_ref, cos_ref, sin_ref, o_ref):
    """Projection + RoPE without LayerNorm (cross-attention key on encoder output)."""
    x = x_ref[0].astype(jnp.float32)
    o_ref[0] = _proj_rope(x, w_ref[...], b_ref[...], cos_ref[...],
                          sin_ref[...]).astype(o_ref.dtype)


def attn_out_res_kernel(q_ref, k_ref, v_ref, pad_ref, *rest,
                        num_heads, scale, has_attn_bias):
    """Multi-head attention + output projection + bias + residual, one batch/grid step.

    Heads stay packed along the lane (D) dimension; per-head matmuls use lane slices
    and dot_general over the last dims (no transposes).  Masks are tiny additive
    biases combined here instead of a dense (B*H, Sq, Sk) HBM tensor.
    """
    if has_attn_bias:
        attn_bias_ref, res_ref, wo_ref, bo_ref, o_ref = rest
    else:
        res_ref, wo_ref, bo_ref, o_ref = rest

    q = q_ref[0].astype(jnp.float32) * scale          # fold 1/sqrt(Dh) into q
    k = k_ref[0].astype(jnp.float32)
    v = v_ref[0].astype(jnp.float32)
    sq, d = q.shape
    sk = k.shape[0]
    dh = d // num_heads

    bias = jnp.broadcast_to(pad_ref[0].astype(jnp.float32), (sq, sk))
    if has_attn_bias:
        bias = bias + attn_bias_ref[...].astype(jnp.float32)

    head_outs = []
    for h in range(num_heads):                        # static, small H
        sl = slice(h * dh, (h + 1) * dh)
        s = jax.lax.dot_general(q[:, sl], k[:, sl], (((1,), (1,)), ((), ())),
                                preferred_element_type=jnp.float32)
        s = s + bias
        s = s - jnp.max(s, axis=-1, keepdims=True)
        p = jnp.exp(s)
        p = p * pl.reciprocal(jnp.sum(p, axis=-1, keepdims=True), approx=True)
        head_outs.append(jnp.dot(p, v[:, sl], preferred_element_type=jnp.float32))

    attn = jnp.concatenate(head_outs, axis=-1)        # (Sq, D), lane-dense
    out = jnp.dot(attn, wo_ref[...], preferred_element_type=jnp.float32) + bo_ref[...]
    o_ref[0] = (out + res_ref[0].astype(jnp.float32)).astype(o_ref.dtype)


def ln_ffn_res_kernel(x_ref, g_ref, b_ref, w1_ref, b1_ref, w2_ref, b2_ref, o_ref):
    """LayerNorm + FFN (Linear/ReLU/Linear) + residual, one batch per grid step."""
    xn = _layernorm(x_ref[0], g_ref[...], b_ref[...])
    h = jnp.dot(xn, w1_ref[...], preferred_element_type=jnp.float32) + b1_ref[...]
    h = jnp.maximum(h, 0.0)                           # ReLU; dropout = identity (eval)
    y = jnp.dot(h, w2_ref[...], preferred_element_type=jnp.float32) + b2_ref[...]
    o_ref[0] = (xn + y).astype(o_ref.dtype)


# ----------------------------- wrappers (glue) -----------------------------

def _bspec(S, D):
    return pl.BlockSpec((1, S, D), lambda b: (b, 0, 0))


def _full2(r, c):
    return pl.BlockSpec((r, c), lambda b: (0, 0))


def rope_tables(S, D, start_pos):
    pos = jnp.arange(S, dtype=jnp.float32) + jnp.asarray(start_pos, jnp.float32)
    inv_freq = 1.0 / (10000.0 ** (jnp.arange(0, D // 2, dtype=jnp.float32) * 2.0 / D))
    ang = pos[:, None] * inv_freq[None, :]            # (S, D/2)
    return jnp.cos(ang), jnp.sin(ang)


def fused_self_attn_prep(x, g, b, wq, bq, wk, bk, cos, sin):
    B, S, D = x.shape
    outs = pl.pallas_call(
        ln_qk_rope_kernel,
        grid=(B,),
        in_specs=[
            _bspec(S, D), _full2(1, D), _full2(1, D),
            _full2(D, D), _full2(1, D), _full2(D, D), _full2(1, D),
            _full2(S, D // 2), _full2(S, D // 2),
        ],
        out_specs=(_bspec(S, D), _bspec(S, D), _bspec(S, D)),
        out_shape=(jax.ShapeDtypeStruct((B, S, D), x.dtype),) * 3,
        compiler_params=_CPARAMS,
    )(x, g.reshape(1, D), b.reshape(1, D), wq, bq.reshape(1, D),
      wk, bk.reshape(1, D), cos, sin)
    return outs  # (xn, q, k)


def fused_cross_q_prep(x, g, b, wq, bq, cos, sin):
    B, S, D = x.shape
    outs = pl.pallas_call(
        ln_q_rope_kernel,
        grid=(B,),
        in_specs=[
            _bspec(S, D), _full2(1, D), _full2(1, D),
            _full2(D, D), _full2(1, D),
            _full2(S, D // 2), _full2(S, D // 2),
        ],
        out_specs=(_bspec(S, D), _bspec(S, D)),
        out_shape=(jax.ShapeDtypeStruct((B, S, D), x.dtype),) * 2,
        compiler_params=_CPARAMS,
    )(x, g.reshape(1, D), b.reshape(1, D), wq, bq.reshape(1, D), cos, sin)
    return outs  # (xn, q)


def fused_key_prep(enc, wk, bk, cos, sin):
    B, S, D = enc.shape
    return pl.pallas_call(
        proj_rope_kernel,
        grid=(B,),
        in_specs=[
            _bspec(S, D), _full2(D, D), _full2(1, D),
            _full2(S, D // 2), _full2(S, D // 2),
        ],
        out_specs=_bspec(S, D),
        out_shape=jax.ShapeDtypeStruct((B, S, D), enc.dtype),
        compiler_params=_CPARAMS,
    )(enc, wk, bk.reshape(1, D), cos, sin)


def fused_attention(q, k, v, key_pad_bias, attn_bias, residual, wo, bo, num_heads):
    B, Sq, D = q.shape
    Sk = k.shape[1]
    scale = 1.0 / math.sqrt(D // num_heads)
    has_attn_bias = attn_bias is not None

    in_specs = [
        _bspec(Sq, D),                                   # q
        _bspec(Sk, D),                                   # k
        _bspec(Sk, D),                                   # v
        pl.BlockSpec((1, 1, Sk), lambda b: (b, 0, 0)),   # key padding bias (B, 1, Sk)
    ]
    args = [q, k, v, key_pad_bias]
    if has_attn_bias:
        in_specs.append(_full2(Sq, Sk))                  # shared (Sq, Sk) causal bias
        args.append(attn_bias)
    in_specs += [_bspec(Sq, D), _full2(D, D), _full2(1, D)]
    args += [residual, wo, bo.reshape(1, D)]

    return pl.pallas_call(
        partial(attn_out_res_kernel, num_heads=num_heads, scale=scale,
                has_attn_bias=has_attn_bias),
        grid=(B,),
        in_specs=in_specs,
        out_specs=_bspec(Sq, D),
        out_shape=jax.ShapeDtypeStruct((B, Sq, D), q.dtype),
        compiler_params=_CPARAMS,
    )(*args)


def fused_ln_ffn(x, g, b, w1, b1, w2, b2):
    B, S, D = x.shape
    DFF = w1.shape[1]
    return pl.pallas_call(
        ln_ffn_res_kernel,
        grid=(B,),
        in_specs=[
            _bspec(S, D), _full2(1, D), _full2(1, D),
            _full2(D, DFF), _full2(1, DFF),
            _full2(DFF, D), _full2(1, D),
        ],
        out_specs=_bspec(S, D),
        out_shape=jax.ShapeDtypeStruct((B, S, D), x.dtype),
        compiler_params=_CPARAMS,
    )(x, g.reshape(1, D), b.reshape(1, D), w1, b1.reshape(1, DFF), w2, b2.reshape(1, D))


def _pad_bias(mask, B, Sk):
    if mask is None:
        return jnp.zeros((B, 1, Sk), jnp.float32)
    return jnp.where(mask, NEG_INF, 0.0).astype(jnp.float32).reshape(B, 1, Sk)


def decoder_block_forward(params, x, encoder_output, src_mask, tgt_mask,
                          causal_mask, start_pos):
    # Mirrors the PyTorch forward exactly (pre-norm, residuals on the normed x).
    B, S, D = x.shape
    Se = encoder_output.shape[1]
    cos_d, sin_d = rope_tables(S, D, start_pos)
    # TODO(synk): RoPE on cross-attention keys uses encoder positions from start_pos,
    # matching the previous implementation's assumption about RotaryPositionalEncoding.
    cos_e, sin_e = rope_tables(Se, D, start_pos)

    tgt_bias = _pad_bias(tgt_mask, B, S)
    src_bias = _pad_bias(src_mask, B, Se)
    causal_bias = (None if causal_mask is None
                   else jnp.where(causal_mask, NEG_INF, 0.0).astype(jnp.float32))

    # --- self-attention ---
    xn, q, k = fused_self_attn_prep(x, params["ln0_g"], params["ln0_b"],
                                    params["sa_wq_w"], params["sa_wq_b"],
                                    params["sa_wk_w"], params["sa_wk_b"],
                                    cos_d, sin_d)
    x = fused_attention(q, k, xn, tgt_bias, causal_bias, xn,
                        params["sa_wo_w"], params["sa_wo_b"], NUM_HEADS)

    # --- cross-attention ---
    xn2, ca_q = fused_cross_q_prep(x, params["ln1_g"], params["ln1_b"],
                                   params["ca_wq_w"], params["ca_wq_b"], cos_d, sin_d)
    ca_k = fused_key_prep(encoder_output, params["ca_wk_w"], params["ca_wk_b"],
                          cos_e, sin_e)
    x = fused_attention(ca_q, ca_k, encoder_output, src_bias, None, xn2,
                        params["ca_wo_w"], params["ca_wo_b"], NUM_HEADS)

    # --- feed-forward ---
    x = fused_ln_ffn(x, params["ln2_g"], params["ln2_b"],
                     params["ff_w1"], params["ff_b1"],
                     params["ff_w2"], params["ff_b2"])
    return x


def init_params(key, d_model, d_ff):
    ks = jax.random.split(key, 8)
    s = 0.02
    return {
        "ln0_g": jnp.ones((d_model,), jnp.float32), "ln0_b": jnp.zeros((d_model,), jnp.float32),
        "ln1_g": jnp.ones((d_model,), jnp.float32), "ln1_b": jnp.zeros((d_model,), jnp.float32),
        "ln2_g": jnp.ones((d_model,), jnp.float32), "ln2_b": jnp.zeros((d_model,), jnp.float32),
        "sa_wq_w": s * jax.random.normal(ks[0], (d_model, d_model), jnp.float32),
        "sa_wq_b": jnp.zeros((d_model,), jnp.float32),
        "sa_wk_w": s * jax.random.normal(ks[1], (d_model, d_model), jnp.float32),
        "sa_wk_b": jnp.zeros((d_model,), jnp.float32),
        "sa_wo_w": s * jax.random.normal(ks[2], (d_model, d_model), jnp.float32),
        "sa_wo_b": jnp.zeros((d_model,), jnp.float32),
        "ca_wq_w": s * jax.random.normal(ks[3], (d_model, d_model), jnp.float32),
        "ca_wq_b": jnp.zeros((d_model,), jnp.float32),
        "ca_wk_w": s * jax.random.normal(ks[4], (d_model, d_model), jnp.float32),
        "ca_wk_b": jnp.zeros((d_model,), jnp.float32),
        "ca_wo_w": s * jax.random.normal(ks[5], (d_model, d_model), jnp.float32),
        "ca_wo_b": jnp.zeros((d_model,), jnp.float32),
        "ff_w1": s * jax.random.normal(ks[6], (d_model, d_ff), jnp.float32),
        "ff_b1": jnp.zeros((d_ff,), jnp.float32),
        "ff_w2": s * jax.random.normal(ks[7], (d_ff, d_model), jnp.float32),
        "ff_b2": jnp.zeros((d_model,), jnp.float32),
    }


if __name__ == "__main__":
    B, S, D, DFF = 2, 8, 32, 64
    key = jax.random.PRNGKey(0)
    kx, ke, kp = jax.random.split(key, 3)

    x = jax.random.normal(kx, (B, S, D), jnp.float32)
    encoder_output = jax.random.normal(ke, (B, S, D), jnp.float32)
    params = init_params(kp, D, DFF)

    # bool masks: True = masked
    tgt_mask = jnp.zeros((B, S), bool).at[:, S - 2:].set(True)   # pad last 2 decoder positions
    src_mask = jnp.zeros((B, S), bool).at[:, S - 1:].set(True)   # pad last encoder position
    causal_mask = jnp.triu(jnp.ones((S, S), bool), k=1)          # strictly-upper = masked
    start_pos = 0

    # TODO(synk): KVCache is held but unused in the reference forward; not modeled here.
    fwd = jax.jit(decoder_block_forward)
    out = fwd(params, x, encoder_output, src_mask, tgt_mask, causal_mask, start_pos)
    jax.block_until_ready(out)
    assert out.shape == (B, S, D) and bool(jnp.all(jnp.isfinite(out)))
    print("KERNEL_OK")
</pallas_src>

<mosaic_0001>
module attributes {stable_mosaic.version = 11 : i64} {
  func.func @ln_qk_rope_kernel(%arg0: i32, %arg1: memref<1x8x32xf32, #tpu.memory_space<vmem>>, %arg2: memref<1x32xf32, #tpu.memory_space<vmem>>, %arg3: memref<1x32xf32, #tpu.memory_space<vmem>>, %arg4: memref<32x32xf32, #tpu.memory_space<vmem>>, %arg5: memref<1x32xf32, #tpu.memory_space<vmem>>, %arg6: memref<32x32xf32, #tpu.memory_space<vmem>>, %arg7: memref<1x32xf32, #tpu.memory_space<vmem>>, %arg8: memref<8x16xf32, #tpu.memory_space<vmem>>, %arg9: memref<8x16xf32, #tpu.memory_space<vmem>>, %arg10: memref<1x8x32xf32, #tpu.memory_space<vmem>>, %arg11: memref<1x8x32xf32, #tpu.memory_space<vmem>>, %arg12: memref<1x8x32xf32, #tpu.memory_space<vmem>>) attributes {dimension_semantics = [#tpu.dimension_semantics<parallel>], iteration_bounds = array<i64: 2>, scalar_prefetch = 0 : i64, scratch_operands = 0 : i64, tpu.core_type = #tpu.core_type<tc>, window_params = [{transform_indices = @transform_0, window_bounds = array<i64: 1, 8, 32>}, {pipeline_mode = #tpu.pipeline_mode<synchronous>, transform_indices = @transform_1, window_bounds = array<i64: 1, 32>}, {pipeline_mode = #tpu.pipeline_mode<synchronous>, transform_indices = @transform_2, window_bounds = array<i64: 1, 32>}, {pipeline_mode = #tpu.pipeline_mode<synchronous>, transform_indices = @transform_3, window_bounds = array<i64: 32, 32>}, {pipeline_mode = #tpu.pipeline_mode<synchronous>, transform_indices = @transform_4, window_bounds = array<i64: 1, 32>}, {pipeline_mode = #tpu.pipeline_mode<synchronous>, transform_indices = @transform_5, window_bounds = array<i64: 32, 32>}, {pipeline_mode = #tpu.pipeline_mode<synchronous>, transform_indices = @transform_6, window_bounds = array<i64: 1, 32>}, {pipeline_mode = #tpu.pipeline_mode<synchronous>, transform_indices = @transform_7, window_bounds = array<i64: 8, 16>}, {pipeline_mode = #tpu.pipeline_mode<synchronous>, transform_indices = @transform_8, window_bounds = array<i64: 8, 16>}, {transform_indices = @transform_9, window_bounds = array<i64: 1, 8, 32>}, {transform_indices = @transform_10, window_bounds = array<i64: 1, 8, 32>}, {transform_indices = @transform_11, window_bounds = array<i64: 1, 8, 32>}]} {
    %c0 = arith.constant 0 : index
    %c0_0 = arith.constant 0 : index
    %c0_1 = arith.constant 0 : index
    %0 = vector.load %arg1[%c0, %c0_0, %c0_1] : memref<1x8x32xf32, #tpu.memory_space<vmem>>, vector<1x8x32xf32>
    %1 = vector.shape_cast %0 : vector<1x8x32xf32> to vector<8x32xf32>
    %c0_2 = arith.constant 0 : index
    %c0_3 = arith.constant 0 : index
    %2 = vector.load %arg2[%c0_2, %c0_3] : memref<1x32xf32, #tpu.memory_space<vmem>>, vector<1x32xf32>
    %c0_4 = arith.constant 0 : index
    %c0_5 = arith.constant 0 : index
    %3 = vector.load %arg3[%c0_4, %c0_5] : memref<1x32xf32, #tpu.memory_space<vmem>>, vector<1x32xf32>
    %cst = arith.constant dense<0.000000e+00> : vector<8xf32>
    %4 = vector.multi_reduction <add>, %1, %cst [1] : vector<8x32xf32> to vector<8xf32>
    %5 = vector.shape_cast %4 : vector<8xf32> to vector<8x1xf32>
    %cst_6 = arith.constant 3.200000e+01 : f32
    %6 = vector.broadcast %cst_6 : f32 to vector<8x1xf32>
    %7 = arith.divf %5, %6 : vector<8x1xf32>
    %8 = vector.broadcast %7 : vector<8x1xf32> to vector<8x32xf32>
    %9 = arith.subf %1, %8 : vector<8x32xf32>
    %10 = arith.mulf %9, %9 : vector<8x32xf32>
    %cst_7 = arith.constant dense<0.000000e+00> : vector<8xf32>
    %11 = vector.multi_reduction <add>, %10, %cst_7 [1] : vector<8x32xf32> to vector<8xf32>
    %12 = vector.shape_cast %11 : vector<8xf32> to vector<8x1xf32>
    %cst_8 = arith.constant 3.200000e+01 : f32
    %13 = vector.broadcast %cst_8 : f32 to vector<8x1xf32>
    %14 = arith.divf %12, %13 : vector<8x1xf32>
    %15 = vector.broadcast %7 : vector<8x1xf32> to vector<8x32xf32>
    %16 = arith.subf %1, %15 : vector<8x32xf32>
    %cst_9 = arith.constant 9.99999974E-6 : f32
    %17 = vector.broadcast %cst_9 : f32 to vector<8x1xf32>
    %18 = arith.addf %14, %17 : vector<8x1xf32>
    %19 = math.rsqrt %18 : vector<8x1xf32>
    %20 = vector.broadcast %19 : vector<8x1xf32> to vector<8x32xf32>
    %21 = arith.mulf %16, %20 : vector<8x32xf32>
    %22 = vector.broadcast %2 : vector<1x32xf32> to vector<8x32xf32>
    %23 = arith.mulf %21, %22 : vector<8x32xf32>
    %24 = vector.broadcast %3 : vector<1x32xf32> to vector<8x32xf32>
    %25 = arith.addf %23, %24 : vector<8x32xf32>
    %c0_10 = arith.constant 0 : index
    %c0_11 = arith.constant 0 : index
    %c0_12 = arith.constant 0 : index
    %26 = vector.load %arg10[%c0_10, %c0_11, %c0_12] : memref<1x8x32xf32, #tpu.memory_space<vmem>>, vector<1x8x32xf32>
    %27 = vector.shape_cast %26 : vector<1x8x32xf32> to vector<8x32xf32>
    %28 = vector.shape_cast %25 : vector<8x32xf32> to vector<1x8x32xf32>
    tpu.vector_store %arg10[%c0_10, %c0_11, %c0_12], %28 {strides = array<i32>} : memref<1x8x32xf32, #tpu.memory_space<vmem>>, vector<1x8x32xf32>,
    %c0_13 = arith.constant 0 : index
    %c0_14 = arith.constant 0 : index
    %29 = vector.load %arg8[%c0_13, %c0_14] : memref<8x16xf32, #tpu.memory_space<vmem>>, vector<8x16xf32>
    %c0_15 = arith.constant 0 : index
    %c0_16 = arith.constant 0 : index
    %30 = vector.load %arg9[%c0_15, %c0_16] : memref<8x16xf32, #tpu.memory_space<vmem>>, vector<8x16xf32>
    %c0_17 = arith.constant 0 : index
    %c0_18 = arith.constant 0 : index
    %31 = vector.load %arg4[%c0_17, %c0_18] : memref<32x32xf32, #tpu.memory_space<vmem>>, vector<32x32xf32>
    %c0_19 = arith.constant 0 : index
    %c0_20 = arith.constant 0 : index
    %32 = vector.load %arg5[%c0_19, %c0_20] : memref<1x32xf32, #tpu.memory_space<vmem>>, vector<1x32xf32>
    %cst_21 = arith.constant dense<0.000000e+00> : vector<8x32xf32>
    %33 = tpu.matmul %25, %31, %cst_21 {dimension_numbers = #tpu.dot_dimension_numbers<[1], [0], [0], [1], [0, 0, 1, 1], [], []>} : vector<8x32xf32>, vector<32x32xf32>, vector<8x32xf32> -> vector<8x32xf32>
    %34 = vector.broadcast %32 : vector<1x32xf32> to vector<8x32xf32>
    %35 = arith.addf %33, %34 : vector<8x32xf32>
    %36 = vector.extract_strided_slice %35 {offsets = [0, 0], sizes = [8, 16], strides = [1, 1]} : vector<8x32xf32> to vector<8x16xf32>
    %37 = vector.extract_strided_slice %35 {offsets = [0, 16], sizes = [8, 16], strides = [1, 1]} : vector<8x32xf32> to vector<8x16xf32>
    %38 = arith.mulf %36, %29 : vector<8x16xf32>
    %39 = arith.mulf %37, %30 : vector<8x16xf32>
    %40 = arith.subf %38, %39 : vector<8x16xf32>
    %41 = arith.mulf %37, %29 : vector<8x16xf32>
    %42 = arith.mulf %36, %30 : vector<8x16xf32>
    %43 = arith.addf %41, %42 : vector<8x16xf32>
    %44 = tpu.concatenate %40, %43 in 1 : vector<8x16xf32>, vector<8x16xf32> -> vector<8x32xf32>
    %c0_22 = arith.constant 0 : index
    %c0_23 = arith.constant 0 : index
    %c0_24 = arith.constant 0 : index
    %45 = vector.load %arg11[%c0_22, %c0_23, %c0_24] : memref<1x8x32xf32, #tpu.memory_space<vmem>>, vector<1x8x32xf32>
    %46 = vector.shape_cast %45 : vector<1x8x32xf32> to vector<8x32xf32>
    %47 = vector.shape_cast %44 : vector<8x32xf32> to vector<1x8x32xf32>
    tpu.vector_store %arg11[%c0_22, %c0_23, %c0_24], %47 {strides = array<i32>} : memref<1x8x32xf32, #tpu.memory_space<vmem>>, vector<1x8x32xf32>,
    %c0_25 = arith.constant 0 : index
    %c0_26 = arith.constant 0 : index
    %48 = vector.load %arg6[%c0_25, %c0_26] : memref<32x32xf32, #tpu.memory_space<vmem>>, vector<32x32xf32>
    %c0_27 = arith.constant 0 : index
    %c0_28 = arith.constant 0 : index
    %49 = vector.load %arg7[%c0_27, %c0_28] : memref<1x32xf32, #tpu.memory_space<vmem>>, vector<1x32xf32>
    %cst_29 = arith.constant dense<0.000000e+00> : vector<8x32xf32>
    %50 = tpu.matmul %25, %48, %cst_29 {dimension_numbers = #tpu.dot_dimension_numbers<[1], [0], [0], [1], [0, 0, 1, 1], [], []>} : vector<8x32xf32>, vector<32x32xf32>, vector<8x32xf32> -> vector<8x32xf32>
    %51 = vector.broadcast %49 : vector<1x32xf32> to vector<8x32xf32>
    %52 = arith.addf %50, %51 : vector<8x32xf32>
    %53 = vector.extract_strided_slice %52 {offsets = [0, 0], sizes = [8, 16], strides = [1, 1]} : vector<8x32xf32> to vector<8x16xf32>
    %54 = vector.extract_strided_slice %52 {offsets = [0, 16], sizes = [8, 16], strides = [1, 1]} : vector<8x32xf32> to vector<8x16xf32>
    %55 = arith.mulf %53, %29 : vector<8x16xf32>
    %56 = arith.mulf %54, %30 : vector<8x16xf32>
    %57 = arith.subf %55, %56 : vector<8x16xf32>
    %58 = arith.mulf %54, %29 : vector<8x16xf32>
    %59 = arith.mulf %53, %30 : vector<8x16xf32>
    %60 = arith.addf %58, %59 : vector<8x16xf32>
    %61 = tpu.concatenate %57, %60 in 1 : vector<8x16xf32>, vector<8x16xf32> -> vector<8x32xf32>
    %c0_30 = arith.constant 0 : index
    %c0_31 = arith.constant 0 : index
    %c0_32 = arith.constant 0 : index
    %62 = vector.load %arg12[%c0_30, %c0_31, %c0_32] : memref<1x8x32xf32, #tpu.memory_space<vmem>>, vector<1x8x32xf32>
    %63 = vector.shape_cast %62 : vector<1x8x32xf32> to vector<8x32xf32>
    %64 = vector.shape_cast %61 : vector<8x32xf32> to vector<1x8x32xf32>
    tpu.vector_store %arg12[%c0_30, %c0_31, %c0_32], %64 {strides = array<i32>} : memref<1x8x32xf32, #tpu.memory_space<vmem>>, vector<1x8x32xf32>,
    return
  }
  func.func @transform_0(%arg0: i32) -> (i32, i32, i32) {
    %c0_i32 = arith.constant 0 : i32
    %c0_i32_0 = arith.constant 0 : i32
    %c0_i32_1 = arith.constant 0 : i32
    return %arg0, %c0_i32, %c0_i32_0 : i32, i32, i32
  }
  func.func @transform_1(%arg0: i32) -> (i32, i32) {
    %c0_i32 = arith.constant 0 : i32
    %c0_i32_0 = arith.constant 0 : i32
    %c0_i32_1 = arith.constant 0 : i32
    return %c0_i32, %c0_i32_0 : i32, i32
  }
  func.func @transform_2(%arg0: i32) -> (i32, i32) {
    %c0_i32 = arith.constant 0 : i32
    %c0_i32_0 = arith.constant 0 : i32
    %c0_i32_1 = arith.constant 0 : i32
    return %c0_i32, %c0_i32_0 : i32, i32
  }
  func.func @transform_3(%arg0: i32) -> (i32, i32) {
    %c0_i32 = arith.constant 0 : i32
    %c0_i32_0 = arith.constant 0 : i32
    %c0_i32_1 = arith.constant 0 : i32
    return %c0_i32, %c0_i32_0 : i32, i32
  }
  func.func @transform_4(%arg0: i32) -> (i32, i32) {
    %c0_i32 = arith.constant 0 : i32
    %c0_i32_0 = arith.constant 0 : i32
    %c0_i32_1 = arith.constant 0 : i32
    return %c0_i32, %c0_i32_0 : i32, i32
  }
  func.func @transform_5(%arg0: i32) -> (i32, i32) {
    %c0_i32 = arith.constant 0 : i32
    %c0_i32_0 = arith.constant 0 : i32
    %c0_i32_1 = arith.constant 0 : i32
    return %c0_i32, %c0_i32_0 : i32, i32
  }
  func.func @transform_6(%arg0: i32) -> (i32, i32) {
    %c0_i32 = arith.constant 0 : i32
    %c0_i32_0 = arith.constant 0 : i32
    %c0_i32_1 = arith.constant 0 : i32
    return %c0_i32, %c0_i32_0 : i32, i32
  }
  func.func @transform_7(%arg0: i32) -> (i32, i32) {
    %c0_i32 = arith.constant 0 : i32
    %c0_i32_0 = arith.constant 0 : i32
    %c0_i32_1 = arith.constant 0 : i32
    return %c0_i32, %c0_i32_0 : i32, i32
  }
  func.func @transform_8(%arg0: i32) -> (i32, i32) {
    %c0_i32 = arith.constant 0 : i32
    %c0_i32_0 = arith.constant 0 : i32
    %c0_i32_1 = arith.constant 0 : i32
    return %c0_i32, %c0_i32_0 : i32, i32
  }
  func.func @transform_9(%arg0: i32) -> (i32, i32, i32) {
    %c0_i32 = arith.constant 0 : i32
    %c0_i32_0 = arith.constant 0 : i32
    %c0_i32_1 = arith.constant 0 : i32
    return %arg0, %c0_i32, %c0_i32_0 : i32, i32, i32
  }
  func.func @transform_10(%arg0: i32) -> (i32, i32, i32) {
    %c0_i32 = arith.constant 0 : i32
    %c0_i32_0 = arith.constant 0 : i32
    %c0_i32_1 = arith.constant 0 : i32
    return %arg0, %c0_i32, %c0_i32_0 : i32, i32, i32
  }
  func.func @transform_11(%arg0: i32) -> (i32, i32, i32) {
    %c0_i32 = arith.constant 0 : i32
    %c0_i32_0 = arith.constant 0 : i32
    %c0_i32_1 = arith.constant 0 : i32
    return %arg0, %c0_i32, %c0_i32_0 : i32, i32, i32
  }
}

module attributes {stable_mosaic.version = 11 : i64} {
  func.func @ln_q_rope_kernel(%arg0: i32, %arg1: memref<1x8x32xf32, #tpu.memory_space<vmem>>, %arg2: memref<1x32xf32, #tpu.memory_space<vmem>>, %arg3: memref<1x32xf32, #tpu.memory_space<vmem>>, %arg4: memref<32x32xf32, #tpu.memory_space<vmem>>, %arg5: memref<1x32xf32, #tpu.memory_space<vmem>>, %arg6: memref<8x16xf32, #tpu.memory_space<vmem>>, %arg7: memref<8x16xf32, #tpu.memory_space<vmem>>, %arg8: memref<1x8x32xf32, #tpu.memory_space<vmem>>, %arg9: memref<1x8x32xf32, #tpu.memory_space<vmem>>) attributes {dimension_semantics = [#tpu.dimension_semantics<parallel>], iteration_bounds = array<i64: 2>, scalar_prefetch = 0 : i64, scratch_operands = 0 : i64, tpu.core_type = #tpu.core_type<tc>, window_params = [{transform_indices = @transform_0, window_bounds = array<i64: 1, 8, 32>}, {pipeline_mode = #tpu.pipeline_mode<synchronous>, transform_indices = @transform_1, window_bounds = array<i64: 1, 32>}, {pipeline_mode = #tpu.pipeline_mode<synchronous>, transform_indices = @transform_2, window_bounds = array<i64: 1, 32>}, {pipeline_mode = #tpu.pipeline_mode<synchronous>, transform_indices = @transform_3, window_bounds = array<i64: 32, 32>}, {pipeline_mode = #tpu.pipeline_mode<synchronous>, transform_indices = @transform_4, window_bounds = array<i64: 1, 32>}, {pipeline_mode = #tpu.pipeline_mode<synchronous>, transform_indices = @transform_5, window_bounds = array<i64: 8, 16>}, {pipeline_mode = #tpu.pipeline_mode<synchronous>, transform_indices = @transform_6, window_bounds = array<i64: 8, 16>}, {transform_indices = @transform_7, window_bounds = array<i64: 1, 8, 32>}, {transform_indices = @transform_8, window_bounds = array<i64: 1, 8, 32>}]} {
    %c0 = arith.constant 0 : index
    %c0_0 = arith.constant 0 : index
    %c0_1 = arith.constant 0 : index
    %0 = vector.load %arg1[%c0, %c0_0, %c0_1] : memref<1x8x32xf32, #tpu.memory_space<vmem>>, vector<1x8x32xf32>
    %1 = vector.shape_cast %0 : vector<1x8x32xf32> to vector<8x32xf32>
    %c0_2 = arith.constant 0 : index
    %c0_3 = arith.constant 0 : index
    %2 = vector.load %arg2[%c0_2, %c0_3] : memref<1x32xf32, #tpu.memory_space<vmem>>, vector<1x32xf32>
    %c0_4 = arith.constant 0 : index
    %c0_5 = arith.constant 0 : index
    %3 = vector.load %arg3[%c0_4, %c0_5] : memref<1x32xf32, #tpu.memory_space<vmem>>, vector<1x32xf32>
    %cst = arith.constant dense<0.000000e+00> : vector<8xf32>
    %4 = vector.multi_reduction <add>, %1, %cst [1] : vector<8x32xf32> to vector<8xf32>
    %5 = vector.shape_cast %4 : vector<8xf32> to vector<8x1xf32>
    %cst_6 = arith.constant 3.200000e+01 : f32
    %6 = vector.broadcast %cst_6 : f32 to vector<8x1xf32>
    %7 = arith.divf %5, %6 : vector<8x1xf32>
    %8 = vector.broadcast %7 : vector<8x1xf32> to vector<8x32xf32>
    %9 = arith.subf %1, %8 : vector<8x32xf32>
    %10 = arith.mulf %9, %9 : vector<8x32xf32>
    %cst_7 = arith.constant dense<0.000000e+00> : vector<8xf32>
    %11 = vector.multi_reduction <add>, %10, %cst_7 [1] : vector<8x32xf32> to vector<8xf32>
    %12 = vector.shape_cast %11 : vector<8xf32> to vector<8x1xf32>
    %cst_8 = arith.constant 3.200000e+01 : f32
    %13 = vector.broadcast %cst_8 : f32 to vector<8x1xf32>
    %14 = arith.divf %12, %13 : vector<8x1xf32>
    %15 = vector.broadcast %7 : vector<8x1xf32> to vector<8x32xf32>
    %16 = arith.subf %1, %15 : vector<8x32xf32>
    %cst_9 = arith.constant 9.99999974E-6 : f32
    %17 = vector.broadcast %cst_9 : f32 to vector<8x1xf32>
    %18 = arith.addf %14, %17 : vector<8x1xf32>
    %19 = math.rsqrt %18 : vector<8x1xf32>
    %20 = vector.broadcast %19 : vector<8x1xf32> to vector<8x32xf32>
    %21 = arith.mulf %16, %20 : vector<8x32xf32>
    %22 = vector.broadcast %2 : vector<1x32xf32> to vector<8x32xf32>
    %23 = arith.mulf %21, %22 : vector<8x32xf32>
    %24 = vector.broadcast %3 : vector<1x32xf32> to vector<8x32xf32>
    %25 = arith.addf %23, %24 : vector<8x32xf32>
    %c0_10 = arith.constant 0 : index
    %c0_11 = arith.constant 0 : index
    %c0_12 = arith.constant 0 : index
    %26 = vector.load %arg8[%c0_10, %c0_11, %c0_12] : memref<1x8x32xf32, #tpu.memory_space<vmem>>, vector<1x8x32xf32>
    %27 = vector.shape_cast %26 : vector<1x8x32xf32> to vector<8x32xf32>
    %28 = vector.shape_cast %25 : vector<8x32xf32> to vector<1x8x32xf32>
    tpu.vector_store %arg8[%c0_10, %c0_11, %c0_12], %28 {strides = array<i32>} : memref<1x8x32xf32, #tpu.memory_space<vmem>>, vector<1x8x32xf32>,
    %c0_13 = arith.constant 0 : index
    %c0_14 = arith.constant 0 : index
    %29 = vector.load %arg4[%c0_13, %c0_14] : memref<32x32xf32, #tpu.memory_space<vmem>>, vector<32x32xf32>
    %c0_15 = arith.constant 0 : index
    %c0_16 = arith.constant 0 : index
    %30 = vector.load %arg5[%c0_15, %c0_16] : memref<1x32xf32, #tpu.memory_space<vmem>>, vector<1x32xf32>
    %c0_17 = arith.constant 0 : index
    %c0_18 = arith.constant 0 : index
    %31 = vector.load %arg6[%c0_17, %c0_18] : memref<8x16xf32, #tpu.memory_space<vmem>>, vector<8x16xf32>
    %c0_19 = arith.constant 0 : index
    %c0_20 = arith.constant 0 : index
    %32 = vector.load %arg7[%c0_19, %c0_20] : memref<8x16xf32, #tpu.memory_space<vmem>>, vector<8x16xf32>
    %cst_21 = arith.constant dense<0.000000e+00> : vector<8x32xf32>
    %33 = tpu.matmul %25, %29, %cst_21 {dimension_numbers = #tpu.dot_dimension_numbers<[1], [0], [0], [1], [0, 0, 1, 1], [], []>} : vector<8x32xf32>, vector<32x32xf32>, vector<8x32xf32> -> vector<8x32xf32>
    %34 = vector.broadcast %30 : vector<1x32xf32> to vector<8x32xf32>
    %35 = arith.addf %33, %34 : vector<8x32xf32>
    %36 = vector.extract_strided_slice %35 {offsets = [0, 0], sizes = [8, 16], strides = [1, 1]} : vector<8x32xf32> to vector<8x16xf32>
    %37 = vector.extract_strided_slice %35 {offsets = [0, 16], sizes = [8, 16], strides = [1, 1]} : vector<8x32xf32> to vector<8x16xf32>
    %38 = arith.mulf %36, %31 : vector<8x16xf32>
    %39 = arith.mulf %37, %32 : vector<8x16xf32>
    %40 = arith.subf %38, %39 : vector<8x16xf32>
    %41 = arith.mulf %37, %31 : vector<8x16xf32>
    %42 = arith.mulf %36, %32 : vector<8x16xf32>
    %43 = arith.addf %41, %42 : vector<8x16xf32>
    %44 = tpu.concatenate %40, %43 in 1 : vector<8x16xf32>, vector<8x16xf32> -> vector<8x32xf32>
    %c0_22 = arith.constant 0 : index
    %c0_23 = arith.constant 0 : index
    %c0_24 = arith.constant 0 : index
    %45 = vector.load %arg9[%c0_22, %c0_23, %c0_24] : memref<1x8x32xf32, #tpu.memory_space<vmem>>, vector<1x8x32xf32>
    %46 = vector.shape_cast %45 : vector<1x8x32xf32> to vector<8x32xf32>
    %47 = vector.shape_cast %44 : vector<8x32xf32> to vector<1x8x32xf32>
    tpu.vector_store %arg9[%c0_22, %c0_23, %c0_24], %47 {strides = array<i32>} : memref<1x8x32xf32, #tpu.memory_space<vmem>>, vector<1x8x32xf32>,
    return
  }
  func.func @transform_0(%arg0: i32) -> (i32, i32, i32) {
    %c0_i32 = arith.constant 0 : i32
    %c0_i32_0 = arith.constant 0 : i32
    %c0_i32_1 = arith.constant 0 : i32
    return %arg0, %c0_i32, %c0_i32_0 : i32, i32, i32
  }
  func.func @transform_1(%arg0: i32) -> (i32, i32) {
    %c0_i32 = arith.constant 0 : i32
    %c0_i32_0 = arith.constant 0 : i32
    %c0_i32_1 = arith.constant 0 : i32
    return %c0_i32, %c0_i32_0 : i32, i32
  }
  func.func @transform_2(%arg0: i32) -> (i32, i32) {
    %c0_i32 = arith.constant 0 : i32
    %c0_i32_0 = arith.constant 0 : i32
    %c0_i32_1 = arith.constant 0 : i32
    return %c0_i32, %c0_i32_0 : i32, i32
  }
  func.func @transform_3(%arg0: i32) -> (i32, i32) {
    %c0_i32 = arith.constant 0 : i32
    %c0_i32_0 = arith.constant 0 : i32
    %c0_i32_1 = arith.constant 0 : i32
    return %c0_i32, %c0_i32_0 : i32, i32
  }
  func.func @transform_4(%arg0: i32) -> (i32, i32) {
    %c0_i32 = arith.constant 0 : i32
    %c0_i32_0 = arith.constant 0 : i32
    %c0_i32_1 = arith.constant 0 : i32
    return %c0_i32, %c0_i32_0 : i32, i32
  }
  func.func @transform_5(%arg0: i32) -> (i32, i32) {
    %c0_i32 = arith.constant 0 : i32
    %c0_i32_0 = arith.constant 0 : i32
    %c0_i32_1 = arith.constant 0 : i32
    return %c0_i32, %c0_i32_0 : i32, i32
  }
  func.func @transform_6(%arg0: i32) -> (i32, i32) {
    %c0_i32 = arith.constant 0 : i32
    %c0_i32_0 = arith.constant 0 : i32
    %c0_i32_1 = arith.constant 0 : i32
    return %c0_i32, %c0_i32_0 : i32, i32
  }
  func.func @transform_7(%arg0: i32) -> (i32, i32, i32) {
    %c0_i32 = arith.constant 0 : i32
    %c0_i32_0 = arith.constant 0 : i32
    %c0_i32_1 = arith.constant 0 : i32
    return %arg0, %c0_i32, %c0_i32_0 : i32, i32, i32
  }
  func.func @transform_8(%arg0: i32) -> (i32, i32, i32) {
    %c0_i32 = arith.constant 0 : i32
    %c0_i32_0 = arith.constant 0 : i32
    %c0_i32_1 = arith.constant 0 : i32
    return %arg0, %c0_i32, %c0_i32_0 : i32, i32, i32
  }
}

module attributes {stable_mosaic.version = 11 : i64} {
  func.func @proj_rope_kernel(%arg0: i32, %arg1: memref<1x8x32xf32, #tpu.memory_space<vmem>>, %arg2: memref<32x32xf32, #tpu.memory_space<vmem>>, %arg3: memref<1x32xf32, #tpu.memory_space<vmem>>, %arg4: memref<8x16xf32, #tpu.memory_space<vmem>>, %arg5: memref<8x16xf32, #tpu.memory_space<vmem>>, %arg6: memref<1x8x32xf32, #tpu.memory_space<vmem>>) attributes {dimension_semantics = [#tpu.dimension_semantics<parallel>], iteration_bounds = array<i64: 2>, scalar_prefetch = 0 : i64, scratch_operands = 0 : i64, tpu.core_type = #tpu.core_type<tc>, window_params = [{transform_indices = @transform_0, window_bounds = array<i64: 1, 8, 32>}, {pipeline_mode = #tpu.pipeline_mode<synchronous>, transform_indices = @transform_1, window_bounds = array<i64: 32, 32>}, {pipeline_mode = #tpu.pipeline_mode<synchronous>, transform_indices = @transform_2, window_bounds = array<i64: 1, 32>}, {pipeline_mode = #tpu.pipeline_mode<synchronous>, transform_indices = @transform_3, window_bounds = array<i64: 8, 16>}, {pipeline_mode = #tpu.pipeline_mode<synchronous>, transform_indices = @transform_4, window_bounds = array<i64: 8, 16>}, {transform_indices = @transform_5, window_bounds = array<i64: 1, 8, 32>}]} {
    %c0 = arith.constant 0 : index
    %c0_0 = arith.constant 0 : index
    %c0_1 = arith.constant 0 : index
    %0 = vector.load %arg1[%c0, %c0_0, %c0_1] : memref<1x8x32xf32, #tpu.memory_space<vmem>>, vector<1x8x32xf32>
    %1 = vector.shape_cast %0 : vector<1x8x32xf32> to vector<8x32xf32>
    %c0_2 = arith.constant 0 : index
    %c0_3 = arith.constant 0 : index
    %2 = vector.load %arg2[%c0_2, %c0_3] : memref<32x32xf32, #tpu.memory_space<vmem>>, vector<32x32xf32>
    %c0_4 = arith.constant 0 : index
    %c0_5 = arith.constant 0 : index
    %3 = vector.load %arg3[%c0_4, %c0_5] : memref<1x32xf32, #tpu.memory_space<vmem>>, vector<1x32xf32>
    %c0_6 = arith.constant 0 : index
    %c0_7 = arith.constant 0 : index
    %4 = vector.load %arg4[%c0_6, %c0_7] : memref<8x16xf32, #tpu.memory_space<vmem>>, vector<8x16xf32>
    %c0_8 = arith.constant 0 : index
    %c0_9 = arith.constant 0 : index
    %5 = vector.load %arg5[%c0_8, %c0_9] : memref<8x16xf32, #tpu.memory_space<vmem>>, vector<8x16xf32>
    %cst = arith.constant dense<0.000000e+00> : vector<8x32xf32>
    %6 = tpu.matmul %1, %2, %cst {dimension_numbers = #tpu.dot_dimension_numbers<[1], [0], [0], [1], [0, 0, 1, 1], [], []>} : vector<8x32xf32>, vector<32x32xf32>, vector<8x32xf32> -> vector<8x32xf32>
    %7 = vector.broadcast %3 : vector<1x32xf32> to vector<8x32xf32>
    %8 = arith.addf %6, %7 : vector<8x32xf32>
    %9 = vector.extract_strided_slice %8 {offsets = [0, 0], sizes = [8, 16], strides = [1, 1]} : vector<8x32xf32> to vector<8x16xf32>
    %10 = vector.extract_strided_slice %8 {offsets = [0, 16], sizes = [8, 16], strides = [1, 1]} : vector<8x32xf32> to vector<8x16xf32>
    %11 = arith.mulf %9, %4 : vector<8x16xf32>
    %12 = arith.mulf %10, %5 : vector<8x16xf32>
    %13 = arith.subf %11, %12 : vector<8x16xf32>
    %14 = arith.mulf %10, %4 : vector<8x16xf32>
    %15 = arith.mulf %9, %5 : vector<8x16xf32>
    %16 = arith.addf %14, %15 : vector<8x16xf32>
    %17 = tpu.concatenate %13, %16 in 1 : vector<8x16xf32>, vector<8x16xf32> -> vector<8x32xf32>
    %c0_10 = arith.constant 0 : index
    %c0_11 = arith.constant 0 : index
    %c0_12 = arith.constant 0 : index
    %18 = vector.load %arg6[%c0_10, %c0_11, %c0_12] : memref<1x8x32xf32, #tpu.memory_space<vmem>>, vector<1x8x32xf32>
    %19 = vector.shape_cast %18 : vector<1x8x32xf32> to vector<8x32xf32>
    %20 = vector.shape_cast %17 : vector<8x32xf32> to vector<1x8x32xf32>
    tpu.vector_store %arg6[%c0_10, %c0_11, %c0_12], %20 {strides = array<i32>} : memref<1x8x32xf32, #tpu.memory_space<vmem>>, vector<1x8x32xf32>,
    return
  }
  func.func @transform_0(%arg0: i32) -> (i32, i32, i32) {
    %c0_i32 = arith.constant 0 : i32
    %c0_i32_0 = arith.constant 0 : i32
    %c0_i32_1 = arith.constant 0 : i32
    return %arg0, %c0_i32, %c0_i32_0 : i32, i32, i32
  }
  func.func @transform_1(%arg0: i32) -> (i32, i32) {
    %c0_i32 = arith.constant 0 : i32
    %c0_i32_0 = arith.constant 0 : i32
    %c0_i32_1 = arith.constant 0 : i32
    return %c0_i32, %c0_i32_0 : i32, i32
  }
  func.func @transform_2(%arg0: i32) -> (i32, i32) {
    %c0_i32 = arith.constant 0 : i32
    %c0_i32_0 = arith.constant 0 : i32
    %c0_i32_1 = arith.constant 0 : i32
    return %c0_i32, %c0_i32_0 : i32, i32
  }
  func.func @transform_3(%arg0: i32) -> (i32, i32) {
    %c0_i32 = arith.constant 0 : i32
    %c0_i32_0 = arith.constant 0 : i32
    %c0_i32_1 = arith.constant 0 : i32
    return %c0_i32, %c0_i32_0 : i32, i32
  }
  func.func @transform_4(%arg0: i32) -> (i32, i32) {
    %c0_i32 = arith.constant 0 : i32
    %c0_i32_0 = arith.constant 0 : i32
    %c0_i32_1 = arith.constant 0 : i32
    return %c0_i32, %c0_i32_0 : i32, i32
  }
  func.func @transform_5(%arg0: i32) -> (i32, i32, i32) {
    %c0_i32 = arith.constant 0 : i32
    %c0_i32_0 = arith.constant 0 : i32
    %c0_i32_1 = arith.constant 0 : i32
    return %arg0, %c0_i32, %c0_i32_0 : i32, i32, i32
  }
}

module attributes {stable_mosaic.version = 11 : i64} {
  func.func @attn_out_res_kernel(%arg0: i32, %arg1: memref<1x8x32xf32, #tpu.memory_space<vmem>>, %arg2: memref<1x8x32xf32, #tpu.memory_space<vmem>>, %arg3: memref<1x8x32xf32, #tpu.memory_space<vmem>>, %arg4: memref<1x1x8xf32, #tpu.memory_space<vmem>>, %arg5: memref<8x8xf32, #tpu.memory_space<vmem>>, %arg6: memref<1x8x32xf32, #tpu.memory_space<vmem>>, %arg7: memref<32x32xf32, #tpu.memory_space<vmem>>, %arg8: memref<1x32xf32, #tpu.memory_space<vmem>>, %arg9: memref<1x8x32xf32, #tpu.memory_space<vmem>>) attributes {dimension_semantics = [#tpu.dimension_semantics<parallel>], iteration_bounds = array<i64: 2>, scalar_prefetch = 0 : i64, scratch_operands = 0 : i64, tpu.core_type = #tpu.core_type<tc>, window_params = [{transform_indices = @transform_0, window_bounds = array<i64: 1, 8, 32>}, {transform_indices = @transform_1, window_bounds = array<i64: 1, 8, 32>}, {transform_indices = @transform_2, window_bounds = array<i64: 1, 8, 32>}, {transform_indices = @transform_3, window_bounds = array<i64: 1, 1, 8>}, {pipeline_mode = #tpu.pipeline_mode<synchronous>, transform_indices = @transform_4, window_bounds = array<i64: 8, 8>}, {transform_indices = @transform_5, window_bounds = array<i64: 1, 8, 32>}, {pipeline_mode = #tpu.pipeline_mode<synchronous>, transform_indices = @transform_6, window_bounds = array<i64: 32, 32>}, {pipeline_mode = #tpu.pipeline_mode<synchronous>, transform_indices = @transform_7, window_bounds = array<i64: 1, 32>}, {transform_indices = @transform_8, window_bounds = array<i64: 1, 8, 32>}]} {
    %c0 = arith.constant 0 : index
    %c0_0 = arith.constant 0 : index
    %c0_1 = arith.constant 0 : index
    %0 = vector.load %arg1[%c0, %c0_0, %c0_1] : memref<1x8x32xf32, #tpu.memory_space<vmem>>, vector<1x8x32xf32>
    %1 = vector.shape_cast %0 : vector<1x8x32xf32> to vector<8x32xf32>
    %cst = arith.constant 0.353553385 : f32
    %2 = vector.broadcast %cst : f32 to vector<8x32xf32>
    %3 = arith.mulf %1, %2 : vector<8x32xf32>
    %c0_2 = arith.constant 0 : index
    %c0_3 = arith.constant 0 : index
    %c0_4 = arith.constant 0 : index
    %4 = vector.load %arg2[%c0_2, %c0_3, %c0_4] : memref<1x8x32xf32, #tpu.memory_space<vmem>>, vector<1x8x32xf32>
    %5 = vector.shape_cast %4 : vector<1x8x32xf32> to vector<8x32xf32>
    %c0_5 = arith.constant 0 : index
    %c0_6 = arith.constant 0 : index
    %c0_7 = arith.constant 0 : index
    %6 = vector.load %arg3[%c0_5, %c0_6, %c0_7] : memref<1x8x32xf32, #tpu.memory_space<vmem>>, vector<1x8x32xf32>
    %7 = vector.shape_cast %6 : vector<1x8x32xf32> to vector<8x32xf32>
    %c0_8 = arith.constant 0 : index
    %c0_9 = arith.constant 0 : index
    %c0_10 = arith.constant 0 : index
    %8 = vector.load %arg4[%c0_8, %c0_9, %c0_10] : memref<1x1x8xf32, #tpu.memory_space<vmem>>, vector<1x1x8xf32>
    %9 = vector.shape_cast %8 : vector<1x1x8xf32> to vector<1x8xf32>
    %10 = vector.shape_cast %9 : vector<1x8xf32> to vector<1x8xf32>
    %11 = vector.broadcast %10 : vector<1x8xf32> to vector<8x8xf32>
    %c0_11 = arith.constant 0 : index
    %c0_12 = arith.constant 0 : index
    %12 = vector.load %arg5[%c0_11, %c0_12] : memref<8x8xf32, #tpu.memory_space<vmem>>, vector<8x8xf32>
    %13 = arith.addf %11, %12 : vector<8x8xf32>
    %14 = vector.extract_strided_slice %3 {offsets = [0, 0], sizes = [8, 8], strides = [1, 1]} : vector<8x32xf32> to vector<8x8xf32>
    %15 = vector.extract_strided_slice %5 {offsets = [0, 0], sizes = [8, 8], strides = [1, 1]} : vector<8x32xf32> to vector<8x8xf32>
    %cst_13 = arith.constant dense<0.000000e+00> : vector<8x8xf32>
    %16 = tpu.matmul %14, %15, %cst_13 {dimension_numbers = #tpu.dot_dimension_numbers<[1], [1], [0], [0], [0, 0, 1, 0], [], []>} : vector<8x8xf32>, vector<8x8xf32>, vector<8x8xf32> -> vector<8x8xf32>
    %17 = arith.addf %16, %13 : vector<8x8xf32>
    %cst_14 = arith.constant dense<0xFF800000> : vector<8xf32>
    %18 = vector.multi_reduction <maximumf>, %17, %cst_14 [1] : vector<8x8xf32> to vector<8xf32>
    %19 = vector.shape_cast %18 : vector<8xf32> to vector<8x1xf32>
    %20 = vector.broadcast %19 : vector<8x1xf32> to vector<8x8xf32>
    %21 = arith.subf %17, %20 : vector<8x8xf32>
    %22 = math.exp %21 : vector<8x8xf32>
    %cst_15 = arith.constant dense<0.000000e+00> : vector<8xf32>
    %23 = vector.multi_reduction <add>, %22, %cst_15 [1] : vector<8x8xf32> to vector<8xf32>
    %24 = vector.shape_cast %23 : vector<8xf32> to vector<8x1xf32>
    %25 = tpu.reciprocal %24 {approx = true} : vector<8x1xf32> -> vector<8x1xf32>
    %26 = vector.broadcast %25 : vector<8x1xf32> to vector<8x8xf32>
    %27 = arith.mulf %22, %26 : vector<8x8xf32>
    %28 = vector.extract_strided_slice %7 {offsets = [0, 0], sizes = [8, 8], strides = [1, 1]} : vector<8x32xf32> to vector<8x8xf32>
    %cst_16 = arith.constant dense<0.000000e+00> : vector<8x8xf32>
    %29 = tpu.matmul %27, %28, %cst_16 {dimension_numbers = #tpu.dot_dimension_numbers<[1], [0], [0], [1], [0, 0, 1, 1], [], []>} : vector<8x8xf32>, vector<8x8xf32>, vector<8x8xf32> -> vector<8x8xf32>
    %30 = vector.extract_strided_slice %3 {offsets = [0, 8], sizes = [8, 8], strides = [1, 1]} : vector<8x32xf32> to vector<8x8xf32>
    %31 = vector.extract_strided_slice %5 {offsets = [0, 8], sizes = [8, 8], strides = [1, 1]} : vector<8x32xf32> to vector<8x8xf32>
    %cst_17 = arith.constant dense<0.000000e+00> : vector<8x8xf32>
    %32 = tpu.matmul %30, %31, %cst_17 {dimension_numbers = #tpu.dot_dimension_numbers<[1], [1], [0], [0], [0, 0, 1, 0], [], []>} : vector<8x8xf32>, vector<8x8xf32>, vector<8x8xf32> -> vector<8x8xf32>
    %33 = arith.addf %32, %13 : vector<8x8xf32>
    %cst_18 = arith.constant dense<0xFF800000> : vector<8xf32>
    %34 = vector.multi_reduction <maximumf>, %33, %cst_18 [1] : vector<8x8xf32> to vector<8xf32>
    %35 = vector.shape_cast %34 : vector<8xf32> to vector<8x1xf32>
    %36 = vector.broadcast %35 : vector<8x1xf32> to vector<8x8xf32>
    %37 = arith.subf %33, %36 : vector<8x8xf32>
    %38 = math.exp %37 : vector<8x8xf32>
    %cst_19 = arith.constant dense<0.000000e+00> : vector<8xf32>
    %39 = vector.multi_reduction <add>, %38, %cst_19 [1] : vector<8x8xf32> to vector<8xf32>
    %40 = vector.shape_cast %39 : vector<8xf32> to vector<8x1xf32>
    %41 = tpu.reciprocal %40 {approx = true} : vector<8x1xf32> -> vector<8x1xf32>
    %42 = vector.broadcast %41 : vector<8x1xf32> to vector<8x8xf32>
    %43 = arith.mulf %38, %42 : vector<8x8xf32>
    %44 = vector.extract_strided_slice %7 {offsets = [0, 8], sizes = [8, 8], strides = [1, 1]} : vector<8x32xf32> to vector<8x8xf32>
    %cst_20 = arith.constant dense<0.000000e+00> : vector<8x8xf32>
    %45 = tpu.matmul %43, %44, %cst_20 {dimension_numbers = #tpu.dot_dimension_numbers<[1], [0], [0], [1], [0, 0, 1, 1], [], []>} : vector<8x8xf32>, vector<8x8xf32>, vector<8x8xf32> -> vector<8x8xf32>
    %46 = vector.extract_strided_slice %3 {offsets = [0, 16], sizes = [8, 8], strides = [1, 1]} : vector<8x32xf32> to vector<8x8xf32>
    %47 = vector.extract_strided_slice %5 {offsets = [0, 16], sizes = [8, 8], strides = [1, 1]} : vector<8x32xf32> to vector<8x8xf32>
    %cst_21 = arith.constant dense<0.000000e+00> : vector<8x8xf32>
    %48 = tpu.matmul %46, %47, %cst_21 {dimension_numbers = #tpu.dot_dimension_numbers<[1], [1], [0], [0], [0, 0, 1, 0], [], []>} : vector<8x8xf32>, vector<8x8xf32>, vector<8x8xf32> -> vector<8x8xf32>
    %49 = arith.addf %48, %13 : vector<8x8xf32>
    %cst_22 = arith.constant dense<0xFF800000> : vector<8xf32>
    %50 = vector.multi_reduction <maximumf>, %49, %cst_22 [1] : vector<8x8xf32> to vector<8xf32>
    %51 = vector.shape_cast %50 : vector<8xf32> to vector<8x1xf32>
    %52 = vector.broadcast %51 : vector<8x1xf32> to vector<8x8xf32>
    %53 = arith.subf %49, %52 : vector<8x8xf32>
    %54 = math.exp %53 : vector<8x8xf32>
    %cst_23 = arith.constant dense<0.000000e+00> : vector<8xf32>
    %55 = vector.multi_reduction <add>, %54, %cst_23 [1] : vector<8x8xf32> to vector<8xf32>
    %56 = vector.shape_cast %55 : vector<8xf32> to vector<8x1xf32>
    %57 = tpu.reciprocal %56 {approx = true} : vector<8x1xf32> -> vector<8x1xf32>
    %58 = vector.broadcast %57 : vector<8x1xf32> to vector<8x8xf32>
    %59 = arith.mulf %54, %58 : vector<8x8xf32>
    %60 = vector.extract_strided_slice %7 {offsets = [0, 16], sizes = [8, 8], strides = [1, 1]} : vector<8x32xf32> to vector<8x8xf32>
    %cst_24 = arith.constant dense<0.000000e+00> : vector<8x8xf32>
    %61 = tpu.matmul %59, %60, %cst_24 {dimension_numbers = #tpu.dot_dimension_numbers<[1], [0], [0], [1], [0, 0, 1, 1], [], []>} : vector<8x8xf32>, vector<8x8xf32>, vector<8x8xf32> -> vector<8x8xf32>
    %62 = vector.extract_strided_slice %3 {offsets = [0, 24], sizes = [8, 8], strides = [1, 1]} : vector<8x32xf32> to vector<8x8xf32>
    %63 = vector.extract_strided_slice %5 {offsets = [0, 24], sizes = [8, 8], strides = [1, 1]} : vector<8x32xf32> to vector<8x8xf32>
    %cst_25 = arith.constant dense<0.000000e+00> : vector<8x8xf32>
    %64 = tpu.matmul %62, %63, %cst_25 {dimension_numbers = #tpu.dot_dimension_numbers<[1], [1], [0], [0], [0, 0, 1, 0], [], []>} : vector<8x8xf32>, vector<8x8xf32>, vector<8x8xf32> -> vector<8x8xf32>
    %65 = arith.addf %64, %13 : vector<8x8xf32>
    %cst_26 = arith.constant dense<0xFF800000> : vector<8xf32>
    %66 = vector.multi_reduction <maximumf>, %65, %cst_26 [1] : vector<8x8xf32> to vector<8xf32>
    %67 = vector.shape_cast %66 : vector<8xf32> to vector<8x1xf32>
    %68 = vector.broadcast %67 : vector<8x1xf32> to vector<8x8xf32>
    %69 = arith.subf %65, %68 : vector<8x8xf32>
    %70 = math.exp %69 : vector<8x8xf32>
    %cst_27 = arith.constant dense<0.000000e+00> : vector<8xf32>
    %71 = vector.multi_reduction <add>, %70, %cst_27 [1] : vector<8x8xf32> to vector<8xf32>
    %72 = vector.shape_cast %71 : vector<8xf32> to vector<8x1xf32>
    %73 = tpu.reciprocal %72 {approx = true} : vector<8x1xf32> -> vector<8x1xf32>
    %74 = vector.broadcast %73 : vector<8x1xf32> to vector<8x8xf32>
    %75 = arith.mulf %70, %74 : vector<8x8xf32>
    %76 = vector.extract_strided_slice %7 {offsets = [0, 24], sizes = [8, 8], strides = [1, 1]} : vector<8x32xf32> to vector<8x8xf32>
    %cst_28 = arith.constant dense<0.000000e+00> : vector<8x8xf32>
    %77 = tpu.matmul %75, %76, %cst_28 {dimension_numbers = #tpu.dot_dimension_numbers<[1], [0], [0], [1], [0, 0, 1, 1], [], []>} : vector<8x8xf32>, vector<8x8xf32>, vector<8x8xf32> -> vector<8x8xf32>
    %78 = tpu.concatenate %29, %45, %61, %77 in 1 : vector<8x8xf32>, vector<8x8xf32>, vector<8x8xf32>, vector<8x8xf32> -> vector<8x32xf32>
    %c0_29 = arith.constant 0 : index
    %c0_30 = arith.constant 0 : index
    %79 = vector.load %arg7[%c0_29, %c0_30] : memref<32x32xf32, #tpu.memory_space<vmem>>, vector<32x32xf32>
    %cst_31 = arith.constant dense<0.000000e+00> : vector<8x32xf32>
    %80 = tpu.matmul %78, %79, %cst_31 {dimension_numbers = #tpu.dot_dimension_numbers<[1], [0], [0], [1], [0, 0, 1, 1], [], []>} : vector<8x32xf32>, vector<32x32xf32>, vector<8x32xf32> -> vector<8x32xf32>
    %c0_32 = arith.constant 0 : index
    %c0_33 = arith.constant 0 : index
    %81 = vector.load %arg8[%c0_32, %c0_33] : memref<1x32xf32, #tpu.memory_space<vmem>>, vector<1x32xf32>
    %82 = vector.broadcast %81 : vector<1x32xf32> to vector<8x32xf32>
    %83 = arith.addf %80, %82 : vector<8x32xf32>
    %c0_34 = arith.constant 0 : index
    %c0_35 = arith.constant 0 : index
    %c0_36 = arith.constant 0 : index
    %84 = vector.load %arg6[%c0_34, %c0_35, %c0_36] : memref<1x8x32xf32, #tpu.memory_space<vmem>>, vector<1x8x32xf32>
    %85 = vector.shape_cast %84 : vector<1x8x32xf32> to vector<8x32xf32>
    %86 = arith.addf %83, %85 : vector<8x32xf32>
    %c0_37 = arith.constant 0 : index
    %c0_38 = arith.constant 0 : index
    %c0_39 = arith.constant 0 : index
    %87 = vector.load %arg9[%c0_37, %c0_38, %c0_39] : memref<1x8x32xf32, #tpu.memory_space<vmem>>, vector<1x8x32xf32>
    %88 = vector.shape_cast %87 : vector<1x8x32xf32> to vector<8x32xf32>
    %89 = vector.shape_cast %86 : vector<8x32xf32> to vector<1x8x32xf32>
    tpu.vector_store %arg9[%c0_37, %c0_38, %c0_39], %89 {strides = array<i32>} : memref<1x8x32xf32, #tpu.memory_space<vmem>>, vector<1x8x32xf32>,
    return
  }
  func.func @transform_0(%arg0: i32) -> (i32, i32, i32) {
    %c0_i32 = arith.constant 0 : i32
    %c0_i32_0 = arith.constant 0 : i32
    %c0_i32_1 = arith.constant 0 : i32
    return %arg0, %c0_i32, %c0_i32_0 : i32, i32, i32
  }
  func.func @transform_1(%arg0: i32) -> (i32, i32, i32) {
    %c0_i32 = arith.constant 0 : i32
    %c0_i32_0 = arith.constant 0 : i32
    %c0_i32_1 = arith.constant 0 : i32
    return %arg0, %c0_i32, %c0_i32_0 : i32, i32, i32
  }
  func.func @transform_2(%arg0: i32) -> (i32, i32, i32) {
    %c0_i32 = arith.constant 0 : i32
    %c0_i32_0 = arith.constant 0 : i32
    %c0_i32_1 = arith.constant 0 : i32
    return %arg0, %c0_i32, %c0_i32_0 : i32, i32, i32
  }
  func.func @transform_3(%arg0: i32) -> (i32, i32, i32) {
    %c0_i32 = arith.constant 0 : i32
    %c0_i32_0 = arith.constant 0 : i32
    %c0_i32_1 = arith.constant 0 : i32
    return %arg0, %c0_i32, %c0_i32_0 : i32, i32, i32
  }
  func.func @transform_4(%arg0: i32) -> (i32, i32) {
    %c0_i32 = arith.constant 0 : i32
    %c0_i32_0 = arith.constant 0 : i32
    %c0_i32_1 = arith.constant 0 : i32
    return %c0_i32, %c0_i32_0 : i32, i32
  }
  func.func @transform_5(%arg0: i32) -> (i32, i32, i32) {
    %c0_i32 = arith.constant 0 : i32
    %c0_i32_0 = arith.constant 0 : i32
    %c0_i32_1 = arith.constant 0 : i32
    return %arg0, %c0_i32, %c0_i32_0 : i32, i32, i32
  }
  func.func @transform_6(%arg0: i32) -> (i32, i32) {
    %c0_i32 = arith.constant 0 : i32
    %c0_i32_0 = arith.constant 0 : i32
    %c0_i32_1 = arith.constant 0 : i32
    return %c0_i32, %c0_i32_0 : i32, i32
  }
  func.func @transform_7(%arg0: i32) -> (i32, i32) {
    %c0_i32 = arith.constant 0 : i32
    %c0_i32_0 = arith.constant 0 : i32
    %c0_i32_1 = arith.constant 0 : i32
    return %c0_i32, %c0_i32_0 : i32, i32
  }
  func.func @transform_8(%arg0: i32) -> (i32, i32, i32) {
    %c0_i32 = arith.constant 0 : i32
    %c0_i32_0 = arith.constant 0 : i32
    %c0_i32_1 = arith.constant 0 : i32
    return %arg0, %c0_i32, %c0_i32_0 : i32, i32, i32
  }
}

module attributes {stable_mosaic.version = 11 : i64} {
  func.func @attn_out_res_kernel(%arg0: i32, %arg1: memref<1x8x32xf32, #tpu.memory_space<vmem>>, %arg2: memref<1x8x32xf32, #tpu.memory_space<vmem>>, %arg3: memref<1x8x32xf32, #tpu.memory_space<vmem>>, %arg4: memref<1x1x8xf32, #tpu.memory_space<vmem>>, %arg5: memref<1x8x32xf32, #tpu.memory_space<vmem>>, %arg6: memref<32x32xf32, #tpu.memory_space<vmem>>, %arg7: memref<1x32xf32, #tpu.memory_space<vmem>>, %arg8: memref<1x8x32xf32, #tpu.memory_space<vmem>>) attributes {dimension_semantics = [#tpu.dimension_semantics<parallel>], iteration_bounds = array<i64: 2>, scalar_prefetch = 0 : i64, scratch_operands = 0 : i64, tpu.core_type = #tpu.core_type<tc>, window_params = [{transform_indices = @transform_0, window_bounds = array<i64: 1, 8, 32>}, {transform_indices = @transform_1, window_bounds = array<i64: 1, 8, 32>}, {transform_indices = @transform_2, window_bounds = array<i64: 1, 8, 32>}, {transform_indices = @transform_3, window_bounds = array<i64: 1, 1, 8>}, {transform_indices = @transform_4, window_bounds = array<i64: 1, 8, 32>}, {pipeline_mode = #tpu.pipeline_mode<synchronous>, transform_indices = @transform_5, window_bounds = array<i64: 32, 32>}, {pipeline_mode = #tpu.pipeline_mode<synchronous>, transform_indices = @transform_6, window_bounds = array<i64: 1, 32>}, {transform_indices = @transform_7, window_bounds = array<i64: 1, 8, 32>}]} {
    %c0 = arith.constant 0 : index
    %c0_0 = arith.constant 0 : index
    %c0_1 = arith.constant 0 : index
    %0 = vector.load %arg1[%c0, %c0_0, %c0_1] : memref<1x8x32xf32, #tpu.memory_space<vmem>>, vector<1x8x32xf32>
    %1 = vector.shape_cast %0 : vector<1x8x32xf32> to vector<8x32xf32>
    %cst = arith.constant 0.353553385 : f32
    %2 = vector.broadcast %cst : f32 to vector<8x32xf32>
    %3 = arith.mulf %1, %2 : vector<8x32xf32>
    %c0_2 = arith.constant 0 : index
    %c0_3 = arith.constant 0 : index
    %c0_4 = arith.constant 0 : index
    %4 = vector.load %arg2[%c0_2, %c0_3, %c0_4] : memref<1x8x32xf32, #tpu.memory_space<vmem>>, vector<1x8x32xf32>
    %5 = vector.shape_cast %4 : vector<1x8x32xf32> to vector<8x32xf32>
    %c0_5 = arith.constant 0 : index
    %c0_6 = arith.constant 0 : index
    %c0_7 = arith.constant 0 : index
    %6 = vector.load %arg3[%c0_5, %c0_6, %c0_7] : memref<1x8x32xf32, #tpu.memory_space<vmem>>, vector<1x8x32xf32>
    %7 = vector.shape_cast %6 : vector<1x8x32xf32> to vector<8x32xf32>
    %c0_8 = arith.constant 0 : index
    %c0_9 = arith.constant 0 : index
    %c0_10 = arith.constant 0 : index
    %8 = vector.load %arg4[%c0_8, %c0_9, %c0_10] : memref<1x1x8xf32, #tpu.memory_space<vmem>>, vector<1x1x8xf32>
    %9 = vector.shape_cast %8 : vector<1x1x8xf32> to vector<1x8xf32>
    %10 = vector.shape_cast %9 : vector<1x8xf32> to vector<1x8xf32>
    %11 = vector.broadcast %10 : vector<1x8xf32> to vector<8x8xf32>
    %12 = vector.extract_strided_slice %3 {offsets = [0, 0], sizes = [8, 8], strides = [1, 1]} : vector<8x32xf32> to vector<8x8xf32>
    %13 = vector.extract_strided_slice %5 {offsets = [0, 0], sizes = [8, 8], strides = [1, 1]} : vector<8x32xf32> to vector<8x8xf32>
    %cst_11 = arith.constant dense<0.000000e+00> : vector<8x8xf32>
    %14 = tpu.matmul %12, %13, %cst_11 {dimension_numbers = #tpu.dot_dimension_numbers<[1], [1], [0], [0], [0, 0, 1, 0], [], []>} : vector<8x8xf32>, vector<8x8xf32>, vector<8x8xf32> -> vector<8x8xf32>
    %15 = arith.addf %14, %11 : vector<8x8xf32>
    %cst_12 = arith.constant dense<0xFF800000> : vector<8xf32>
    %16 = vector.multi_reduction <maximumf>, %15, %cst_12 [1] : vector<8x8xf32> to vector<8xf32>
    %17 = vector.shape_cast %16 : vector<8xf32> to vector<8x1xf32>
    %18 = vector.broadcast %17 : vector<8x1xf32> to vector<8x8xf32>
    %19 = arith.subf %15, %18 : vector<8x8xf32>
    %20 = math.exp %19 : vector<8x8xf32>
    %cst_13 = arith.constant dense<0.000000e+00> : vector<8xf32>
    %21 = vector.multi_reduction <add>, %20, %cst_13 [1] : vector<8x8xf32> to vector<8xf32>
    %22 = vector.shape_cast %21 : vector<8xf32> to vector<8x1xf32>
    %23 = tpu.reciprocal %22 {approx = true} : vector<8x1xf32> -> vector<8x1xf32>
    %24 = vector.broadcast %23 : vector<8x1xf32> to vector<8x8xf32>
    %25 = arith.mulf %20, %24 : vector<8x8xf32>
    %26 = vector.extract_strided_slice %7 {offsets = [0, 0], sizes = [8, 8], strides = [1, 1]} : vector<8x32xf32> to vector<8x8xf32>
    %cst_14 = arith.constant dense<0.000000e+00> : vector<8x8xf32>
    %27 = tpu.matmul %25, %26, %cst_14 {dimension_numbers = #tpu.dot_dimension_numbers<[1], [0], [0], [1], [0, 0, 1, 1], [], []>} : vector<8x8xf32>, vector<8x8xf32>, vector<8x8xf32> -> vector<8x8xf32>
    %28 = vector.extract_strided_slice %3 {offsets = [0, 8], sizes = [8, 8], strides = [1, 1]} : vector<8x32xf32> to vector<8x8xf32>
    %29 = vector.extract_strided_slice %5 {offsets = [0, 8], sizes = [8, 8], strides = [1, 1]} : vector<8x32xf32> to vector<8x8xf32>
    %cst_15 = arith.constant dense<0.000000e+00> : vector<8x8xf32>
    %30 = tpu.matmul %28, %29, %cst_15 {dimension_numbers = #tpu.dot_dimension_numbers<[1], [1], [0], [0], [0, 0, 1, 0], [], []>} : vector<8x8xf32>, vector<8x8xf32>, vector<8x8xf32> -> vector<8x8xf32>
    %31 = arith.addf %30, %11 : vector<8x8xf32>
    %cst_16 = arith.constant dense<0xFF800000> : vector<8xf32>
    %32 = vector.multi_reduction <maximumf>, %31, %cst_16 [1] : vector<8x8xf32> to vector<8xf32>
    %33 = vector.shape_cast %32 : vector<8xf32> to vector<8x1xf32>
    %34 = vector.broadcast %33 : vector<8x1xf32> to vector<8x8xf32>
    %35 = arith.subf %31, %34 : vector<8x8xf32>
    %36 = math.exp %35 : vector<8x8xf32>
    %cst_17 = arith.constant dense<0.000000e+00> : vector<8xf32>
    %37 = vector.multi_reduction <add>, %36, %cst_17 [1] : vector<8x8xf32> to vector<8xf32>
    %38 = vector.shape_cast %37 : vector<8xf32> to vector<8x1xf32>
    %39 = tpu.reciprocal %38 {approx = true} : vector<8x1xf32> -> vector<8x1xf32>
    %40 = vector.broadcast %39 : vector<8x1xf32> to vector<8x8xf32>
    %41 = arith.mulf %36, %40 : vector<8x8xf32>
    %42 = vector.extract_strided_slice %7 {offsets = [0, 8], sizes = [8, 8], strides = [1, 1]} : vector<8x32xf32> to vector<8x8xf32>
    %cst_18 = arith.constant dense<0.000000e+00> : vector<8x8xf32>
    %43 = tpu.matmul %41, %42, %cst_18 {dimension_numbers = #tpu.dot_dimension_numbers<[1], [0], [0], [1], [0, 0, 1, 1], [], []>} : vector<8x8xf32>, vector<8x8xf32>, vector<8x8xf32> -> vector<8x8xf32>
    %44 = vector.extract_strided_slice %3 {offsets = [0, 16], sizes = [8, 8], strides = [1, 1]} : vector<8x32xf32> to vector<8x8xf32>
    %45 = vector.extract_strided_slice %5 {offsets = [0, 16], sizes = [8, 8], strides = [1, 1]} : vector<8x32xf32> to vector<8x8xf32>
    %cst_19 = arith.constant dense<0.000000e+00> : vector<8x8xf32>
    %46 = tpu.matmul %44, %45, %cst_19 {dimension_numbers = #tpu.dot_dimension_numbers<[1], [1], [0], [0], [0, 0, 1, 0], [], []>} : vector<8x8xf32>, vector<8x8xf32>, vector<8x8xf32> -> vector<8x8xf32>
    %47 = arith.addf %46, %11 : vector<8x8xf32>
    %cst_20 = arith.constant dense<0xFF800000> : vector<8xf32>
    %48 = vector.multi_reduction <maximumf>, %47, %cst_20 [1] : vector<8x8xf32> to vector<8xf32>
    %49 = vector.shape_cast %48 : vector<8xf32> to vector<8x1xf32>
    %50 = vector.broadcast %49 : vector<8x1xf32> to vector<8x8xf32>
    %51 = arith.subf %47, %50 : vector<8x8xf32>
    %52 = math.exp %51 : vector<8x8xf32>
    %cst_21 = arith.constant dense<0.000000e+00> : vector<8xf32>
    %53 = vector.multi_reduction <add>, %52, %cst_21 [1] : vector<8x8xf32> to vector<8xf32>
    %54 = vector.shape_cast %53 : vector<8xf32> to vector<8x1xf32>
    %55 = tpu.reciprocal %54 {approx = true} : vector<8x1xf32> -> vector<8x1xf32>
    %56 = vector.broadcast %55 : vector<8x1xf32> to vector<8x8xf32>
    %57 = arith.mulf %52, %56 : vector<8x8xf32>
    %58 = vector.extract_strided_slice %7 {offsets = [0, 16], sizes = [8, 8], strides = [1, 1]} : vector<8x32xf32> to vector<8x8xf32>
    %cst_22 = arith.constant dense<0.000000e+00> : vector<8x8xf32>
    %59 = tpu.matmul %57, %58, %cst_22 {dimension_numbers = #tpu.dot_dimension_numbers<[1], [0], [0], [1], [0, 0, 1, 1], [], []>} : vector<8x8xf32>, vector<8x8xf32>, vector<8x8xf32> -> vector<8x8xf32>
    %60 = vector.extract_strided_slice %3 {offsets = [0, 24], sizes = [8, 8], strides = [1, 1]} : vector<8x32xf32> to vector<8x8xf32>
    %61 = vector.extract_strided_slice %5 {offsets = [0, 24], sizes = [8, 8], strides = [1, 1]} : vector<8x32xf32> to vector<8x8xf32>
    %cst_23 = arith.constant dense<0.000000e+00> : vector<8x8xf32>
    %62 = tpu.matmul %60, %61, %cst_23 {dimension_numbers = #tpu.dot_dimension_numbers<[1], [1], [0], [0], [0, 0, 1, 0], [], []>} : vector<8x8xf32>, vector<8x8xf32>, vector<8x8xf32> -> vector<8x8xf32>
    %63 = arith.addf %62, %11 : vector<8x8xf32>
    %cst_24 = arith.constant dense<0xFF800000> : vector<8xf32>
    %64 = vector.multi_reduction <maximumf>, %63, %cst_24 [1] : vector<8x8xf32> to vector<8xf32>
    %65 = vector.shape_cast %64 : vector<8xf32> to vector<8x1xf32>
    %66 = vector.broadcast %65 : vector<8x1xf32> to vector<8x8xf32>
    %67 = arith.subf %63, %66 : vector<8x8xf32>
    %68 = math.exp %67 : vector<8x8xf32>
    %cst_25 = arith.constant dense<0.000000e+00> : vector<8xf32>
    %69 = vector.multi_reduction <add>, %68, %cst_25 [1] : vector<8x8xf32> to vector<8xf32>
    %70 = vector.shape_cast %69 : vector<8xf32> to vector<8x1xf32>
    %71 = tpu.reciprocal %70 {approx = true} : vector<8x1xf32> -> vector<8x1xf32>
    %72 = vector.broadcast %71 : vector<8x1xf32> to vector<8x8xf32>
    %73 = arith.mulf %68, %72 : vector<8x8xf32>
    %74 = vector.extract_strided_slice %7 {offsets = [0, 24], sizes = [8, 8], strides = [1, 1]} : vector<8x32xf32> to vector<8x8xf32>
    %cst_26 = arith.constant dense<0.000000e+00> : vector<8x8xf32>
    %75 = tpu.matmul %73, %74, %cst_26 {dimension_numbers = #tpu.dot_dimension_numbers<[1], [0], [0], [1], [0, 0, 1, 1], [], []>} : vector<8x8xf32>, vector<8x8xf32>, vector<8x8xf32> -> vector<8x8xf32>
    %76 = tpu.concatenate %27, %43, %59, %75 in 1 : vector<8x8xf32>, vector<8x8xf32>, vector<8x8xf32>, vector<8x8xf32> -> vector<8x32xf32>
    %c0_27 = arith.constant 0 : index
    %c0_28 = arith.constant 0 : index
    %77 = vector.load %arg6[%c0_27, %c0_28] : memref<32x32xf32, #tpu.memory_space<vmem>>, vector<32x32xf32>
    %cst_29 = arith.constant dense<0.000000e+00> : vector<8x32xf32>
    %78 = tpu.matmul %76, %77, %cst_29 {dimension_numbers = #tpu.dot_dimension_numbers<[1], [0], [0], [1], [0, 0, 1, 1], [], []>} : vector<8x32xf32>, vector<32x32xf32>, vector<8x32xf32> -> vector<8x32xf32>
    %c0_30 = arith.constant 0 : index
    %c0_31 = arith.constant 0 : index
    %79 = vector.load %arg7[%c0_30, %c0_31] : memref<1x32xf32, #tpu.memory_space<vmem>>, vector<1x32xf32>
    %80 = vector.broadcast %79 : vector<1x32xf32> to vector<8x32xf32>
    %81 = arith.addf %78, %80 : vector<8x32xf32>
    %c0_32 = arith.constant 0 : index
    %c0_33 = arith.constant 0 : index
    %c0_34 = arith.constant 0 : index
    %82 = vector.load %arg5[%c0_32, %c0_33, %c0_34] : memref<1x8x32xf32, #tpu.memory_space<vmem>>, vector<1x8x32xf32>
    %83 = vector.shape_cast %82 : vector<1x8x32xf32> to vector<8x32xf32>
    %84 = arith.addf %81, %83 : vector<8x32xf32>
    %c0_35 = arith.constant 0 : index
    %c0_36 = arith.constant 0 : index
    %c0_37 = arith.constant 0 : index
    %85 = vector.load %arg8[%c0_35, %c0_36, %c0_37] : memref<1x8x32xf32, #tpu.memory_space<vmem>>, vector<1x8x32xf32>
    %86 = vector.shape_cast %85 : vector<1x8x32xf32> to vector<8x32xf32>
    %87 = vector.shape_cast %84 : vector<8x32xf32> to vector<1x8x32xf32>
    tpu.vector_store %arg8[%c0_35, %c0_36, %c0_37], %87 {strides = array<i32>} : memref<1x8x32xf32, #tpu.memory_space<vmem>>, vector<1x8x32xf32>,
    return
  }
  func.func @transform_0(%arg0: i32) -> (i32, i32, i32) {
    %c0_i32 = arith.constant 0 : i32
    %c0_i32_0 = arith.constant 0 : i32
    %c0_i32_1 = arith.constant 0 : i32
    return %arg0, %c0_i32, %c0_i32_0 : i32, i32, i32
  }
  func.func @transform_1(%arg0: i32) -> (i32, i32, i32) {
    %c0_i32 = arith.constant 0 : i32
    %c0_i32_0 = arith.constant 0 : i32
    %c0_i32_1 = arith.constant 0 : i32
    return %arg0, %c0_i32, %c0_i32_0 : i32, i32, i32
  }
  func.func @transform_2(%arg0: i32) -> (i32, i32, i32) {
    %c0_i32 = arith.constant 0 : i32
    %c0_i32_0 = arith.constant 0 : i32
    %c0_i32_1 = arith.constant 0 : i32
    return %arg0, %c0_i32, %c0_i32_0 : i32, i32, i32
  }
  func.func @transform_3(%arg0: i32) -> (i32, i32, i32) {
    %c0_i32 = arith.constant 0 : i32
    %c0_i32_0 = arith.constant 0 : i32
    %c0_i32_1 = arith.constant 0 : i32
    return %arg0, %c0_i32, %c0_i32_0 : i32, i32, i32
  }
  func.func @transform_4(%arg0: i32) -> (i32, i32, i32) {
    %c0_i32 = arith.constant 0 : i32
    %c0_i32_0 = arith.constant 0 : i32
    %c0_i32_1 = arith.constant 0 : i32
    return %arg0, %c0_i32, %c0_i32_0 : i32, i32, i32
  }
  func.func @transform_5(%arg0: i32) -> (i32, i32) {
    %c0_i32 = arith.constant 0 : i32
    %c0_i32_0 = arith.constant 0 : i32
    %c0_i32_1 = arith.constant 0 : i32
    return %c0_i32, %c0_i32_0 : i32, i32
  }
  func.func @transform_6(%arg0: i32) -> (i32, i32) {
    %c0_i32 = arith.constant 0 : i32
    %c0_i32_0 = arith.constant 0 : i32
    %c0_i32_1 = arith.constant 0 : i32
    return %c0_i32, %c0_i32_0 : i32, i32
  }
  func.func @transform_7(%arg0: i32) -> (i32, i32, i32) {
    %c0_i32 = arith.constant 0 : i32
    %c0_i32_0 = arith.constant 0 : i32
    %c0_i32_1 = arith.constant 0 : i32
    return %arg0, %c0_i32, %c0_i32_0 : i32, i32, i32
  }
}

module attributes {stable_mosaic.version = 11 : i64} {
  func.func @ln_ffn_res_kernel(%arg0: i32, %arg1: memref<1x8x32xf32, #tpu.memory_space<vmem>>, %arg2: memref<1x32xf32, #tpu.memory_space<vmem>>, %arg3: memref<1x32xf32, #tpu.memory_space<vmem>>, %arg4: memref<32x64xf32, #tpu.memory_space<vmem>>, %arg5: memref<1x64xf32, #tpu.memory_space<vmem>>, %arg6: memref<64x32xf32, #tpu.memory_space<vmem>>, %arg7: memref<1x32xf32, #tpu.memory_space<vmem>>, %arg8: memref<1x8x32xf32, #tpu.memory_space<vmem>>) attributes {dimension_semantics = [#tpu.dimension_semantics<parallel>], iteration_bounds = array<i64: 2>, scalar_prefetch = 0 : i64, scratch_operands = 0 : i64, tpu.core_type = #tpu.core_type<tc>, window_params = [{transform_indices = @transform_0, window_bounds = array<i64: 1, 8, 32>}, {pipeline_mode = #tpu.pipeline_mode<synchronous>, transform_indices = @transform_1, window_bounds = array<i64: 1, 32>}, {pipeline_mode = #tpu.pipeline_mode<synchronous>, transform_indices = @transform_2, window_bounds = array<i64: 1, 32>}, {pipeline_mode = #tpu.pipeline_mode<synchronous>, transform_indices = @transform_3, window_bounds = array<i64: 32, 64>}, {pipeline_mode = #tpu.pipeline_mode<synchronous>, transform_indices = @transform_4, window_bounds = array<i64: 1, 64>}, {pipeline_mode = #tpu.pipeline_mode<synchronous>, transform_indices = @transform_5, window_bounds = array<i64: 64, 32>}, {pipeline_mode = #tpu.pipeline_mode<synchronous>, transform_indices = @transform_6, window_bounds = array<i64: 1, 32>}, {transform_indices = @transform_7, window_bounds = array<i64: 1, 8, 32>}]} {
    %c0 = arith.constant 0 : index
    %c0_0 = arith.constant 0 : index
    %c0_1 = arith.constant 0 : index
    %0 = vector.load %arg1[%c0, %c0_0, %c0_1] : memref<1x8x32xf32, #tpu.memory_space<vmem>>, vector<1x8x32xf32>
    %1 = vector.shape_cast %0 : vector<1x8x32xf32> to vector<8x32xf32>
    %c0_2 = arith.constant 0 : index
    %c0_3 = arith.constant 0 : index
    %2 = vector.load %arg2[%c0_2, %c0_3] : memref<1x32xf32, #tpu.memory_space<vmem>>, vector<1x32xf32>
    %c0_4 = arith.constant 0 : index
    %c0_5 = arith.constant 0 : index
    %3 = vector.load %arg3[%c0_4, %c0_5] : memref<1x32xf32, #tpu.memory_space<vmem>>, vector<1x32xf32>
    %cst = arith.constant dense<0.000000e+00> : vector<8xf32>
    %4 = vector.multi_reduction <add>, %1, %cst [1] : vector<8x32xf32> to vector<8xf32>
    %5 = vector.shape_cast %4 : vector<8xf32> to vector<8x1xf32>
    %cst_6 = arith.constant 3.200000e+01 : f32
    %6 = vector.broadcast %cst_6 : f32 to vector<8x1xf32>
    %7 = arith.divf %5, %6 : vector<8x1xf32>
    %8 = vector.broadcast %7 : vector<8x1xf32> to vector<8x32xf32>
    %9 = arith.subf %1, %8 : vector<8x32xf32>
    %10 = arith.mulf %9, %9 : vector<8x32xf32>
    %cst_7 = arith.constant dense<0.000000e+00> : vector<8xf32>
    %11 = vector.multi_reduction <add>, %10, %cst_7 [1] : vector<8x32xf32> to vector<8xf32>
    %12 = vector.shape_cast %11 : vector<8xf32> to vector<8x1xf32>
    %cst_8 = arith.constant 3.200000e+01 : f32
    %13 = vector.broadcast %cst_8 : f32 to vector<8x1xf32>
    %14 = arith.divf %12, %13 : vector<8x1xf32>
    %15 = vector.broadcast %7 : vector<8x1xf32> to vector<8x32xf32>
    %16 = arith.subf %1, %15 : vector<8x32xf32>
    %cst_9 = arith.constant 9.99999974E-6 : f32
    %17 = vector.broadcast %cst_9 : f32 to vector<8x1xf32>
    %18 = arith.addf %14, %17 : vector<8x1xf32>
    %19 = math.rsqrt %18 : vector<8x1xf32>
    %20 = vector.broadcast %19 : vector<8x1xf32> to vector<8x32xf32>
    %21 = arith.mulf %16, %20 : vector<8x32xf32>
    %22 = vector.broadcast %2 : vector<1x32xf32> to vector<8x32xf32>
    %23 = arith.mulf %21, %22 : vector<8x32xf32>
    %24 = vector.broadcast %3 : vector<1x32xf32> to vector<8x32xf32>
    %25 = arith.addf %23, %24 : vector<8x32xf32>
    %c0_10 = arith.constant 0 : index
    %c0_11 = arith.constant 0 : index
    %26 = vector.load %arg4[%c0_10, %c0_11] : memref<32x64xf32, #tpu.memory_space<vmem>>, vector<32x64xf32>
    %cst_12 = arith.constant dense<0.000000e+00> : vector<8x64xf32>
    %27 = tpu.matmul %25, %26, %cst_12 {dimension_numbers = #tpu.dot_dimension_numbers<[1], [0], [0], [1], [0, 0, 1, 1], [], []>} : vector<8x32xf32>, vector<32x64xf32>, vector<8x64xf32> -> vector<8x64xf32>
    %c0_13 = arith.constant 0 : index
    %c0_14 = arith.constant 0 : index
    %28 = vector.load %arg5[%c0_13, %c0_14] : memref<1x64xf32, #tpu.memory_space<vmem>>, vector<1x64xf32>
    %29 = vector.broadcast %28 : vector<1x64xf32> to vector<8x64xf32>
    %30 = arith.addf %27, %29 : vector<8x64xf32>
    %cst_15 = arith.constant 0.000000e+00 : f32
    %31 = vector.broadcast %cst_15 : f32 to vector<8x64xf32>
    %32 = arith.maximumf %30, %31 : vector<8x64xf32>
    %c0_16 = arith.constant 0 : index
    %c0_17 = arith.constant 0 : index
    %33 = vector.load %arg6[%c0_16, %c0_17] : memref<64x32xf32, #tpu.memory_space<vmem>>, vector<64x32xf32>
    %cst_18 = arith.constant dense<0.000000e+00> : vector<8x32xf32>
    %34 = tpu.matmul %32, %33, %cst_18 {dimension_numbers = #tpu.dot_dimension_numbers<[1], [0], [0], [1], [0, 0, 1, 1], [], []>} : vector<8x64xf32>, vector<64x32xf32>, vector<8x32xf32> -> vector<8x32xf32>
    %c0_19 = arith.constant 0 : index
    %c0_20 = arith.constant 0 : index
    %35 = vector.load %arg7[%c0_19, %c0_20] : memref<1x32xf32, #tpu.memory_space<vmem>>, vector<1x32xf32>
    %36 = vector.broadcast %35 : vector<1x32xf32> to vector<8x32xf32>
    %37 = arith.addf %34, %36 : vector<8x32xf32>
    %38 = arith.addf %25, %37 : vector<8x32xf32>
    %c0_21 = arith.constant 0 : index
    %c0_22 = arith.constant 0 : index
    %c0_23 = arith.constant 0 : index
    %39 = vector.load %arg8[%c0_21, %c0_22, %c0_23] : memref<1x8x32xf32, #tpu.memory_space<vmem>>, vector<1x8x32xf32>
    %40 = vector.shape_cast %39 : vector<1x8x32xf32> to vector<8x32xf32>
    %41 = vector.shape_cast %38 : vector<8x32xf32> to vector<1x8x32xf32>
    tpu.vector_store %arg8[%c0_21, %c0_22, %c0_23], %41 {strides = array<i32>} : memref<1x8x32xf32, #tpu.memory_space<vmem>>, vector<1x8x32xf32>,
    return
  }
  func.func @transform_0(%arg0: i32) -> (i32, i32, i32) {
    %c0_i32 = arith.constant 0 : i32
    %c0_i32_0 = arith.constant 0 : i32
    %c0_i32_1 = arith.constant 0 : i32
    return %arg0, %c0_i32, %c0_i32_0 : i32, i32, i32
  }
  func.func @transform_1(%arg0: i32) -> (i32, i32) {
    %c0_i32 = arith.constant 0 : i32
    %c0_i32_0 = arith.constant 0 : i32
    %c0_i32_1 = arith.constant 0 : i32
    return %c0_i32, %c0_i32_0 : i32, i32
  }
  func.func @transform_2(%arg0: i32) -> (i32, i32) {
    %c0_i32 = arith.constant 0 : i32
    %c0_i32_0 = arith.constant 0 : i32
    %c0_i32_1 = arith.constant 0 : i32
    return %c0_i32, %c0_i32_0 : i32, i32
  }
  func.func @transform_3(%arg0: i32) -> (i32, i32) {
    %c0_i32 = arith.constant 0 : i32
    %c0_i32_0 = arith.constant 0 : i32
    %c0_i32_1 = arith.constant 0 : i32
    return %c0_i32, %c0_i32_0 : i32, i32
  }
  func.func @transform_4(%arg0: i32) -> (i32, i32) {
    %c0_i32 = arith.constant 0 : i32
    %c0_i32_0 = arith.constant 0 : i32
    %c0_i32_1 = arith.constant 0 : i32
    return %c0_i32, %c0_i32_0 : i32, i32
  }
  func.func @transform_5(%arg0: i32) -> (i32, i32) {
    %c0_i32 = arith.constant 0 : i32
    %c0_i32_0 = arith.constant 0 : i32
    %c0_i32_1 = arith.constant 0 : i32
    return %c0_i32, %c0_i32_0 : i32, i32
  }
  func.func @transform_6(%arg0: i32) -> (i32, i32) {
    %c0_i32 = arith.constant 0 : i32
    %c0_i32_0 = arith.constant 0 : i32
    %c0_i32_1 = arith.constant 0 : i32
    return %c0_i32, %c0_i32_0 : i32, i32
  }
  func.func @transform_7(%arg0: i32) -> (i32, i32, i32) {
    %c0_i32 = arith.constant 0 : i32
    %c0_i32_0 = arith.constant 0 : i32
    %c0_i32_1 = arith.constant 0 : i32
    return %arg0, %c0_i32, %c0_i32_0 : i32, i32, i32
  }
}

</mosaic_0001>

<llo_original>
// kernel: decoder_block_forward.9
$region0: #{decoder_block_forward.9}
  #allocation0 [shape = 'u32[]', space=smem, size = 0x4, offset = 0x4, fixed_abs, tag = 'smem constant byte address 0x4 - core index']
  #allocation1 [shape = 'u32[144,128]{1,0:T(1,128)}', space=vmem, size = 0x12000, scoped, tag = 'internal scratch']
  %s0 = inlined_call_operand.vmem [shape: f32[2,8,32], index: 0, kind: input, shape index: {}]
  %s1 = inlined_call_operand.vmem [shape: f32[32,32], index: 1, kind: input, shape index: {}]
  %s2 = inlined_call_operand.vmem [shape: f32[1,32], index: 2, kind: input, shape index: {}]
  %s3 = inlined_call_operand.vmem [shape: f32[8,16], index: 3, kind: input, shape index: {}]
  %s4 = inlined_call_operand.vmem [shape: f32[8,16], index: 4, kind: input, shape index: {}]
  %s5 = inlined_call_operand.vmem [shape: f32[2,8,32], index: 5, kind: output, shape index: {}]
  %s6 = sld [smem:[#allocation0]]
  $region53: #{decoder_block_forward.9} parent=0
    _
  %s8 = ssub.s32 1, %s6
  %s9 = scalar_select 0, %s8, %s6
  loop: start=0, step=1, limit=4
  $region2: #{decoder_block_forward.9} parent=0 // loop_pre_header
    _
  $region3: #{decoder_block_forward.9} parent=0 // loop_header
    %s11 = sphi 0, %s15
    %p12 = scmp.ge.s32.totalorder %s11, 4
    %s21 = sphi 0, %s23
    %s24 = sphi 0, %s21
    %s25 = sphi 0, %s24
    %s41 = sphi 0, %s25
    %s45 = sphi 0, %s45
    %s47 = sphi 0, %s45
    %s48 = sphi 0, %s47
    %s62 = sphi 0, %s48
    %s66 = sphi 0, %s66
    %s68 = sphi 0, %s66
    %s69 = sphi 0, %s68
    %s83 = sphi 0, %s69
    %s87 = sphi 0, %s87
    %s89 = sphi 0, %s87
    %s90 = sphi 0, %s89
    %s104 = sphi 0, %s90
    %s108 = sphi 0, %s108
    %s110 = sphi 0, %s108
    %s111 = sphi 0, %s110
    %s125 = sphi 0, %s111
    %s131 = sphi 0, %s133
    %s134 = sphi 0, %s131
    %s135 = sphi 0, %s134
    %s151 = sphi 0, %s135
  $region4: #{decoder_block_forward.9} parent=0 // loop_header_branch
    %14 = sbr.rel (%p12) target = $region8
  $region5: #{decoder_block_forward.9} parent=0 // loop_body
    %s16 = ssub.s32 %s11, 1
    %s17 = ssub.s32 %s11, 2
    %s18 = sadd.s32 %s11, 1
    %s19 = ssub.s32 %s11, %s18
    %p20 = scmp.eq.s32.totalorder %s19, 0
    %s22 = sadd.s32 %s21, 1
    %s23 = scalar_select %p20, %s21, %s22
    %p26 = pneg %p20
    %p27 = scmp.eq.s32.totalorder %s11, 1
    %p28 = por %p26, %p27
    %p29 = scmp.ne.s32.totalorder %s21, %s24
    %p30 = scmp.eq.s32.totalorder %s11, 0
    %p31 = por %p29, %p30
    %p32 = scmp.ne.s32.totalorder %s21, %s24
    %p33 = scmp.eq.s32.totalorder %s16, 1
    %p34 = por %p32, %p33
    %p35 = scmp.ne.s32.totalorder %s24, %s25
    %p36 = scmp.eq.s32.totalorder %s16, 0
    %p37 = por %p35, %p36
    %p38 = scmp.ne.s32.totalorder %s24, %s25
    %p39 = scmp.eq.s32.totalorder %s17, 1
    %p40 = por %p38, %p39
    %p42 = scmp.ne.s32.totalorder %s25, %s41
    %p43 = scmp.eq.s32.totalorder %s17, 0
    %p44 = por %p42, %p43
    %s46 = sadd.s32 %s45, 1
    %p49 = scmp.eq.s32.totalorder %s11, 1
    %p50 = scmp.ne.s32.totalorder %s45, %s47
    %p51 = scmp.eq.s32.totalorder %s11, 0
    %p52 = por %p50, %p51
    %p53 = scmp.ne.s32.totalorder %s45, %s47
    %p54 = scmp.eq.s32.totalorder %s16, 1
    %p55 = por %p53, %p54
    %p56 = scmp.ne.s32.totalorder %s47, %s48
    %p57 = scmp.eq.s32.totalorder %s16, 0
    %p58 = por %p56, %p57
    %p59 = scmp.ne.s32.totalorder %s47, %s48
    %p60 = scmp.eq.s32.totalorder %s17, 1
    %p61 = por %p59, %p60
    %p63 = scmp.ne.s32.totalorder %s48, %s62
    %p64 = scmp.eq.s32.totalorder %s17, 0
    %p65 = por %p63, %p64
    %s67 = sadd.s32 %s66, 1
    %p70 = scmp.eq.s32.totalorder %s11, 1
    %p71 = scmp.ne.s32.totalorder %s66, %s68
    %p72 = scmp.eq.s32.totalorder %s11, 0
    %p73 = por %p71, %p72
    %p74 = scmp.ne.s32.totalorder %s66, %s68
    %p75 = scmp.eq.s32.totalorder %s16, 1
    %p76 = por %p74, %p75
    %p77 = scmp.ne.s32.totalorder %s68, %s69
    %p78 = scmp.eq.s32.totalorder %s16, 0
    %p79 = por %p77, %p78
    %p80 = scmp.ne.s32.totalorder %s68, %s69
    %p81 = scmp.eq.s32.totalorder %s17, 1
    %p82 = por %p80, %p81
    %p84 = scmp.ne.s32.totalorder %s69, %s83
    %p85 = scmp.eq.s32.totalorder %s17, 0
    %p86 = por %p84, %p85
    %s88 = sadd.s32 %s87, 1
    %p91 = scmp.eq.s32.totalorder %s11, 1
    %p92 = scmp.ne.s32.totalorder %s87, %s89
    %p93 = scmp.eq.s32.totalorder %s11, 0
    %p94 = por %p92, %p93
    %p95 = scmp.ne.s32.totalorder %s87, %s89
    %p96 = scmp.eq.s32.totalorder %s16, 1
    %p97 = por %p95, %p96
    %p98 = scmp.ne.s32.totalorder %s89, %s90
    %p99 = scmp.eq.s32.totalorder %s16, 0
    %p100 = por %p98, %p99
    %p101 = scmp.ne.s32.totalorder %s89, %s90
    %p102 = scmp.eq.s32.totalorder %s17, 1
    %p103 = por %p101, %p102
    %p105 = scmp.ne.s32.totalorder %s90, %s104
    %p106 = scmp.eq.s32.totalorder %s17, 0
    %p107 = por %p105, %p106
    %s109 = sadd.s32 %s108, 1
    %p112 = scmp.eq.s32.totalorder %s11, 1
    %p113 = scmp.ne.s32.totalorder %s108, %s110
    %p114 = scmp.eq.s32.totalorder %s11, 0
    %p115 = por %p113, %p114
    %p116 = scmp.ne.s32.totalorder %s108, %s110
    %p117 = scmp.eq.s32.totalorder %s16, 1
    %p118 = por %p116, %p117
    %p119 = scmp.ne.s32.totalorder %s110, %s111
    %p120 = scmp.eq.s32.totalorder %s16, 0
    %p121 = por %p119, %p120
    %p122 = scmp.ne.s32.totalorder %s110, %s111
    %p123 = scmp.eq.s32.totalorder %s17, 1
    %p124 = por %p122, %p123
    %p126 = scmp.ne.s32.totalorder %s111, %s125
    %p127 = scmp.eq.s32.totalorder %s17, 0
    %p128 = por %p126, %p127
    %s129 = ssub.s32 %s11, %s18
    %p130 = scmp.eq.s32.totalorder %s129, 0
    %s132 = sadd.s32 %s131, 1
    %s133 = scalar_select %p130, %s131, %s132
    %p136 = pneg %p130
    %p137 = scmp.eq.s32.totalorder %s11, 1
    %p138 = por %p136, %p137
    %p139 = scmp.ne.s32.totalorder %s131, %s134
    %p140 = scmp.eq.s32.totalorder %s11, 0
    %p141 = por %p139, %p140
    %p142 = scmp.ne.s32.totalorder %s131, %s134
    %p143 = scmp.eq.s32.totalorder %s16, 1
    %p144 = por %p142, %p143
    %p145 = scmp.ne.s32.totalorder %s134, %s135
    %p146 = scmp.eq.s32.totalorder %s16, 0
    %p147 = por %p145, %p146
    %p148 = scmp.ne.s32.totalorder %s134, %s135
    %p149 = scmp.eq.s32.totalorder %s17, 1
    %p150 = por %p148, %p149
    %p152 = scmp.ne.s32.totalorder %s135, %s151
    %p153 = scmp.eq.s32.totalorder %s17, 0
    %p154 = por %p152, %p153
    %p155 = scmp.le.s32.totalorder 1, %s11
    %p156 = scmp.lt.s32.totalorder %s11, 3
    %p157 = pnand %p155, %p156
    %p158 = pneg %p157
    // Predicated region
    $region9: #{decoder_block_forward.9} parent=5 // pred_check
      _
    $region10: #{decoder_block_forward.9} parent=5 // pred_check_branch
      %160 = sbr.rel (%p157) target = $region12
    $region11: #{decoder_block_forward.9} parent=5 // pred_region
      %s161 = ssub.s32 %s11, 1
      // Predicated region
      $region13: #{decoder_block_forward.9} parent=11 // pred_check
        %p162 = pneg %p58
      $region14: #{decoder_block_forward.9} parent=11 // pred_check_branch
        %164 = sbr.rel (%p162) target = $region16
      $region15: #{decoder_block_forward.9} parent=11 // pred_region
        _
      $region16: #{decoder_block_forward.9} parent=11 // pred_fallthru
        _
      // Predicated region
      $region17: #{decoder_block_forward.9} parent=11 // pred_check
        %p165 = pneg %p79
      $region18: #{decoder_block_forward.9} parent=11 // pred_check_branch
        %167 = sbr.rel (%p165) target = $region20
      $region19: #{decoder_block_forward.9} parent=11 // pred_region
        _
      $region20: #{decoder_block_forward.9} parent=11 // pred_fallthru
        _
      // Predicated region
      $region21: #{decoder_block_forward.9} parent=11 // pred_check
        %p168 = pneg %p100
      $region22: #{decoder_block_forward.9} parent=11 // pred_check_branch
        %170 = sbr.rel (%p168) target = $region24
      $region23: #{decoder_block_forward.9} parent=11 // pred_region
        _
      $region24: #{decoder_block_forward.9} parent=11 // pred_fallthru
        _
      // Predicated region
      $region25: #{decoder_block_forward.9} parent=11 // pred_check
        %p171 = pneg %p121
      $region26: #{decoder_block_forward.9} parent=11 // pred_check_branch
        %173 = sbr.rel (%p171) target = $region28
      $region27: #{decoder_block_forward.9} parent=11 // pred_region
        _
      $region28: #{decoder_block_forward.9} parent=11 // pred_fallthru
        _
    $region12: #{decoder_block_forward.9} parent=5 // pred_fallthru
      _
    %p174 = scmp.lt.s32.totalorder %s11, 2
    // Predicated region
    $region29: #{decoder_block_forward.9} parent=5 // pred_check
      %p175 = pneg %p174
    $region30: #{decoder_block_forward.9} parent=5 // pred_check_branch
      %177 = sbr.rel (%p175) target = $region32
    $region31: #{decoder_block_forward.9} parent=5 // pred_region
      // Predicated region
      $region33: #{decoder_block_forward.9} parent=31 // pred_check
        %p178 = pneg %p31
      $region34: #{decoder_block_forward.9} parent=31 // pred_check_branch
        %180 = sbr.rel (%p178) target = $region36
      $region35: #{decoder_block_forward.9} parent=31 // pred_region
        %p181 = scmp.lt.s32.totalorder %s11, 1
        %s182 = scalar_select %p181, %s11, 1
        %s183 = smul.addr %s182, 8
        %s184 = scalar_lea.vmem %s0, %s183
      $region36: #{decoder_block_forward.9} parent=31 // pred_fallthru
        _
    $region32: #{decoder_block_forward.9} parent=5 // pred_fallthru
      _
    %p185 = scmp.le.s32.totalorder 1, %s11
    %p186 = scmp.lt.s32.totalorder %s11, 3
    %p187 = pnand %p185, %p186
    %p188 = pneg %p187
    // Predicated region
    $region37: #{decoder_block_forward.9} parent=5 // pred_check
      _
    $region38: #{decoder_block_forward.9} parent=5 // pred_check_branch
      %190 = sbr.rel (%p187) target = $region40
    $region39: #{decoder_block_forward.9} parent=5 // pred_region
      %s191 = ssub.s32 %s11, 1
      %p192 = scmp.lt.s32.totalorder %s16, 1
      %s193 = scalar_select %p192, %s16, 1
      %s194 = smul.addr %s193, 8
      %s195 = scalar_lea.vmem %s0, %s194
      %p196 = pneg %p37
      %p197 = pneg %p34
      %p198 = pneg %p58
      %p199 = pneg %p55
      %p200 = pneg %p79
      %p201 = pneg %p76
      %p202 = pneg %p100
      %p203 = pneg %p97
      %p204 = pneg %p121
      %p205 = pneg %p118
      %p206 = pneg %p147
      %p207 = pneg %p144
      %p208 = scmp.lt.s32.totalorder %s16, 1
      %s209 = scalar_select %p208, %s16, 1
      %s210 = smul.addr %s209, 8
      %s211 = scalar_lea.vmem %s5, %s210
      %p212 = scmp.lt.s32.totalorder %s16, 1
      %s213 = scalar_select %p212, %s16, 1
      %s214 = smul.addr %s213, 8
      %s215 = scalar_lea.vmem %s0, %s214
      %p216 = scmp.lt.s32.totalorder %s16, 1
      %s217 = scalar_select %p216, %s16, 1
      %s218 = smul.addr %s217, 8
      %s219 = scalar_lea.vmem %s5, %s218
      %v220 = vld [vmem:[%s215] sm:$0xff]
      %v221 = vld [vmem:[%s1] sm:$0xff]
      %v222 = vld [vmem:[%s1 + $0x8] sm:$0xff]
      %v223 = vld [vmem:[%s1 + $0x10] sm:$0xff]
      %v224 = vld [vmem:[%s1 + $0x18] sm:$0xff]
      %v225 = vld [vmem:[%s2] sm:$0x1]
      %v226 = vld [vmem:[%s3] sm:$0xff]
      %v227 = vld [vmem:[%s4] sm:$0xff]
      %v229 = vlaneseq
      %v230 = vshrl.u32 %v229, 7
      %v231 = vsub.s32 0, %v230
      %v232 = vrot.slane %v225, %v231
      %vm234 = vcmask 261120
      %v236 = vsel %vm234, %v220, 0
      %238 = vmatprep.subr.mxu0 0.0
      %239 = vmatpush1.msra.mxu0 0.0
      %240 = vmatprep.subr.mxu0 0.0
      %241 = vmatpush1.msra.mxu0 0.0
      %242 = vmatprep.subr.mxu0 0.0
      %243 = vmatpush1.msra.mxu0 0.0
      %244 = vmatprep.subr.mxu0 0.0
      %245 = vmatpush1.msra.mxu0 0.0
      %246 = vmatprep.subr.mxu0 0.0
      %247 = vmatpush1.msra.mxu0 0.0
      %248 = vmatprep.subr.mxu0 0.0
      %249 = vmatpush1.msra.mxu0 0.0
      %250 = vmatprep.subr.mxu0 0.0
      %251 = vmatpush1.msra.mxu0 0.0
      %252 = vmatprep.subr.mxu0 0.0
      %253 = vmatpush1.msra.mxu0 0.0
      %254 = vmatprep.subr.mxu0 0.0
      %255 = vmatpush1.msra.mxu0 0.0
      %256 = vmatprep.subr.mxu0 0.0
      %257 = vmatpush1.msra.mxu0 0.0
      %258 = vmatprep.subr.mxu0 0.0
      %259 = vmatpush1.msra.mxu0 0.0
      %260 = vmatprep.subr.mxu0 0.0
      %261 = vmatpush1.msra.mxu0 0.0
      %262 = vmatprep.subr.mxu0 0.0
      %263 = vmatpush1.msra.mxu0 %v224
      %264 = vmatprep.subr.mxu0 0.0
      %265 = vmatpush1.msra.mxu0 %v223
      %266 = vmatprep.subr.mxu0 0.0
      %267 = vmatpush1.msra.mxu0 %v222
      %268 = vmatprep.subr.mxu0 0.0
      %269 = vmatpush1.msra.mxu0 %v221
      %270 = vmatprep.subr.mxu0 0.0
      %271 = vmatpush2.msra.mxu0 0.0
      %272 = vmatprep.subr.mxu0 0.0
      %273 = vmatpush2.msra.mxu0 0.0
      %274 = vmatprep.subr.mxu0 0.0
      %275 = vmatpush2.msra.mxu0 0.0
      %276 = vmatprep.subr.mxu0 0.0
      %277 = vmatpush2.msra.mxu0 0.0
      %278 = vmatprep.subr.mxu0 0.0
      %279 = vmatpush2.msra.mxu0 0.0
      %280 = vmatprep.subr.mxu0 0.0
      %281 = vmatpush2.msra.mxu0 0.0
      %282 = vmatprep.subr.mxu0 0.0
      %283 = vmatpush2.msra.mxu0 0.0
      %284 = vmatprep.subr.mxu0 0.0
      %285 = vmatpush2.msra.mxu0 0.0
      %286 = vmatprep.subr.mxu0 0.0
      %287 = vmatpush2.msra.mxu0 0.0
      %288 = vmatprep.subr.mxu0 0.0
      %289 = vmatpush2.msra.mxu0 0.0
      %290 = vmatprep.subr.mxu0 0.0
      %291 = vmatpush2.msra.mxu0 0.0
      %292 = vmatprep.subr.mxu0 0.0
      %293 = vmatpush2.msra.mxu0 0.0
      %294 = vmatprep.subr.mxu0 0.0
      %295 = vmatpush2.msra.mxu0 0.0
      %296 = vmatprep.subr.mxu0 0.0
      %297 = vmatpush2.msra.mxu0 0.0
      %298 = vmatprep.subr.mxu0 0.0
      %299 = vmatpush2.msra.mxu0 0.0
      %300 = vmatprep.subr.mxu0 0.0
      %301 = vmatpush2.msra.mxu0 0.0
      %302 = vmatprep.mubr.f32.mxu0 0.0
      %303 = vmatmul.mubr.f32.gmra.mxu0 %v236
      %v304 = vpop.f32.mrf.mxu0
      %v305 = vadd.f32 %v232, %v304
      %v306 = vpop.f32.mrf.mxu0
      %307 = vdwg.mxu0
      %v308 = vmul.f32 %v305, %v226
      %310 = vrot.lane.b32.xlu0 %v227, 16
      %v311 = vpop.permute.xlu0 %310
      %v313 = vmul.f32 %v305, %v311
      %315 = vrot.lane.b32.xlu0 %v313, 112
      %v316 = vpop.permute.xlu0 %315
      %v318 = vsub.f32 %v308, %v316
      %320 = vrot.lane.b32.xlu0 %v226, 16
      %v321 = vpop.permute.xlu0 %320
      %v323 = vmul.f32 %v305, %v321
      %v324 = vmul.f32 %v305, %v227
      %326 = vrot.lane.b32.xlu0 %v324, 16
      %v327 = vpop.permute.xlu0 %326
      %v329 = vadd.f32 %v323, %v327
      %vm330 = vcmask 130048
      %v331 = vsel %vm330, %v318, %v329
      %332 = vst.msk [vmem:[%s219] sm:$0xff] %vm234, %v331
      %p333 = scmp.lt.s32.totalorder %s16, 1
      %s334 = scalar_select %p333, %s16, 1
      %s335 = smul.addr %s334, 8
      %s336 = scalar_lea.vmem %s5, %s335
      // Predicated region
      $region41: #{decoder_block_forward.9} parent=39 // pred_check
        %p337 = pneg %p144
      $region42: #{decoder_block_forward.9} parent=39 // pred_check_branch
        %339 = sbr.rel (%p337) target = $region44
      $region43: #{decoder_block_forward.9} parent=39 // pred_region
        _
      $region44: #{decoder_block_forward.9} parent=39 // pred_fallthru
        _
    $region40: #{decoder_block_forward.9} parent=5 // pred_fallthru
      _
    %p340 = scmp.le.s32.totalorder 2, %s11
    // Predicated region
    $region45: #{decoder_block_forward.9} parent=5 // pred_check
      %p341 = pneg %p340
    $region46: #{decoder_block_forward.9} parent=5 // pred_check_branch
      %343 = sbr.rel (%p341) target = $region48
    $region47: #{decoder_block_forward.9} parent=5 // pred_region
      %s344 = ssub.s32 %s11, 2
      // Predicated region
      $region49: #{decoder_block_forward.9} parent=47 // pred_check
        %p345 = pneg %p150
      $region50: #{decoder_block_forward.9} parent=47 // pred_check_branch
        %347 = sbr.rel (%p345) target = $region52
      $region51: #{decoder_block_forward.9} parent=47 // pred_region
        %p348 = scmp.lt.s32.totalorder %s17, 1
        %s349 = scalar_select %p348, %s17, 1
        %s350 = smul.addr %s349, 8
        %s351 = scalar_lea.vmem %s5, %s350
      $region52: #{decoder_block_forward.9} parent=47 // pred_fallthru
        _
    $region48: #{decoder_block_forward.9} parent=5 // pred_fallthru
      _
  $region6: #{decoder_block_forward.9} parent=0 // loop_footer
    %s15 = sadd.s32 1, %s11
  $region7: #{decoder_block_forward.9} parent=0 // loop_footer_branch
    %10 = sbr.rel target = $region3
  $region8: #{decoder_block_forward.9} parent=0 // loop_exit
    _

// kernel: decoder_block_forward.8
$region0: #{decoder_block_forward.8}
  #allocation0 [shape = 'u32[]', space=smem, size = 0x4, offset = 0x4, fixed_abs, tag = 'smem constant byte address 0x4 - core index']
  #allocation1 [shape = 'u32[144,128]{1,0:T(1,128)}', space=vmem, size = 0x12000, scoped, tag = 'internal scratch']
  %s0 = inlined_call_operand.vmem [shape: f32[2,8,32], index: 0, kind: input, shape index: {}]
  %s1 = inlined_call_operand.vmem [shape: f32[1,32], index: 1, kind: input, shape index: {}]
  %s2 = inlined_call_operand.vmem [shape: f32[1,32], index: 2, kind: input, shape index: {}]
  %s3 = inlined_call_operand.vmem [shape: f32[32,32], index: 3, kind: input, shape index: {}]
  %s4 = inlined_call_operand.vmem [shape: f32[1,32], index: 4, kind: input, shape index: {}]
  %s5 = inlined_call_operand.vmem [shape: f32[8,16], index: 5, kind: input, shape index: {}]
  %s6 = inlined_call_operand.vmem [shape: f32[8,16], index: 6, kind: input, shape index: {}]
  %s7 = inlined_call_operand.vmem [shape: f32[2,8,32], index: 7, kind: output, shape index: {0}]
  %s8 = inlined_call_operand.vmem [shape: f32[2,8,32], index: 8, kind: output, shape index: {1}]
  %9 = xla_tuple %s7, %s8
  %s10 = sld [smem:[#allocation0]]
  $region69: #{decoder_block_forward.8} parent=0
    _
  %s12 = ssub.s32 1, %s10
  %s13 = scalar_select 0, %s12, %s10
  loop: start=0, step=1, limit=4
  $region2: #{decoder_block_forward.8} parent=0 // loop_pre_header
    _
  $region3: #{decoder_block_forward.8} parent=0 // loop_header
    %s15 = sphi 0, %s19
    %p16 = scmp.ge.s32.totalorder %s15, 4
    %s25 = sphi 0, %s27
    %s28 = sphi 0, %s25
    %s29 = sphi 0, %s28
    %s45 = sphi 0, %s29
    %s49 = sphi 0, %s49
    %s51 = sphi 0, %s49
    %s52 = sphi 0, %s51
    %s66 = sphi 0, %s52
    %s70 = sphi 0, %s70
    %s72 = sphi 0, %s70
    %s73 = sphi 0, %s72
    %s87 = sphi 0, %s73
    %s91 = sphi 0, %s91
    %s93 = sphi 0, %s91
    %s94 = sphi 0, %s93
    %s108 = sphi 0, %s94
    %s112 = sphi 0, %s112
    %s114 = sphi 0, %s112
    %s115 = sphi 0, %s114
    %s129 = sphi 0, %s115
    %s133 = sphi 0, %s133
    %s135 = sphi 0, %s133
    %s136 = sphi 0, %s135
    %s150 = sphi 0, %s136
    %s154 = sphi 0, %s154
    %s156 = sphi 0, %s154
    %s157 = sphi 0, %s156
    %s171 = sphi 0, %s157
    %s177 = sphi 0, %s179
    %s180 = sphi 0, %s177
    %s181 = sphi 0, %s180
    %s197 = sphi 0, %s181
    %s203 = sphi 0, %s205
    %s206 = sphi 0, %s203
    %s207 = sphi 0, %s206
    %s223 = sphi 0, %s207
  $region4: #{decoder_block_forward.8} parent=0 // loop_header_branch
    %18 = sbr.rel (%p16) target = $region8
  $region5: #{decoder_block_forward.8} parent=0 // loop_body
    %s20 = ssub.s32 %s15, 1
    %s21 = ssub.s32 %s15, 2
    %s22 = sadd.s32 %s15, 1
    %s23 = ssub.s32 %s15, %s22
    %p24 = scmp.eq.s32.totalorder %s23, 0
    %s26 = sadd.s32 %s25, 1
    %s27 = scalar_select %p24, %s25, %s26
    %p30 = pneg %p24
    %p31 = scmp.eq.s32.totalorder %s15, 1
    %p32 = por %p30, %p31
    %p33 = scmp.ne.s32.totalorder %s25, %s28
    %p34 = scmp.eq.s32.totalorder %s15, 0
    %p35 = por %p33, %p34
    %p36 = scmp.ne.s32.totalorder %s25, %s28
    %p37 = scmp.eq.s32.totalorder %s20, 1
    %p38 = por %p36, %p37
    %p39 = scmp.ne.s32.totalorder %s28, %s29
    %p40 = scmp.eq.s32.totalorder %s20, 0
    %p41 = por %p39, %p40
    %p42 = scmp.ne.s32.totalorder %s28, %s29
    %p43 = scmp.eq.s32.totalorder %s21, 1
    %p44 = por %p42, %p43
    %p46 = scmp.ne.s32.totalorder %s29, %s45
    %p47 = scmp.eq.s32.totalorder %s21, 0
    %p48 = por %p46, %p47
    %s50 = sadd.s32 %s49, 1
    %p53 = scmp.eq.s32.totalorder %s15, 1
    %p54 = scmp.ne.s32.totalorder %s49, %s51
    %p55 = scmp.eq.s32.totalorder %s15, 0
    %p56 = por %p54, %p55
    %p57 = scmp.ne.s32.totalorder %s49, %s51
    %p58 = scmp.eq.s32.totalorder %s20, 1
    %p59 = por %p57, %p58
    %p60 = scmp.ne.s32.totalorder %s51, %s52
    %p61 = scmp.eq.s32.totalorder %s20, 0
    %p62 = por %p60, %p61
    %p63 = scmp.ne.s32.totalorder %s51, %s52
    %p64 = scmp.eq.s32.totalorder %s21, 1
    %p65 = por %p63, %p64
    %p67 = scmp.ne.s32.totalorder %s52, %s66
    %p68 = scmp.eq.s32.totalorder %s21, 0
    %p69 = por %p67, %p68
    %s71 = sadd.s32 %s70, 1
    %p74 = scmp.eq.s32.totalorder %s15, 1
    %p75 = scmp.ne.s32.totalorder %s70, %s72
    %p76 = scmp.eq.s32.totalorder %s15, 0
    %p77 = por %p75, %p76
    %p78 = scmp.ne.s32.totalorder %s70, %s72
    %p79 = scmp.eq.s32.totalorder %s20, 1
    %p80 = por %p78, %p79
    %p81 = scmp.ne.s32.totalorder %s72, %s73
    %p82 = scmp.eq.s32.totalorder %s20, 0
    %p83 = por %p81, %p82
    %p84 = scmp.ne.s32.totalorder %s72, %s73
    %p85 = scmp.eq.s32.totalorder %s21, 1
    %p86 = por %p84, %p85
    %p88 = scmp.ne.s32.totalorder %s73, %s87
    %p89 = scmp.eq.s32.totalorder %s21, 0
    %p90 = por %p88, %p89
    %s92 = sadd.s32 %s91, 1
    %p95 = scmp.eq.s32.totalorder %s15, 1
    %p96 = scmp.ne.s32.totalorder %s91, %s93
    %p97 = scmp.eq.s32.totalorder %s15, 0
    %p98 = por %p96, %p97
    %p99 = scmp.ne.s32.totalorder %s91, %s93
    %p100 = scmp.eq.s32.totalorder %s20, 1
    %p101 = por %p99, %p100
    %p102 = scmp.ne.s32.totalorder %s93, %s94
    %p103 = scmp.eq.s32.totalorder %s20, 0
    %p104 = por %p102, %p103
    %p105 = scmp.ne.s32.totalorder %s93, %s94
    %p106 = scmp.eq.s32.totalorder %s21, 1
    %p107 = por %p105, %p106
    %p109 = scmp.ne.s32.totalorder %s94, %s108
    %p110 = scmp.eq.s32.totalorder %s21, 0
    %p111 = por %p109, %p110
    %s113 = sadd.s32 %s112, 1
    %p116 = scmp.eq.s32.totalorder %s15, 1
    %p117 = scmp.ne.s32.totalorder %s112, %s114
    %p118 = scmp.eq.s32.totalorder %s15, 0
    %p119 = por %p117, %p118
    %p120 = scmp.ne.s32.totalorder %s112, %s114
    %p121 = scmp.eq.s32.totalorder %s20, 1
    %p122 = por %p120, %p121
    %p123 = scmp.ne.s32.totalorder %s114, %s115
    %p124 = scmp.eq.s32.totalorder %s20, 0
    %p125 = por %p123, %p124
    %p126 = scmp.ne.s32.totalorder %s114, %s115
    %p127 = scmp.eq.s32.totalorder %s21, 1
    %p128 = por %p126, %p127
    %p130 = scmp.ne.s32.totalorder %s115, %s129
    %p131 = scmp.eq.s32.totalorder %s21, 0
    %p132 = por %p130, %p131
    %s134 = sadd.s32 %s133, 1
    %p137 = scmp.eq.s32.totalorder %s15, 1
    %p138 = scmp.ne.s32.totalorder %s133, %s135
    %p139 = scmp.eq.s32.totalorder %s15, 0
    %p140 = por %p138, %p139
    %p141 = scmp.ne.s32.totalorder %s133, %s135
    %p142 = scmp.eq.s32.totalorder %s20, 1
    %p143 = por %p141, %p142
    %p144 = scmp.ne.s32.totalorder %s135, %s136
    %p145 = scmp.eq.s32.totalorder %s20, 0
    %p146 = por %p144, %p145
    %p147 = scmp.ne.s32.totalorder %s135, %s136
    %p148 = scmp.eq.s32.totalorder %s21, 1
    %p149 = por %p147, %p148
    %p151 = scmp.ne.s32.totalorder %s136, %s150
    %p152 = scmp.eq.s32.totalorder %s21, 0
    %p153 = por %p151, %p152
    %s155 = sadd.s32 %s154, 1
    %p158 = scmp.eq.s32.totalorder %s15, 1
    %p159 = scmp.ne.s32.totalorder %s154, %s156
    %p160 = scmp.eq.s32.totalorder %s15, 0
    %p161 = por %p159, %p160
    %p162 = scmp.ne.s32.totalorder %s154, %s156
    %p163 = scmp.eq.s32.totalorder %s20, 1
    %p164 = por %p162, %p163
    %p165 = scmp.ne.s32.totalorder %s156, %s157
    %p166 = scmp.eq.s32.totalorder %s20, 0
    %p167 = por %p165, %p166
    %p168 = scmp.ne.s32.totalorder %s156, %s157
    %p169 = scmp.eq.s32.totalorder %s21, 1
    %p170 = por %p168, %p169
    %p172 = scmp.ne.s32.totalorder %s157, %s171
    %p173 = scmp.eq.s32.totalorder %s21, 0
    %p174 = por %p172, %p173
    %s175 = ssub.s32 %s15, %s22
    %p176 = scmp.eq.s32.totalorder %s175, 0
    %s178 = sadd.s32 %s177, 1
    %s179 = scalar_select %p176, %s177, %s178
    %p182 = pneg %p176
    %p183 = scmp.eq.s32.totalorder %s15, 1
    %p184 = por %p182, %p183
    %p185 = scmp.ne.s32.totalorder %s177, %s180
    %p186 = scmp.eq.s32.totalorder %s15, 0
    %p187 = por %p185, %p186
    %p188 = scmp.ne.s32.totalorder %s177, %s180
    %p189 = scmp.eq.s32.totalorder %s20, 1
    %p190 = por %p188, %p189
    %p191 = scmp.ne.s32.totalorder %s180, %s181
    %p192 = scmp.eq.s32.totalorder %s20, 0
    %p193 = por %p191, %p192
    %p194 = scmp.ne.s32.totalorder %s180, %s181
    %p195 = scmp.eq.s32.totalorder %s21, 1
    %p196 = por %p194, %p195
    %p198 = scmp.ne.s32.totalorder %s181, %s197
    %p199 = scmp.eq.s32.totalorder %s21, 0
    %p200 = por %p198, %p199
    %s201 = ssub.s32 %s15, %s22
    %p202 = scmp.eq.s32.totalorder %s201, 0
    %s204 = sadd.s32 %s203, 1
    %s205 = scalar_select %p202, %s203, %s204
    %p208 = pneg %p202
    %p209 = scmp.eq.s32.totalorder %s15, 1
    %p210 = por %p208, %p209
    %p211 = scmp.ne.s32.totalorder %s203, %s206
    %p212 = scmp.eq.s32.totalorder %s15, 0
    %p213 = por %p211, %p212
    %p214 = scmp.ne.s32.totalorder %s203, %s206
    %p215 = scmp.eq.s32.totalorder %s20, 1
    %p216 = por %p214, %p215
    %p217 = scmp.ne.s32.totalorder %s206, %s207
    %p218 = scmp.eq.s32.totalorder %s20, 0
    %p219 = por %p217, %p218
    %p220 = scmp.ne.s32.totalorder %s206, %s207
    %p221 = scmp.eq.s32.totalorder %s21, 1
    %p222 = por %p220, %p221
    %p224 = scmp.ne.s32.totalorder %s207, %s223
    %p225 = scmp.eq.s32.totalorder %s21, 0
    %p226 = por %p224, %p225
    %p227 = scmp.le.s32.totalorder 1, %s15
    %p228 = scmp.lt.s32.totalorder %s15, 3
    %p229 = pnand %p227, %p228
    %p230 = pneg %p229
    // Predicated region
    $region9: #{decoder_block_forward.8} parent=5 // pred_check
      _
    $region10: #{decoder_block_forward.8} parent=5 // pred_check_branch
      %232 = sbr.rel (%p229) target = $region12
    $region11: #{decoder_block_forward.8} parent=5 // pred_region
      %s233 = ssub.s32 %s15, 1
      // Predicated region
      $region13: #{decoder_block_forward.8} parent=11 // pred_check
        %p234 = pneg %p62
      $region14: #{decoder_block_forward.8} parent=11 // pred_check_branch
        %236 = sbr.rel (%p234) target = $region16
      $region15: #{decoder_block_forward.8} parent=11 // pred_region
        _
      $region16: #{decoder_block_forward.8} parent=11 // pred_fallthru
        _
      // Predicated region
      $region17: #{decoder_block_forward.8} parent=11 // pred_check
        %p237 = pneg %p83
      $region18: #{decoder_block_forward.8} parent=11 // pred_check_branch
        %239 = sbr.rel (%p237) target = $region20
      $region19: #{decoder_block_forward.8} parent=11 // pred_region
        _
      $region20: #{decoder_block_forward.8} parent=11 // pred_fallthru
        _
      // Predicated region
      $region21: #{decoder_block_forward.8} parent=11 // pred_check
        %p240 = pneg %p104
      $region22: #{decoder_block_forward.8} parent=11 // pred_check_branch
        %242 = sbr.rel (%p240) target = $region24
      $region23: #{decoder_block_forward.8} parent=11 // pred_region
        _
      $region24: #{decoder_block_forward.8} parent=11 // pred_fallthru
        _
      // Predicated region
      $region25: #{decoder_block_forward.8} parent=11 // pred_check
        %p243 = pneg %p125
      $region26: #{decoder_block_forward.8} parent=11 // pred_check_branch
        %245 = sbr.rel (%p243) target = $region28
      $region27: #{decoder_block_forward.8} parent=11 // pred_region
        _
      $region28: #{decoder_block_forward.8} parent=11 // pred_fallthru
        _
      // Predicated region
      $region29: #{decoder_block_forward.8} parent=11 // pred_check
        %p246 = pneg %p146
      $region30: #{decoder_block_forward.8} parent=11 // pred_check_branch
        %248 = sbr.rel (%p246) target = $region32
      $region31: #{decoder_block_forward.8} parent=11 // pred_region
        _
      $region32: #{decoder_block_forward.8} parent=11 // pred_fallthru
        _
      // Predicated region
      $region33: #{decoder_block_forward.8} parent=11 // pred_check
        %p249 = pneg %p167
      $region34: #{decoder_block_forward.8} parent=11 // pred_check_branch
        %251 = sbr.rel (%p249) target = $region36
      $region35: #{decoder_block_forward.8} parent=11 // pred_region
        _
      $region36: #{decoder_block_forward.8} parent=11 // pred_fallthru
        _
    $region12: #{decoder_block_forward.8} parent=5 // pred_fallthru
      _
    %p252 = scmp.lt.s32.totalorder %s15, 2
    // Predicated region
    $region37: #{decoder_block_forward.8} parent=5 // pred_check
      %p253 = pneg %p252
    $region38: #{decoder_block_forward.8} parent=5 // pred_check_branch
      %255 = sbr.rel (%p253) target = $region40
    $region39: #{decoder_block_forward.8} parent=5 // pred_region
      // Predicated region
      $region41: #{decoder_block_forward.8} parent=39 // pred_check
        %p256 = pneg %p35
      $region42: #{decoder_block_forward.8} parent=39 // pred_check_branch
        %258 = sbr.rel (%p256) target = $region44
      $region43: #{decoder_block_forward.8} parent=39 // pred_region
        %p259 = scmp.lt.s32.totalorder %s15, 1
        %s260 = scalar_select %p259, %s15, 1
        %s261 = smul.addr %s260, 8
        %s262 = scalar_lea.vmem %s0, %s261
      $region44: #{decoder_block_forward.8} parent=39 // pred_fallthru
        _
    $region40: #{decoder_block_forward.8} parent=5 // pred_fallthru
      _
    %p263 = scmp.le.s32.totalorder 1, %s15
    %p264 = scmp.lt.s32.totalorder %s15, 3
    %p265 = pnand %p263, %p264
    %p266 = pneg %p265
    // Predicated region
    $region45: #{decoder_block_forward.8} parent=5 // pred_check
      _
    $region46: #{decoder_block_forward.8} parent=5 // pred_check_branch
      %268 = sbr.rel (%p265) target = $region48
    $region47: #{decoder_block_forward.8} parent=5 // pred_region
      %s269 = ssub.s32 %s15, 1
      %p270 = scmp.lt.s32.totalorder %s20, 1
      %s271 = scalar_select %p270, %s20, 1
      %s272 = smul.addr %s271, 8
      %s273 = scalar_lea.vmem %s0, %s272
      %p274 = pneg %p41
      %p275 = pneg %p38
      %p276 = pneg %p62
      %p277 = pneg %p59
      %p278 = pneg %p83
      %p279 = pneg %p80
      %p280 = pneg %p104
      %p281 = pneg %p101
      %p282 = pneg %p125
      %p283 = pneg %p122
      %p284 = pneg %p146
      %p285 = pneg %p143
      %p286 = pneg %p167
      %p287 = pneg %p164
      %p288 = pneg %p193
      %p289 = pneg %p190
      %p290 = scmp.lt.s32.totalorder %s20, 1
      %s291 = scalar_select %p290, %s20, 1
      %s292 = smul.addr %s291, 8
      %s293 = scalar_lea.vmem %s7, %s292
      %p294 = pneg %p219
      %p295 = pneg %p216
      %p296 = scmp.lt.s32.totalorder %s20, 1
      %s297 = scalar_select %p296, %s20, 1
      %s298 = smul.addr %s297, 8
      %s299 = scalar_lea.vmem %s8, %s298
      %p300 = scmp.lt.s32.totalorder %s20, 1
      %s301 = scalar_select %p300, %s20, 1
      %s302 = smul.addr %s301, 8
      %s303 = scalar_lea.vmem %s0, %s302
      %p304 = scmp.lt.s32.totalorder %s20, 1
      %s305 = scalar_select %p304, %s20, 1
      %s306 = smul.addr %s305, 8
      %s307 = scalar_lea.vmem %s7, %s306
      %p308 = scmp.lt.s32.totalorder %s20, 1
      %s309 = scalar_select %p308, %s20, 1
      %s310 = smul.addr %s309, 8
      %s311 = scalar_lea.vmem %s8, %s310
      %v312 = vld [vmem:[%s303] sm:$0xff]
      %v313 = vld [vmem:[%s1] sm:$0x1]
      %v314 = vld [vmem:[%s2] sm:$0x1]
      %vm315 = vcmask 261120
      %v316 = vsel %vm315, %v312, 0.0
      %317 = vadd.xlane.f32.xlu0 %v316
      %v318 = vpop.xlane.xlu0 %317
      %v319 = vrcp.pop 32.0
      %v320 = vmul.f32 %v318, %v319
      %v321 = vsub.f32 %v312, %v320
      %v322 = vmul.f32 %v321, %v321
      %v323 = vsel %vm315, %v322, 0.0
      %324 = vadd.xlane.f32.xlu0 %v323
      %v325 = vpop.xlane.xlu0 %324
      %v326 = vmul.f32 %v325, %v319
      %v327 = vadd.f32 %v326, 1e-05
      %v328 = vrsqrt.pop %v327
      %v329 = vmul.f32 %v321, %v328
      %v331 = vlaneseq
      %v332 = vshrl.u32 %v331, 7
      %v333 = vsub.s32 0, %v332
      %v334 = vrot.slane %v313, %v333
      %v336 = vmul.f32 %v329, %v334
      %v338 = vlaneseq
      %v339 = vshrl.u32 %v338, 7
      %v340 = vsub.s32 0, %v339
      %v341 = vrot.slane %v314, %v340
      %v343 = vadd.f32 %v336, %v341
      %344 = vst.msk [vmem:[%s307] sm:$0xff] %vm315, %v343
      %v345 = vld [vmem:[%s3] sm:$0xff]
      %v346 = vld [vmem:[%s3 + $0x8] sm:$0xff]
      %v347 = vld [vmem:[%s3 + $0x10] sm:$0xff]
      %v348 = vld [vmem:[%s3 + $0x18] sm:$0xff]
      %v349 = vld [vmem:[%s4] sm:$0x1]
      %v350 = vld [vmem:[%s5] sm:$0xff]
      %v351 = vld [vmem:[%s6] sm:$0xff]
      %v353 = vlaneseq
      %v354 = vshrl.u32 %v353, 7
      %v355 = vsub.s32 0, %v354
      %v356 = vrot.slane %v349, %v355
      %v359 = vsel %vm315, %v343, 0
      %361 = vmatprep.subr.mxu0 0.0
      %362 = vmatpush1.msra.mxu0 0.0
      %363 = vmatprep.subr.mxu0 0.0
      %364 = vmatpush1.msra.mxu0 0.0
      %365 = vmatprep.subr.mxu0 0.0
      %366 = vmatpush1.msra.mxu0 0.0
      %367 = vmatprep.subr.mxu0 0.0
      %368 = vmatpush1.msra.mxu0 0.0
      %369 = vmatprep.subr.mxu0 0.0
      %370 = vmatpush1.msra.mxu0 0.0
      %371 = vmatprep.subr.mxu0 0.0
      %372 = vmatpush1.msra.mxu0 0.0
      %373 = vmatprep.subr.mxu0 0.0
      %374 = vmatpush1.msra.mxu0 0.0
      %375 = vmatprep.subr.mxu0 0.0
      %376 = vmatpush1.msra.mxu0 0.0
      %377 = vmatprep.subr.mxu0 0.0
      %378 = vmatpush1.msra.mxu0 0.0
      %379 = vmatprep.subr.mxu0 0.0
      %380 = vmatpush1.msra.mxu0 0.0
      %381 = vmatprep.subr.mxu0 0.0
      %382 = vmatpush1.msra.mxu0 0.0
      %383 = vmatprep.subr.mxu0 0.0
      %384 = vmatpush1.msra.mxu0 0.0
      %385 = vmatprep.subr.mxu0 0.0
      %386 = vmatpush1.msra.mxu0 %v348
      %387 = vmatprep.subr.mxu0 0.0
      %388 = vmatpush1.msra.mxu0 %v347
      %389 = vmatprep.subr.mxu0 0.0
      %390 = vmatpush1.msra.mxu0 %v346
      %391 = vmatprep.subr.mxu0 0.0
      %392 = vmatpush1.msra.mxu0 %v345
      %393 = vmatprep.subr.mxu0 0.0
      %394 = vmatpush2.msra.mxu0 0.0
      %395 = vmatprep.subr.mxu0 0.0
      %396 = vmatpush2.msra.mxu0 0.0
      %397 = vmatprep.subr.mxu0 0.0
      %398 = vmatpush2.msra.mxu0 0.0
      %399 = vmatprep.subr.mxu0 0.0
      %400 = vmatpush2.msra.mxu0 0.0
      %401 = vmatprep.subr.mxu0 0.0
      %402 = vmatpush2.msra.mxu0 0.0
      %403 = vmatprep.subr.mxu0 0.0
      %404 = vmatpush2.msra.mxu0 0.0
      %405 = vmatprep.subr.mxu0 0.0
      %406 = vmatpush2.msra.mxu0 0.0
      %407 = vmatprep.subr.mxu0 0.0
      %408 = vmatpush2.msra.mxu0 0.0
      %409 = vmatprep.subr.mxu0 0.0
      %410 = vmatpush2.msra.mxu0 0.0
      %411 = vmatprep.subr.mxu0 0.0
      %412 = vmatpush2.msra.mxu0 0.0
      %413 = vmatprep.subr.mxu0 0.0
      %414 = vmatpush2.msra.mxu0 0.0
      %415 = vmatprep.subr.mxu0 0.0
      %416 = vmatpush2.msra.mxu0 0.0
      %417 = vmatprep.subr.mxu0 0.0
      %418 = vmatpush2.msra.mxu0 0.0
      %419 = vmatprep.subr.mxu0 0.0
      %420 = vmatpush2.msra.mxu0 0.0
      %421 = vmatprep.subr.mxu0 0.0
      %422 = vmatpush2.msra.mxu0 0.0
      %423 = vmatprep.subr.mxu0 0.0
      %424 = vmatpush2.msra.mxu0 0.0
      %425 = vmatprep.mubr.f32.mxu0 0.0
      %426 = vmatmul.mubr.f32.gmra.mxu0 %v359
      %v427 = vpop.f32.mrf.mxu0
      %v428 = vadd.f32 %v356, %v427
      %v429 = vpop.f32.mrf.mxu0
      %430 = vdwg.mxu0
      %v431 = vmul.f32 %v428, %v350
      %433 = vrot.lane.b32.xlu0 %v351, 16
      %v434 = vpop.permute.xlu0 %433
      %v436 = vmul.f32 %v428, %v434
      %438 = vrot.lane.b32.xlu0 %v436, 112
      %v439 = vpop.permute.xlu0 %438
      %v441 = vsub.f32 %v431, %v439
      %443 = vrot.lane.b32.xlu0 %v350, 16
      %v444 = vpop.permute.xlu0 %443
      %v446 = vmul.f32 %v428, %v444
      %v447 = vmul.f32 %v428, %v351
      %449 = vrot.lane.b32.xlu0 %v447, 16
      %v450 = vpop.permute.xlu0 %449
      %v452 = vadd.f32 %v446, %v450
      %vm453 = vcmask 130048
      %v454 = vsel %vm453, %v441, %v452
      %455 = vst.msk [vmem:[%s311] sm:$0xff] %vm315, %v454
      %p456 = scmp.lt.s32.totalorder %s20, 1
      %s457 = scalar_select %p456, %s20, 1
      %s458 = smul.addr %s457, 8
      %s459 = scalar_lea.vmem %s7, %s458
      %p460 = scmp.lt.s32.totalorder %s20, 1
      %s461 = scalar_select %p460, %s20, 1
      %s462 = smul.addr %s461, 8
      %s463 = scalar_lea.vmem %s8, %s462
      // Predicated region
      $region49: #{decoder_block_forward.8} parent=47 // pred_check
        %p464 = pneg %p190
      $region50: #{decoder_block_forward.8} parent=47 // pred_check_branch
        %466 = sbr.rel (%p464) target = $region52
      $region51: #{decoder_block_forward.8} parent=47 // pred_region
        _
      $region52: #{decoder_block_forward.8} parent=47 // pred_fallthru
        _
      // Predicated region
      $region53: #{decoder_block_forward.8} parent=47 // pred_check
        %p467 = pneg %p216
      $region54: #{decoder_block_forward.8} parent=47 // pred_check_branch
        %469 = sbr.rel (%p467) target = $region56
      $region55: #{decoder_block_forward.8} parent=47 // pred_region
        _
      $region56: #{decoder_block_forward.8} parent=47 // pred_fallthru
        _
    $region48: #{decoder_block_forward.8} parent=5 // pred_fallthru
      _
    %p470 = scmp.le.s32.totalorder 2, %s15
    // Predicated region
    $region57: #{decoder_block_forward.8} parent=5 // pred_check
      %p471 = pneg %p470
    $region58: #{decoder_block_forward.8} parent=5 // pred_check_branch
      %473 = sbr.rel (%p471) target = $region60
    $region59: #{decoder_block_forward.8} parent=5 // pred_region
      %s474 = ssub.s32 %s15, 2
      // Predicated region
      $region61: #{decoder_block_forward.8} parent=59 // pred_check
        %p475 = pneg %p196
      $region62: #{decoder_block_forward.8} parent=59 // pred_check_branch
        %477 = sbr.rel (%p475) target = $region64
      $region63: #{decoder_block_forward.8} parent=59 // pred_region
        %p478 = scmp.lt.s32.totalorder %s21, 1
        %s479 = scalar_select %p478, %s21, 1
        %s480 = smul.addr %s479, 8
        %s481 = scalar_lea.vmem %s7, %s480
      $region64: #{decoder_block_forward.8} parent=59 // pred_fallthru
        _
      // Predicated region
      $region65: #{decoder_block_forward.8} parent=59 // pred_check
        %p482 = pneg %p222
      $region66: #{decoder_block_forward.8} parent=59 // pred_check_branch
        %484 = sbr.rel (%p482) target = $region68
      $region67: #{decoder_block_forward.8} parent=59 // pred_region
        %p485 = scmp.lt.s32.totalorder %s21, 1
        %s486 = scalar_select %p485, %s21, 1
        %s487 = smul.addr %s486, 8
        %s488 = scalar_lea.vmem %s8, %s487
      $region68: #{decoder_block_forward.8} parent=59 // pred_fallthru
        _
    $region60: #{decoder_block_forward.8} parent=5 // pred_fallthru
      _
  $region6: #{decoder_block_forward.8} parent=0 // loop_footer
    %s19 = sadd.s32 1, %s15
  $region7: #{decoder_block_forward.8} parent=0 // loop_footer_branch
    %14 = sbr.rel target = $region3
  $region8: #{decoder_block_forward.8} parent=0 // loop_exit
    _

// kernel: decoder_block_forward.6
$region0: #{decoder_block_forward.6}
  #allocation0 [shape = 'u32[]', space=smem, size = 0x4, offset = 0x4, fixed_abs, tag = 'smem constant byte address 0x4 - core index']
  #allocation1 [shape = 'u32[144,128]{1,0:T(1,128)}', space=vmem, size = 0x12000, scoped, tag = 'internal scratch']
  %s0 = inlined_call_operand.hbm [shape: f32[2,8,32], index: 0, kind: input, shape index: {}]
  %s1 = inlined_call_operand.vmem [shape: f32[1,32], index: 1, kind: input, shape index: {}]
  %s2 = inlined_call_operand.vmem [shape: f32[1,32], index: 2, kind: input, shape index: {}]
  %s3 = inlined_call_operand.vmem [shape: f32[32,32], index: 3, kind: input, shape index: {}]
  %s4 = inlined_call_operand.vmem [shape: f32[1,32], index: 4, kind: input, shape index: {}]
  %s5 = inlined_call_operand.vmem [shape: f32[32,32], index: 5, kind: input, shape index: {}]
  %s6 = inlined_call_operand.vmem [shape: f32[1,32], index: 6, kind: input, shape index: {}]
  %s7 = inlined_call_operand.vmem [shape: f32[8,16], index: 7, kind: input, shape index: {}]
  %s8 = inlined_call_operand.vmem [shape: f32[8,16], index: 8, kind: input, shape index: {}]
  %s9 = inlined_call_operand.vmem [shape: f32[2,8,32], index: 9, kind: output, shape index: {0}]
  %s10 = inlined_call_operand.vmem [shape: f32[2,8,32], index: 10, kind: output, shape index: {1}]
  %s11 = inlined_call_operand.vmem [shape: f32[2,8,32], index: 11, kind: output, shape index: {2}]
  %12 = xla_tuple %s9, %s10, %s11
  %s13 = sld [smem:[#allocation0]]
  $region89: #{decoder_block_forward.6} parent=0
    _
  %s15 = ssub.s32 1, %s13
  %s16 = scalar_select 0, %s15, %s13
  $region1: #{decoder_block_forward.6} parent=0
    #allocation2 [shape = 'u8[8192]{0}', space=vmem, size = 0x2000, scoped, tag = 'input window, operand 0']
    #allocation3 [shape = 's32[2]{0}', space=sflag, size = 0x8, scoped, tag = 'scoped memory for decoder_block_forward.6']
    %17 = vsyncpa [#allocation3], 0
    %s18 = scalar_lea.sflag [#allocation3], 1
    %19 = vsyncpa %s18, 0
    loop: start=0, step=1, limit=4
    $region2: #{decoder_block_forward.6} parent=1 // loop_pre_header
      _
    $region3: #{decoder_block_forward.6} parent=1 // loop_header
      %s21 = sphi 0, %s25
      %p22 = scmp.ge.s32.totalorder %s21, 4
      %s31 = sphi 0, %s33
      %s34 = sphi 0, %s31
      %s35 = sphi 0, %s34
      %s51 = sphi 0, %s35
      %s55 = sphi 0, %s55
      %s57 = sphi 0, %s55
      %s58 = sphi 0, %s57
      %s72 = sphi 0, %s58
      %s76 = sphi 0, %s76
      %s78 = sphi 0, %s76
      %s79 = sphi 0, %s78
      %s93 = sphi 0, %s79
      %s97 = sphi 0, %s97
      %s99 = sphi 0, %s97
      %s100 = sphi 0, %s99
      %s114 = sphi 0, %s100
      %s118 = sphi 0, %s118
      %s120 = sphi 0, %s118
      %s121 = sphi 0, %s120
      %s135 = sphi 0, %s121
      %s139 = sphi 0, %s139
      %s141 = sphi 0, %s139
      %s142 = sphi 0, %s141
      %s156 = sphi 0, %s142
      %s160 = sphi 0, %s160
      %s162 = sphi 0, %s160
      %s163 = sphi 0, %s162
      %s177 = sphi 0, %s163
      %s181 = sphi 0, %s181
      %s183 = sphi 0, %s181
      %s184 = sphi 0, %s183
      %s198 = sphi 0, %s184
      %s202 = sphi 0, %s202
      %s204 = sphi 0, %s202
      %s205 = sphi 0, %s204
      %s219 = sphi 0, %s205
      %s225 = sphi 0, %s227
      %s228 = sphi 0, %s225
      %s229 = sphi 0, %s228
      %s245 = sphi 0, %s229
      %s251 = sphi 0, %s253
      %s254 = sphi 0, %s251
      %s255 = sphi 0, %s254
      %s271 = sphi 0, %s255
      %s277 = sphi 0, %s279
      %s280 = sphi 0, %s277
      %s281 = sphi 0, %s280
      %s297 = sphi 0, %s281
    $region4: #{decoder_block_forward.6} parent=1 // loop_header_branch
      %24 = sbr.rel (%p22) target = $region8
    $region5: #{decoder_block_forward.6} parent=1 // loop_body
      %s26 = ssub.s32 %s21, 1
      %s27 = ssub.s32 %s21, 2
      %s28 = sadd.s32 %s21, 1
      %s29 = ssub.s32 %s21, %s28
      %p30 = scmp.eq.s32.totalorder %s29, 0
      %s32 = sadd.s32 %s31, 1
      %s33 = scalar_select %p30, %s31, %s32
      %p36 = pneg %p30
      %p37 = scmp.eq.s32.totalorder %s21, 1
      %p38 = por %p36, %p37
      %p39 = scmp.ne.s32.totalorder %s31, %s34
      %p40 = scmp.eq.s32.totalorder %s21, 0
      %p41 = por %p39, %p40
      %p42 = scmp.ne.s32.totalorder %s31, %s34
      %p43 = scmp.eq.s32.totalorder %s26, 1
      %p44 = por %p42, %p43
      %p45 = scmp.ne.s32.totalorder %s34, %s35
      %p46 = scmp.eq.s32.totalorder %s26, 0
      %p47 = por %p45, %p46
      %p48 = scmp.ne.s32.totalorder %s34, %s35
      %p49 = scmp.eq.s32.totalorder %s27, 1
      %p50 = por %p48, %p49
      %p52 = scmp.ne.s32.totalorder %s35, %s51
      %p53 = scmp.eq.s32.totalorder %s27, 0
      %p54 = por %p52, %p53
      %s56 = sadd.s32 %s55, 1
      %p59 = scmp.eq.s32.totalorder %s21, 1
      %p60 = scmp.ne.s32.totalorder %s55, %s57
      %p61 = scmp.eq.s32.totalorder %s21, 0
      %p62 = por %p60, %p61
      %p63 = scmp.ne.s32.totalorder %s55, %s57
      %p64 = scmp.eq.s32.totalorder %s26, 1
      %p65 = por %p63, %p64
      %p66 = scmp.ne.s32.totalorder %s57, %s58
      %p67 = scmp.eq.s32.totalorder %s26, 0
      %p68 = por %p66, %p67
      %p69 = scmp.ne.s32.totalorder %s57, %s58
      %p70 = scmp.eq.s32.totalorder %s27, 1
      %p71 = por %p69, %p70
      %p73 = scmp.ne.s32.totalorder %s58, %s72
      %p74 = scmp.eq.s32.totalorder %s27, 0
      %p75 = por %p73, %p74
      %s77 = sadd.s32 %s76, 1
      %p80 = scmp.eq.s32.totalorder %s21, 1
      %p81 = scmp.ne.s32.totalorder %s76, %s78
      %p82 = scmp.eq.s32.totalorder %s21, 0
      %p83 = por %p81, %p82
      %p84 = scmp.ne.s32.totalorder %s76, %s78
      %p85 = scmp.eq.s32.totalorder %s26, 1
      %p86 = por %p84, %p85
      %p87 = scmp.ne.s32.totalorder %s78, %s79
      %p88 = scmp.eq.s32.totalorder %s26, 0
      %p89 = por %p87, %p88
      %p90 = scmp.ne.s32.totalorder %s78, %s79
      %p91 = scmp.eq.s32.totalorder %s27, 1
      %p92 = por %p90, %p91
      %p94 = scmp.ne.s32.totalorder %s79, %s93
      %p95 = scmp.eq.s32.totalorder %s27, 0
      %p96 = por %p94, %p95
      %s98 = sadd.s32 %s97, 1
      %p101 = scmp.eq.s32.totalorder %s21, 1
      %p102 = scmp.ne.s32.totalorder %s97, %s99
      %p103 = scmp.eq.s32.totalorder %s21, 0
      %p104 = por %p102, %p103
      %p105 = scmp.ne.s32.totalorder %s97, %s99
      %p106 = scmp.eq.s32.totalorder %s26, 1
      %p107 = por %p105, %p106
      %p108 = scmp.ne.s32.totalorder %s99, %s100
      %p109 = scmp.eq.s32.totalorder %s26, 0
      %p110 = por %p108, %p109
      %p111 = scmp.ne.s32.totalorder %s99, %s100
      %p112 = scmp.eq.s32.totalorder %s27, 1
      %p113 = por %p111, %p112
      %p115 = scmp.ne.s32.totalorder %s100, %s114
      %p116 = scmp.eq.s32.totalorder %s27, 0
      %p117 = por %p115, %p116
      %s119 = sadd.s32 %s118, 1
      %p122 = scmp.eq.s32.totalorder %s21, 1
      %p123 = scmp.ne.s32.totalorder %s118, %s120
      %p124 = scmp.eq.s32.totalorder %s21, 0
      %p125 = por %p123, %p124
      %p126 = scmp.ne.s32.totalorder %s118, %s120
      %p127 = scmp.eq.s32.totalorder %s26, 1
      %p128 = por %p126, %p127
      %p129 = scmp.ne.s32.totalorder %s120, %s121
      %p130 = scmp.eq.s32.totalorder %s26, 0
      %p131 = por %p129, %p130
      %p132 = scmp.ne.s32.totalorder %s120, %s121
      %p133 = scmp.eq.s32.totalorder %s27, 1
      %p134 = por %p132, %p133
      %p136 = scmp.ne.s32.totalorder %s121, %s135
      %p137 = scmp.eq.s32.totalorder %s27, 0
      %p138 = por %p136, %p137
      %s140 = sadd.s32 %s139, 1
      %p143 = scmp.eq.s32.totalorder %s21, 1
      %p144 = scmp.ne.s32.totalorder %s139, %s141
      %p145 = scmp.eq.s32.totalorder %s21, 0
      %p146 = por %p144, %p145
      %p147 = scmp.ne.s32.totalorder %s139, %s141
      %p148 = scmp.eq.s32.totalorder %s26, 1
      %p149 = por %p147, %p148
      %p150 = scmp.ne.s32.totalorder %s141, %s142
      %p151 = scmp.eq.s32.totalorder %s26, 0
      %p152 = por %p150, %p151
      %p153 = scmp.ne.s32.totalorder %s141, %s142
      %p154 = scmp.eq.s32.totalorder %s27, 1
      %p155 = por %p153, %p154
      %p157 = scmp.ne.s32.totalorder %s142, %s156
      %p158 = scmp.eq.s32.totalorder %s27, 0
      %p159 = por %p157, %p158
      %s161 = sadd.s32 %s160, 1
      %p164 = scmp.eq.s32.totalorder %s21, 1
      %p165 = scmp.ne.s32.totalorder %s160, %s162
      %p166 = scmp.eq.s32.totalorder %s21, 0
      %p167 = por %p165, %p166
      %p168 = scmp.ne.s32.totalorder %s160, %s162
      %p169 = scmp.eq.s32.totalorder %s26, 1
      %p170 = por %p168, %p169
      %p171 = scmp.ne.s32.totalorder %s162, %s163
      %p172 = scmp.eq.s32.totalorder %s26, 0
      %p173 = por %p171, %p172
      %p174 = scmp.ne.s32.totalorder %s162, %s163
      %p175 = scmp.eq.s32.totalorder %s27, 1
      %p176 = por %p174, %p175
      %p178 = scmp.ne.s32.totalorder %s163, %s177
      %p179 = scmp.eq.s32.totalorder %s27, 0
      %p180 = por %p178, %p179
      %s182 = sadd.s32 %s181, 1
      %p185 = scmp.eq.s32.totalorder %s21, 1
      %p186 = scmp.ne.s32.totalorder %s181, %s183
      %p187 = scmp.eq.s32.totalorder %s21, 0
      %p188 = por %p186, %p187
      %p189 = scmp.ne.s32.totalorder %s181, %s183
      %p190 = scmp.eq.s32.totalorder %s26, 1
      %p191 = por %p189, %p190
      %p192 = scmp.ne.s32.totalorder %s183, %s184
      %p193 = scmp.eq.s32.totalorder %s26, 0
      %p194 = por %p192, %p193
      %p195 = scmp.ne.s32.totalorder %s183, %s184
      %p196 = scmp.eq.s32.totalorder %s27, 1
      %p197 = por %p195, %p196
      %p199 = scmp.ne.s32.totalorder %s184, %s198
      %p200 = scmp.eq.s32.totalorder %s27, 0
      %p201 = por %p199, %p200
      %s203 = sadd.s32 %s202, 1
      %p206 = scmp.eq.s32.totalorder %s21, 1
      %p207 = scmp.ne.s32.totalorder %s202, %s204
      %p208 = scmp.eq.s32.totalorder %s21, 0
      %p209 = por %p207, %p208
      %p210 = scmp.ne.s32.totalorder %s202, %s204
      %p211 = scmp.eq.s32.totalorder %s26, 1
      %p212 = por %p210, %p211
      %p213 = scmp.ne.s32.totalorder %s204, %s205
      %p214 = scmp.eq.s32.totalorder %s26, 0
      %p215 = por %p213, %p214
      %p216 = scmp.ne.s32.totalorder %s204, %s205
      %p217 = scmp.eq.s32.totalorder %s27, 1
      %p218 = por %p216, %p217
      %p220 = scmp.ne.s32.totalorder %s205, %s219
      %p221 = scmp.eq.s32.totalorder %s27, 0
      %p222 = por %p220, %p221
      %s223 = ssub.s32 %s21, %s28
      %p224 = scmp.eq.s32.totalorder %s223, 0
      %s226 = sadd.s32 %s225, 1
      %s227 = scalar_select %p224, %s225, %s226
      %p230 = pneg %p224
      %p231 = scmp.eq.s32.totalorder %s21, 1
      %p232 = por %p230, %p231
      %p233 = scmp.ne.s32.totalorder %s225, %s228
      %p234 = scmp.eq.s32.totalorder %s21, 0
      %p235 = por %p233, %p234
      %p236 = scmp.ne.s32.totalorder %s225, %s228
      %p237 = scmp.eq.s32.totalorder %s26, 1
      %p238 = por %p236, %p237
      %p239 = scmp.ne.s32.totalorder %s228, %s229
      %p240 = scmp.eq.s32.totalorder %s26, 0
      %p241 = por %p239, %p240
      %p242 = scmp.ne.s32.totalorder %s228, %s229
      %p243 = scmp.eq.s32.totalorder %s27, 1
      %p244 = por %p242, %p243
      %p246 = scmp.ne.s32.totalorder %s229, %s245
      %p247 = scmp.eq.s32.totalorder %s27, 0
      %p248 = por %p246, %p247
      %s249 = ssub.s32 %s21, %s28
      %p250 = scmp.eq.s32.totalorder %s249, 0
      %s252 = sadd.s32 %s251, 1
      %s253 = scalar_select %p250, %s251, %s252
      %p256 = pneg %p250
      %p257 = scmp.eq.s32.totalorder %s21, 1
      %p258 = por %p256, %p257
      %p259 = scmp.ne.s32.totalorder %s251, %s254
      %p260 = scmp.eq.s32.totalorder %s21, 0
      %p261 = por %p259, %p260
      %p262 = scmp.ne.s32.totalorder %s251, %s254
      %p263 = scmp.eq.s32.totalorder %s26, 1
      %p264 = por %p262, %p263
      %p265 = scmp.ne.s32.totalorder %s254, %s255
      %p266 = scmp.eq.s32.totalorder %s26, 0
      %p267 = por %p265, %p266
      %p268 = scmp.ne.s32.totalorder %s254, %s255
      %p269 = scmp.eq.s32.totalorder %s27, 1
      %p270 = por %p268, %p269
      %p272 = scmp.ne.s32.totalorder %s255, %s271
      %p273 = scmp.eq.s32.totalorder %s27, 0
      %p274 = por %p272, %p273
      %s275 = ssub.s32 %s21, %s28
      %p276 = scmp.eq.s32.totalorder %s275, 0
      %s278 = sadd.s32 %s277, 1
      %s279 = scalar_select %p276, %s277, %s278
      %p282 = pneg %p276
      %p283 = scmp.eq.s32.totalorder %s21, 1
      %p284 = por %p282, %p283
      %p285 = scmp.ne.s32.totalorder %s277, %s280
      %p286 = scmp.eq.s32.totalorder %s21, 0
      %p287 = por %p285, %p286
      %p288 = scmp.ne.s32.totalorder %s277, %s280
      %p289 = scmp.eq.s32.totalorder %s26, 1
      %p290 = por %p288, %p289
      %p291 = scmp.ne.s32.totalorder %s280, %s281
      %p292 = scmp.eq.s32.totalorder %s26, 0
      %p293 = por %p291, %p292
      %p294 = scmp.ne.s32.totalorder %s280, %s281
      %p295 = scmp.eq.s32.totalorder %s27, 1
      %p296 = por %p294, %p295
      %p298 = scmp.ne.s32.totalorder %s281, %s297
      %p299 = scmp.eq.s32.totalorder %s27, 0
      %p300 = por %p298, %p299
      %p301 = scmp.le.s32.totalorder 1, %s21
      %p302 = scmp.lt.s32.totalorder %s21, 3
      %p303 = pnand %p301, %p302
      %p304 = pneg %p303
      // Predicated region
      $region9: #{decoder_block_forward.6} parent=5 // pred_check
        _
      $region10: #{decoder_block_forward.6} parent=5 // pred_check_branch
        %306 = sbr.rel (%p303) target = $region12
      $region11: #{decoder_block_forward.6} parent=5 // pred_region
        %s307 = ssub.s32 %s21, 1
        // Predicated region
        $region13: #{decoder_block_forward.6} parent=11 // pred_check
          %p308 = pneg %p68
        $region14: #{decoder_block_forward.6} parent=11 // pred_check_branch
          %310 = sbr.rel (%p308) target = $region16
        $region15: #{decoder_block_forward.6} parent=11 // pred_region
          _
        $region16: #{decoder_block_forward.6} parent=11 // pred_fallthru
          _
        // Predicated region
        $region17: #{decoder_block_forward.6} parent=11 // pred_check
          %p311 = pneg %p89
        $region18: #{decoder_block_forward.6} parent=11 // pred_check_branch
          %313 = sbr.rel (%p311) target = $region20
        $region19: #{decoder_block_forward.6} parent=11 // pred_region
          _
        $region20: #{decoder_block_forward.6} parent=11 // pred_fallthru
          _
        // Predicated region
        $region21: #{decoder_block_forward.6} parent=11 // pred_check
          %p314 = pneg %p110
        $region22: #{decoder_block_forward.6} parent=11 // pred_check_branch
          %316 = sbr.rel (%p314) target = $region24
        $region23: #{decoder_block_forward.6} parent=11 // pred_region
          _
        $region24: #{decoder_block_forward.6} parent=11 // pred_fallthru
          _
        // Predicated region
        $region25: #{decoder_block_forward.6} parent=11 // pred_check
          %p317 = pneg %p131
        $region26: #{decoder_block_forward.6} parent=11 // pred_check_branch
          %319 = sbr.rel (%p317) target = $region28
        $region27: #{decoder_block_forward.6} parent=11 // pred_region
          _
        $region28: #{decoder_block_forward.6} parent=11 // pred_fallthru
          _
        // Predicated region
        $region29: #{decoder_block_forward.6} parent=11 // pred_check
          %p320 = pneg %p152
        $region30: #{decoder_block_forward.6} parent=11 // pred_check_branch
          %322 = sbr.rel (%p320) target = $region32
        $region31: #{decoder_block_forward.6} parent=11 // pred_region
          _
        $region32: #{decoder_block_forward.6} parent=11 // pred_fallthru
          _
        // Predicated region
        $region33: #{decoder_block_forward.6} parent=11 // pred_check
          %p323 = pneg %p173
        $region34: #{decoder_block_forward.6} parent=11 // pred_check_branch
          %325 = sbr.rel (%p323) target = $region36
        $region35: #{decoder_block_forward.6} parent=11 // pred_region
          _
        $region36: #{decoder_block_forward.6} parent=11 // pred_fallthru
          _
        // Predicated region
        $region37: #{decoder_block_forward.6} parent=11 // pred_check
          %p326 = pneg %p194
        $region38: #{decoder_block_forward.6} parent=11 // pred_check_branch
          %328 = sbr.rel (%p326) target = $region40
        $region39: #{decoder_block_forward.6} parent=11 // pred_region
          _
        $region40: #{decoder_block_forward.6} parent=11 // pred_fallthru
          _
        // Predicated region
        $region41: #{decoder_block_forward.6} parent=11 // pred_check
          %p329 = pneg %p215
        $region42: #{decoder_block_forward.6} parent=11 // pred_check_branch
          %331 = sbr.rel (%p329) target = $region44
        $region43: #{decoder_block_forward.6} parent=11 // pred_region
          _
        $region44: #{decoder_block_forward.6} parent=11 // pred_fallthru
          _
      $region12: #{decoder_block_forward.6} parent=5 // pred_fallthru
        _
      %p332 = scmp.lt.s32.totalorder %s21, 2
      // Predicated region
      $region45: #{decoder_block_forward.6} parent=5 // pred_check
        %p333 = pneg %p332
      $region46: #{decoder_block_forward.6} parent=5 // pred_check_branch
        %335 = sbr.rel (%p333) target = $region48
      $region47: #{decoder_block_forward.6} parent=5 // pred_region
        // Predicated region
        $region49: #{decoder_block_forward.6} parent=47 // pred_check
          %p336 = pneg %p41
        $region50: #{decoder_block_forward.6} parent=47 // pred_check_branch
          %338 = sbr.rel (%p336) target = $region52
        $region51: #{decoder_block_forward.6} parent=47 // pred_region
          %s339 = sand.u32 %s31, 1
          %s340 = scalar_lea.sflag [#allocation3], %s339
          %s341 = sand.u32 %s31, 1
          %s342 = smul.addr %s341, 8
          %s343 = scalar_lea.vmem [#allocation2], %s342
          %s345 = ssub.s32 128, 128
          %346 = vsyncadd %s340, %s345
          %s347 = smul.addr %s21, 128
          %s348 = scalar_lea.hbm %s0, %s347
          %s350 = sshll.u32 %s343, 4
          %s351 = int_to_ptr.vmem [resolvable:$true] %s350
          %353 = dma.hbm_to_vmem [thread:$0]  %s348, 128, %s351, %s340
        $region52: #{decoder_block_forward.6} parent=47 // pred_fallthru
          _
      $region48: #{decoder_block_forward.6} parent=5 // pred_fallthru
        _
      %p354 = scmp.le.s32.totalorder 1, %s21
      %p355 = scmp.lt.s32.totalorder %s21, 3
      %p356 = pnand %p354, %p355
      %p357 = pneg %p356
      // Predicated region
      $region53: #{decoder_block_forward.6} parent=5 // pred_check
        _
      $region54: #{decoder_block_forward.6} parent=5 // pred_check_branch
        %359 = sbr.rel (%p356) target = $region56
      $region55: #{decoder_block_forward.6} parent=5 // pred_region
        %s360 = ssub.s32 %s21, 1
        %s361 = sand.u32 %s34, 1
        %s362 = scalar_lea.sflag [#allocation3], %s361
        %s363 = sand.u32 %s34, 1
        %s364 = smul.addr %s363, 8
        %s365 = scalar_lea.vmem [#allocation2], %s364
        // Predicated region
        $region57: #{decoder_block_forward.6} parent=55 // pred_check
          %p366 = pneg %p47
        $region58: #{decoder_block_forward.6} parent=55 // pred_check_branch
          %368 = sbr.rel (%p366) target = $region60
        $region59: #{decoder_block_forward.6} parent=55 // pred_region
          %369 = dma.done %s362, 128
        $region60: #{decoder_block_forward.6} parent=55 // pred_fallthru
          _
        %s370 = sand.u32 %s34, 1
        %s371 = scalar_lea.sflag [#allocation3], %s370
        %s372 = sand.u32 %s34, 1
        %s373 = smul.addr %s372, 8
        %s374 = scalar_lea.vmem [#allocation2], %s373
        %p375 = pneg %p47
        %p376 = pneg %p44
        %p377 = pneg %p68
        %p378 = pneg %p65
        %p379 = pneg %p89
        %p380 = pneg %p86
        %p381 = pneg %p110
        %p382 = pneg %p107
        %p383 = pneg %p131
        %p384 = pneg %p128
        %p385 = pneg %p152
        %p386 = pneg %p149
        %p387 = pneg %p173
        %p388 = pneg %p170
        %p389 = pneg %p194
        %p390 = pneg %p191
        %p391 = pneg %p215
        %p392 = pneg %p212
        %p393 = pneg %p241
        %p394 = pneg %p238
        %p395 = scmp.lt.s32.totalorder %s26, 1
        %s396 = scalar_select %p395, %s26, 1
        %s397 = smul.addr %s396, 8
        %s398 = scalar_lea.vmem %s9, %s397
        %p399 = pneg %p267
        %p400 = pneg %p264
        %p401 = scmp.lt.s32.totalorder %s26, 1
        %s402 = scalar_select %p401, %s26, 1
        %s403 = smul.addr %s402, 8
        %s404 = scalar_lea.vmem %s10, %s403
        %p405 = pneg %p293
        %p406 = pneg %p290
        %p407 = scmp.lt.s32.totalorder %s26, 1
        %s408 = scalar_select %p407, %s26, 1
        %s409 = smul.addr %s408, 8
        %s410 = scalar_lea.vmem %s11, %s409
        %p411 = scmp.lt.s32.totalorder %s26, 1
        %s412 = scalar_select %p411, %s26, 1
        %s413 = smul.addr %s412, 8
        %s414 = scalar_lea.vmem %s9, %s413
        %p415 = scmp.lt.s32.totalorder %s26, 1
        %s416 = scalar_select %p415, %s26, 1
        %s417 = smul.addr %s416, 8
        %s418 = scalar_lea.vmem %s10, %s417
        %p419 = scmp.lt.s32.totalorder %s26, 1
        %s420 = scalar_select %p419, %s26, 1
        %s421 = smul.addr %s420, 8
        %s422 = scalar_lea.vmem %s11, %s421
        %v423 = vld [vmem:[%s365] sm:$0xff]
        %v424 = vld [vmem:[%s1] sm:$0x1]
        %v425 = vld [vmem:[%s2] sm:$0x1]
        %vm426 = vcmask 261120
        %v427 = vsel %vm426, %v423, 0.0
        %428 = vadd.xlane.f32.xlu0 %v427
        %v429 = vpop.xlane.xlu0 %428
        %v430 = vrcp.pop 32.0
        %v431 = vmul.f32 %v429, %v430
        %v432 = vsub.f32 %v423, %v431
        %v433 = vmul.f32 %v432, %v432
        %v434 = vsel %vm426, %v433, 0.0
        %435 = vadd.xlane.f32.xlu0 %v434
        %v436 = vpop.xlane.xlu0 %435
        %v437 = vmul.f32 %v436, %v430
        %v438 = vadd.f32 %v437, 1e-05
        %v439 = vrsqrt.pop %v438
        %v440 = vmul.f32 %v432, %v439
        %v442 = vlaneseq
        %v443 = vshrl.u32 %v442, 7
        %v444 = vsub.s32 0, %v443
        %v445 = vrot.slane %v424, %v444
        %v447 = vmul.f32 %v440, %v445
        %v449 = vlaneseq
        %v450 = vshrl.u32 %v449, 7
        %v451 = vsub.s32 0, %v450
        %v452 = vrot.slane %v425, %v451
        %v454 = vadd.f32 %v447, %v452
        %455 = vst.msk [vmem:[%s414] sm:$0xff] %vm426, %v454
        %v456 = vld [vmem:[%s7] sm:$0xff]
        %v457 = vld [vmem:[%s8] sm:$0xff]
        %v458 = vld [vmem:[%s3] sm:$0xff]
        %v459 = vld [vmem:[%s3 + $0x8] sm:$0xff]
        %v460 = vld [vmem:[%s3 + $0x10] sm:$0xff]
        %v461 = vld [vmem:[%s3 + $0x18] sm:$0xff]
        %v462 = vld [vmem:[%s4] sm:$0x1]
        %v464 = vlaneseq
        %v465 = vshrl.u32 %v464, 7
        %v466 = vsub.s32 0, %v465
        %v467 = vrot.slane %v462, %v466
        %v470 = vsel %vm426, %v454, 0
        %472 = vmatprep.subr.mxu0 0.0
        %473 = vmatpush1.msra.mxu0 0.0
        %474 = vmatprep.subr.mxu0 0.0
        %475 = vmatpush1.msra.mxu0 0.0
        %476 = vmatprep.subr.mxu0 0.0
        %477 = vmatpush1.msra.mxu0 0.0
        %478 = vmatprep.subr.mxu0 0.0
        %479 = vmatpush1.msra.mxu0 0.0
        %480 = vmatprep.subr.mxu0 0.0
        %481 = vmatpush1.msra.mxu0 0.0
        %482 = vmatprep.subr.mxu0 0.0
        %483 = vmatpush1.msra.mxu0 0.0
        %484 = vmatprep.subr.mxu0 0.0
        %485 = vmatpush1.msra.mxu0 0.0
        %486 = vmatprep.subr.mxu0 0.0
        %487 = vmatpush1.msra.mxu0 0.0
        %488 = vmatprep.subr.mxu0 0.0
        %489 = vmatpush1.msra.mxu0 0.0
        %490 = vmatprep.subr.mxu0 0.0
        %491 = vmatpush1.msra.mxu0 0.0
        %492 = vmatprep.subr.mxu0 0.0
        %493 = vmatpush1.msra.mxu0 0.0
        %494 = vmatprep.subr.mxu0 0.0
        %495 = vmatpush1.msra.mxu0 0.0
        %496 = vmatprep.subr.mxu0 0.0
        %497 = vmatpush1.msra.mxu0 %v461
        %498 = vmatprep.subr.mxu0 0.0
        %499 = vmatpush1.msra.mxu0 %v460
        %500 = vmatprep.subr.mxu0 0.0
        %501 = vmatpush1.msra.mxu0 %v459
        %502 = vmatprep.subr.mxu0 0.0
        %503 = vmatpush1.msra.mxu0 %v458
        %504 = vmatprep.subr.mxu0 0.0
        %505 = vmatpush2.msra.mxu0 0.0
        %506 = vmatprep.subr.mxu0 0.0
        %507 = vmatpush2.msra.mxu0 0.0
        %508 = vmatprep.subr.mxu0 0.0
        %509 = vmatpush2.msra.mxu0 0.0
        %510 = vmatprep.subr.mxu0 0.0
        %511 = vmatpush2.msra.mxu0 0.0
        %512 = vmatprep.subr.mxu0 0.0
        %513 = vmatpush2.msra.mxu0 0.0
        %514 = vmatprep.subr.mxu0 0.0
        %515 = vmatpush2.msra.mxu0 0.0
        %516 = vmatprep.subr.mxu0 0.0
        %517 = vmatpush2.msra.mxu0 0.0
        %518 = vmatprep.subr.mxu0 0.0
        %519 = vmatpush2.msra.mxu0 0.0
        %520 = vmatprep.subr.mxu0 0.0
        %521 = vmatpush2.msra.mxu0 0.0
        %522 = vmatprep.subr.mxu0 0.0
        %523 = vmatpush2.msra.mxu0 0.0
        %524 = vmatprep.subr.mxu0 0.0
        %525 = vmatpush2.msra.mxu0 0.0
        %526 = vmatprep.subr.mxu0 0.0
        %527 = vmatpush2.msra.mxu0 0.0
        %528 = vmatprep.subr.mxu0 0.0
        %529 = vmatpush2.msra.mxu0 0.0
        %530 = vmatprep.subr.mxu0 0.0
        %531 = vmatpush2.msra.mxu0 0.0
        %532 = vmatprep.subr.mxu0 0.0
        %533 = vmatpush2.msra.mxu0 0.0
        %534 = vmatprep.subr.mxu0 0.0
        %535 = vmatpush2.msra.mxu0 0.0
        %536 = vmatprep.mubr.f32.mxu0 0.0
        %537 = vmatmul.mubr.f32.gmra.mxu0 %v470
        %v538 = vpop.f32.mrf.mxu0
        %v539 = vadd.f32 %v467, %v538
        %v540 = vpop.f32.mrf.mxu0
        %541 = vdwg.mxu0
        %v542 = vmul.f32 %v539, %v456
        %544 = vrot.lane.b32.xlu0 %v457, 16
        %v545 = vpop.permute.xlu0 %544
        %v547 = vmul.f32 %v539, %v545
        %549 = vrot.lane.b32.xlu0 %v547, 112
        %v550 = vpop.permute.xlu0 %549
        %v552 = vsub.f32 %v542, %v550
        %554 = vrot.lane.b32.xlu0 %v456, 16
        %v555 = vpop.permute.xlu0 %554
        %v557 = vmul.f32 %v539, %v555
        %v558 = vmul.f32 %v539, %v457
        %560 = vrot.lane.b32.xlu0 %v558, 16
        %v561 = vpop.permute.xlu0 %560
        %v563 = vadd.f32 %v557, %v561
        %vm564 = vcmask 130048
        %v565 = vsel %vm564, %v552, %v563
        %566 = vst.msk [vmem:[%s418] sm:$0xff] %vm426, %v565
        %v567 = vld [vmem:[%s5] sm:$0xff]
        %v568 = vld [vmem:[%s5 + $0x8] sm:$0xff]
        %v569 = vld [vmem:[%s5 + $0x10] sm:$0xff]
        %v570 = vld [vmem:[%s5 + $0x18] sm:$0xff]
        %v571 = vld [vmem:[%s6] sm:$0x1]
        %v573 = vlaneseq
        %v574 = vshrl.u32 %v573, 7
        %v575 = vsub.s32 0, %v574
        %v576 = vrot.slane %v571, %v575
        %578 = vmatprep.subr.mxu0 0.0
        %579 = vmatpush1.msra.mxu0 0.0
        %580 = vmatprep.subr.mxu0 0.0
        %581 = vmatpush1.msra.mxu0 0.0
        %582 = vmatprep.subr.mxu0 0.0
        %583 = vmatpush1.msra.mxu0 0.0
        %584 = vmatprep.subr.mxu0 0.0
        %585 = vmatpush1.msra.mxu0 0.0
        %586 = vmatprep.subr.mxu0 0.0
        %587 = vmatpush1.msra.mxu0 0.0
        %588 = vmatprep.subr.mxu0 0.0
        %589 = vmatpush1.msra.mxu0 0.0
        %590 = vmatprep.subr.mxu0 0.0
        %591 = vmatpush1.msra.mxu0 0.0
        %592 = vmatprep.subr.mxu0 0.0
        %593 = vmatpush1.msra.mxu0 0.0
        %594 = vmatprep.subr.mxu0 0.0
        %595 = vmatpush1.msra.mxu0 0.0
        %596 = vmatprep.subr.mxu0 0.0
        %597 = vmatpush1.msra.mxu0 0.0
        %598 = vmatprep.subr.mxu0 0.0
        %599 = vmatpush1.msra.mxu0 0.0
        %600 = vmatprep.subr.mxu0 0.0
        %601 = vmatpush1.msra.mxu0 0.0
        %602 = vmatprep.subr.mxu0 0.0
        %603 = vmatpush1.msra.mxu0 %v570
        %604 = vmatprep.subr.mxu0 0.0
        %605 = vmatpush1.msra.mxu0 %v569
        %606 = vmatprep.subr.mxu0 0.0
        %607 = vmatpush1.msra.mxu0 %v568
        %608 = vmatprep.subr.mxu0 0.0
        %609 = vmatpush1.msra.mxu0 %v567
        %610 = vmatprep.subr.mxu0 0.0
        %611 = vmatpush2.msra.mxu0 0.0
        %612 = vmatprep.subr.mxu0 0.0
        %613 = vmatpush2.msra.mxu0 0.0
        %614 = vmatprep.subr.mxu0 0.0
        %615 = vmatpush2.msra.mxu0 0.0
        %616 = vmatprep.subr.mxu0 0.0
        %617 = vmatpush2.msra.mxu0 0.0
        %618 = vmatprep.subr.mxu0 0.0
        %619 = vmatpush2.msra.mxu0 0.0
        %620 = vmatprep.subr.mxu0 0.0
        %621 = vmatpush2.msra.mxu0 0.0
        %622 = vmatprep.subr.mxu0 0.0
        %623 = vmatpush2.msra.mxu0 0.0
        %624 = vmatprep.subr.mxu0 0.0
        %625 = vmatpush2.msra.mxu0 0.0
        %626 = vmatprep.subr.mxu0 0.0
        %627 = vmatpush2.msra.mxu0 0.0
        %628 = vmatprep.subr.mxu0 0.0
        %629 = vmatpush2.msra.mxu0 0.0
        %630 = vmatprep.subr.mxu0 0.0
        %631 = vmatpush2.msra.mxu0 0.0
        %632 = vmatprep.subr.mxu0 0.0
        %633 = vmatpush2.msra.mxu0 0.0
        %634 = vmatprep.subr.mxu0 0.0
        %635 = vmatpush2.msra.mxu0 0.0
        %636 = vmatprep.subr.mxu0 0.0
        %637 = vmatpush2.msra.mxu0 0.0
        %638 = vmatprep.subr.mxu0 0.0
        %639 = vmatpush2.msra.mxu0 0.0
        %640 = vmatprep.subr.mxu0 0.0
        %641 = vmatpush2.msra.mxu0 0.0
        %642 = vmatprep.mubr.f32.mxu0 0.0
        %643 = vmatmul.mubr.f32.gmra.mxu0 %v470
        %v644 = vpop.f32.mrf.mxu0
        %v645 = vadd.f32 %v576, %v644
        %v646 = vpop.f32.mrf.mxu0
        %647 = vdwg.mxu0
        %v648 = vmul.f32 %v645, %v456
        %v649 = vmul.f32 %v645, %v545
        %651 = vrot.lane.b32.xlu0 %v649, 112
        %v652 = vpop.permute.xlu0 %651
        %v654 = vsub.f32 %v648, %v652
        %v655 = vmul.f32 %v645, %v555
        %v656 = vmul.f32 %v645, %v457
        %658 = vrot.lane.b32.xlu0 %v656, 16
        %v659 = vpop.permute.xlu0 %658
        %v661 = vadd.f32 %v655, %v659
        %v662 = vsel %vm564, %v654, %v661
        %663 = vst.msk [vmem:[%s422] sm:$0xff] %vm426, %v662
        %p664 = scmp.lt.s32.totalorder %s26, 1
        %s665 = scalar_select %p664, %s26, 1
        %s666 = smul.addr %s665, 8
        %s667 = scalar_lea.vmem %s9, %s666
        %p668 = scmp.lt.s32.totalorder %s26, 1
        %s669 = scalar_select %p668, %s26, 1
        %s670 = smul.addr %s669, 8
        %s671 = scalar_lea.vmem %s10, %s670
        %p672 = scmp.lt.s32.totalorder %s26, 1
        %s673 = scalar_select %p672, %s26, 1
        %s674 = smul.addr %s673, 8
        %s675 = scalar_lea.vmem %s11, %s674
        // Predicated region
        $region61: #{decoder_block_forward.6} parent=55 // pred_check
          %p676 = pneg %p238
        $region62: #{decoder_block_forward.6} parent=55 // pred_check_branch
          %678 = sbr.rel (%p676) target = $region64
        $region63: #{decoder_block_forward.6} parent=55 // pred_region
          _
        $region64: #{decoder_block_forward.6} parent=55 // pred_fallthru
          _
        // Predicated region
        $region65: #{decoder_block_forward.6} parent=55 // pred_check
          %p679 = pneg %p264
        $region66: #{decoder_block_forward.6} parent=55 // pred_check_branch
          %681 = sbr.rel (%p679) target = $region68
        $region67: #{decoder_block_forward.6} parent=55 // pred_region
          _
        $region68: #{decoder_block_forward.6} parent=55 // pred_fallthru
          _
        // Predicated region
        $region69: #{decoder_block_forward.6} parent=55 // pred_check
          %p682 = pneg %p290
        $region70: #{decoder_block_forward.6} parent=55 // pred_check_branch
          %684 = sbr.rel (%p682) target = $region72
        $region71: #{decoder_block_forward.6} parent=55 // pred_region
          _
        $region72: #{decoder_block_forward.6} parent=55 // pred_fallthru
          _
      $region56: #{decoder_block_forward.6} parent=5 // pred_fallthru
        _
      %p685 = scmp.le.s32.totalorder 2, %s21
      // Predicated region
      $region73: #{decoder_block_forward.6} parent=5 // pred_check
        %p686 = pneg %p685
      $region74: #{decoder_block_forward.6} parent=5 // pred_check_branch
        %688 = sbr.rel (%p686) target = $region76
      $region75: #{decoder_block_forward.6} parent=5 // pred_region
        %s689 = ssub.s32 %s21, 2
        // Predicated region
        $region77: #{decoder_block_forward.6} parent=75 // pred_check
          %p690 = pneg %p244
        $region78: #{decoder_block_forward.6} parent=75 // pred_check_branch
          %692 = sbr.rel (%p690) target = $region80
        $region79: #{decoder_block_forward.6} parent=75 // pred_region
          %p693 = scmp.lt.s32.totalorder %s27, 1
          %s694 = scalar_select %p693, %s27, 1
          %s695 = smul.addr %s694, 8
          %s696 = scalar_lea.vmem %s9, %s695
        $region80: #{decoder_block_forward.6} parent=75 // pred_fallthru
          _
        // Predicated region
        $region81: #{decoder_block_forward.6} parent=75 // pred_check
          %p697 = pneg %p270
        $region82: #{decoder_block_forward.6} parent=75 // pred_check_branch
          %699 = sbr.rel (%p697) target = $region84
        $region83: #{decoder_block_forward.6} parent=75 // pred_region
          %p700 = scmp.lt.s32.totalorder %s27, 1
          %s701 = scalar_select %p700, %s27, 1
          %s702 = smul.addr %s701, 8
          %s703 = scalar_lea.vmem %s10, %s702
        $region84: #{decoder_block_forward.6} parent=75 // pred_fallthru
          _
        // Predicated region
        $region85: #{decoder_block_forward.6} parent=75 // pred_check
          %p704 = pneg %p296
        $region86: #{decoder_block_forward.6} parent=75 // pred_check_branch
          %706 = sbr.rel (%p704) target = $region88
        $region87: #{decoder_block_forward.6} parent=75 // pred_region
          %p707 = scmp.lt.s32.totalorder %s27, 1
          %s708 = scalar_select %p707, %s27, 1
          %s709 = smul.addr %s708, 8
          %s710 = scalar_lea.vmem %s11, %s709
        $region88: #{decoder_block_forward.6} parent=75 // pred_fallthru
          _
      $region76: #{decoder_block_forward.6} parent=5 // pred_fallthru
        _
    $region6: #{decoder_block_forward.6} parent=1 // loop_footer
      %s25 = sadd.s32 1, %s21
    $region7: #{decoder_block_forward.6} parent=1 // loop_footer_branch
      %20 = sbr.rel target = $region3
    $region8: #{decoder_block_forward.6} parent=1 // loop_exit
      _
    %711 = vsyncpa [#allocation3], 1
    %s712 = scalar_lea.sflag [#allocation3], 1
    %713 = vsyncpa %s712, 1

// kernel: decoder_block_forward.7
$region0: #{decoder_block_forward.7}
  #allocation0 [shape = 'u32[]', space=smem, size = 0x4, offset = 0x4, fixed_abs, tag = 'smem constant byte address 0x4 - core index']
  #allocation1 [shape = 'u32[144,128]{1,0:T(1,128)}', space=vmem, size = 0x12000, scoped, tag = 'internal scratch']
  %s0 = inlined_call_operand.vmem [shape: f32[2,8,32], index: 0, kind: input, shape index: {}]
  %s1 = inlined_call_operand.vmem [shape: f32[2,8,32], index: 1, kind: input, shape index: {}]
  %s2 = inlined_call_operand.vmem [shape: f32[2,8,32], index: 2, kind: input, shape index: {}, may-alias: {2,5}]
  %s3 = inlined_call_operand.vmem [shape: f32[2,1,8], index: 3, kind: input, shape index: {}]
  %s4 = inlined_call_operand.vmem [shape: f32[8,8], index: 4, kind: input, shape index: {}]
  %s5 = inlined_call_operand.vmem [shape: f32[2,8,32], index: 5, kind: input, shape index: {}, may-alias: {2,5}]
  %s6 = inlined_call_operand.vmem [shape: f32[32,32], index: 6, kind: input, shape index: {}]
  %s7 = inlined_call_operand.vmem [shape: f32[1,32], index: 7, kind: input, shape index: {}]
  %s8 = inlined_call_operand.vmem [shape: f32[2,8,32], index: 8, kind: output, shape index: {}]
  %s9 = sld [smem:[#allocation0]]
  $region65: #{decoder_block_forward.7} parent=0
    _
  %s11 = ssub.s32 1, %s9
  %s12 = scalar_select 0, %s11, %s9
  loop: start=0, step=1, limit=4
  $region2: #{decoder_block_forward.7} parent=0 // loop_pre_header
    _
  $region3: #{decoder_block_forward.7} parent=0 // loop_header
    %s14 = sphi 0, %s18
    %p15 = scmp.ge.s32.totalorder %s14, 4
    %s24 = sphi 0, %s26
    %s27 = sphi 0, %s24
    %s28 = sphi 0, %s27
    %s44 = sphi 0, %s28
    %s50 = sphi 0, %s52
    %s53 = sphi 0, %s50
    %s54 = sphi 0, %s53
    %s70 = sphi 0, %s54
    %s76 = sphi 0, %s78
    %s79 = sphi 0, %s76
    %s80 = sphi 0, %s79
    %s96 = sphi 0, %s80
    %s102 = sphi 0, %s104
    %s105 = sphi 0, %s102
    %s106 = sphi 0, %s105
    %s122 = sphi 0, %s106
    %s126 = sphi 0, %s126
    %s128 = sphi 0, %s126
    %s129 = sphi 0, %s128
    %s143 = sphi 0, %s129
    %s149 = sphi 0, %s151
    %s152 = sphi 0, %s149
    %s153 = sphi 0, %s152
    %s169 = sphi 0, %s153
    %s173 = sphi 0, %s173
    %s175 = sphi 0, %s173
    %s176 = sphi 0, %s175
    %s190 = sphi 0, %s176
    %s194 = sphi 0, %s194
    %s196 = sphi 0, %s194
    %s197 = sphi 0, %s196
    %s211 = sphi 0, %s197
    %s217 = sphi 0, %s219
    %s220 = sphi 0, %s217
    %s221 = sphi 0, %s220
    %s237 = sphi 0, %s221
  $region4: #{decoder_block_forward.7} parent=0 // loop_header_branch
    %17 = sbr.rel (%p15) target = $region8
  $region5: #{decoder_block_forward.7} parent=0 // loop_body
    %s19 = ssub.s32 %s14, 1
    %s20 = ssub.s32 %s14, 2
    %s21 = sadd.s32 %s14, 1
    %s22 = ssub.s32 %s14, %s21
    %p23 = scmp.eq.s32.totalorder %s22, 0
    %s25 = sadd.s32 %s24, 1
    %s26 = scalar_select %p23, %s24, %s25
    %p29 = pneg %p23
    %p30 = scmp.eq.s32.totalorder %s14, 1
    %p31 = por %p29, %p30
    %p32 = scmp.ne.s32.totalorder %s24, %s27
    %p33 = scmp.eq.s32.totalorder %s14, 0
    %p34 = por %p32, %p33
    %p35 = scmp.ne.s32.totalorder %s24, %s27
    %p36 = scmp.eq.s32.totalorder %s19, 1
    %p37 = por %p35, %p36
    %p38 = scmp.ne.s32.totalorder %s27, %s28
    %p39 = scmp.eq.s32.totalorder %s19, 0
    %p40 = por %p38, %p39
    %p41 = scmp.ne.s32.totalorder %s27, %s28
    %p42 = scmp.eq.s32.totalorder %s20, 1
    %p43 = por %p41, %p42
    %p45 = scmp.ne.s32.totalorder %s28, %s44
    %p46 = scmp.eq.s32.totalorder %s20, 0
    %p47 = por %p45, %p46
    %s48 = ssub.s32 %s14, %s21
    %p49 = scmp.eq.s32.totalorder %s48, 0
    %s51 = sadd.s32 %s50, 1
    %s52 = scalar_select %p49, %s50, %s51
    %p55 = pneg %p49
    %p56 = scmp.eq.s32.totalorder %s14, 1
    %p57 = por %p55, %p56
    %p58 = scmp.ne.s32.totalorder %s50, %s53
    %p59 = scmp.eq.s32.totalorder %s14, 0
    %p60 = por %p58, %p59
    %p61 = scmp.ne.s32.totalorder %s50, %s53
    %p62 = scmp.eq.s32.totalorder %s19, 1
    %p63 = por %p61, %p62
    %p64 = scmp.ne.s32.totalorder %s53, %s54
    %p65 = scmp.eq.s32.totalorder %s19, 0
    %p66 = por %p64, %p65
    %p67 = scmp.ne.s32.totalorder %s53, %s54
    %p68 = scmp.eq.s32.totalorder %s20, 1
    %p69 = por %p67, %p68
    %p71 = scmp.ne.s32.totalorder %s54, %s70
    %p72 = scmp.eq.s32.totalorder %s20, 0
    %p73 = por %p71, %p72
    %s74 = ssub.s32 %s14, %s21
    %p75 = scmp.eq.s32.totalorder %s74, 0
    %s77 = sadd.s32 %s76, 1
    %s78 = scalar_select %p75, %s76, %s77
    %p81 = pneg %p75
    %p82 = scmp.eq.s32.totalorder %s14, 1
    %p83 = por %p81, %p82
    %p84 = scmp.ne.s32.totalorder %s76, %s79
    %p85 = scmp.eq.s32.totalorder %s14, 0
    %p86 = por %p84, %p85
    %p87 = scmp.ne.s32.totalorder %s76, %s79
    %p88 = scmp.eq.s32.totalorder %s19, 1
    %p89 = por %p87, %p88
    %p90 = scmp.ne.s32.totalorder %s79, %s80
    %p91 = scmp.eq.s32.totalorder %s19, 0
    %p92 = por %p90, %p91
    %p93 = scmp.ne.s32.totalorder %s79, %s80
    %p94 = scmp.eq.s32.totalorder %s20, 1
    %p95 = por %p93, %p94
    %p97 = scmp.ne.s32.totalorder %s80, %s96
    %p98 = scmp.eq.s32.totalorder %s20, 0
    %p99 = por %p97, %p98
    %s100 = ssub.s32 %s14, %s21
    %p101 = scmp.eq.s32.totalorder %s100, 0
    %s103 = sadd.s32 %s102, 1
    %s104 = scalar_select %p101, %s102, %s103
    %p107 = pneg %p101
    %p108 = scmp.eq.s32.totalorder %s14, 1
    %p109 = por %p107, %p108
    %p110 = scmp.ne.s32.totalorder %s102, %s105
    %p111 = scmp.eq.s32.totalorder %s14, 0
    %p112 = por %p110, %p111
    %p113 = scmp.ne.s32.totalorder %s102, %s105
    %p114 = scmp.eq.s32.totalorder %s19, 1
    %p115 = por %p113, %p114
    %p116 = scmp.ne.s32.totalorder %s105, %s106
    %p117 = scmp.eq.s32.totalorder %s19, 0
    %p118 = por %p116, %p117
    %p119 = scmp.ne.s32.totalorder %s105, %s106
    %p120 = scmp.eq.s32.totalorder %s20, 1
    %p121 = por %p119, %p120
    %p123 = scmp.ne.s32.totalorder %s106, %s122
    %p124 = scmp.eq.s32.totalorder %s20, 0
    %p125 = por %p123, %p124
    %s127 = sadd.s32 %s126, 1
    %p130 = scmp.eq.s32.totalorder %s14, 1
    %p131 = scmp.ne.s32.totalorder %s126, %s128
    %p132 = scmp.eq.s32.totalorder %s14, 0
    %p133 = por %p131, %p132
    %p134 = scmp.ne.s32.totalorder %s126, %s128
    %p135 = scmp.eq.s32.totalorder %s19, 1
    %p136 = por %p134, %p135
    %p137 = scmp.ne.s32.totalorder %s128, %s129
    %p138 = scmp.eq.s32.totalorder %s19, 0
    %p139 = por %p137, %p138
    %p140 = scmp.ne.s32.totalorder %s128, %s129
    %p141 = scmp.eq.s32.totalorder %s20, 1
    %p142 = por %p140, %p141
    %p144 = scmp.ne.s32.totalorder %s129, %s143
    %p145 = scmp.eq.s32.totalorder %s20, 0
    %p146 = por %p144, %p145
    %s147 = ssub.s32 %s14, %s21
    %p148 = scmp.eq.s32.totalorder %s147, 0
    %s150 = sadd.s32 %s149, 1
    %s151 = scalar_select %p148, %s149, %s150
    %p154 = pneg %p148
    %p155 = scmp.eq.s32.totalorder %s14, 1
    %p156 = por %p154, %p155
    %p157 = scmp.ne.s32.totalorder %s149, %s152
    %p158 = scmp.eq.s32.totalorder %s14, 0
    %p159 = por %p157, %p158
    %p160 = scmp.ne.s32.totalorder %s149, %s152
    %p161 = scmp.eq.s32.totalorder %s19, 1
    %p162 = por %p160, %p161
    %p163 = scmp.ne.s32.totalorder %s152, %s153
    %p164 = scmp.eq.s32.totalorder %s19, 0
    %p165 = por %p163, %p164
    %p166 = scmp.ne.s32.totalorder %s152, %s153
    %p167 = scmp.eq.s32.totalorder %s20, 1
    %p168 = por %p166, %p167
    %p170 = scmp.ne.s32.totalorder %s153, %s169
    %p171 = scmp.eq.s32.totalorder %s20, 0
    %p172 = por %p170, %p171
    %s174 = sadd.s32 %s173, 1
    %p177 = scmp.eq.s32.totalorder %s14, 1
    %p178 = scmp.ne.s32.totalorder %s173, %s175
    %p179 = scmp.eq.s32.totalorder %s14, 0
    %p180 = por %p178, %p179
    %p181 = scmp.ne.s32.totalorder %s173, %s175
    %p182 = scmp.eq.s32.totalorder %s19, 1
    %p183 = por %p181, %p182
    %p184 = scmp.ne.s32.totalorder %s175, %s176
    %p185 = scmp.eq.s32.totalorder %s19, 0
    %p186 = por %p184, %p185
    %p187 = scmp.ne.s32.totalorder %s175, %s176
    %p188 = scmp.eq.s32.totalorder %s20, 1
    %p189 = por %p187, %p188
    %p191 = scmp.ne.s32.totalorder %s176, %s190
    %p192 = scmp.eq.s32.totalorder %s20, 0
    %p193 = por %p191, %p192
    %s195 = sadd.s32 %s194, 1
    %p198 = scmp.eq.s32.totalorder %s14, 1
    %p199 = scmp.ne.s32.totalorder %s194, %s196
    %p200 = scmp.eq.s32.totalorder %s14, 0
    %p201 = por %p199, %p200
    %p202 = scmp.ne.s32.totalorder %s194, %s196
    %p203 = scmp.eq.s32.totalorder %s19, 1
    %p204 = por %p202, %p203
    %p205 = scmp.ne.s32.totalorder %s196, %s197
    %p206 = scmp.eq.s32.totalorder %s19, 0
    %p207 = por %p205, %p206
    %p208 = scmp.ne.s32.totalorder %s196, %s197
    %p209 = scmp.eq.s32.totalorder %s20, 1
    %p210 = por %p208, %p209
    %p212 = scmp.ne.s32.totalorder %s197, %s211
    %p213 = scmp.eq.s32.totalorder %s20, 0
    %p214 = por %p212, %p213
    %s215 = ssub.s32 %s14, %s21
    %p216 = scmp.eq.s32.totalorder %s215, 0
    %s218 = sadd.s32 %s217, 1
    %s219 = scalar_select %p216, %s217, %s218
    %p222 = pneg %p216
    %p223 = scmp.eq.s32.totalorder %s14, 1
    %p224 = por %p222, %p223
    %p225 = scmp.ne.s32.totalorder %s217, %s220
    %p226 = scmp.eq.s32.totalorder %s14, 0
    %p227 = por %p225, %p226
    %p228 = scmp.ne.s32.totalorder %s217, %s220
    %p229 = scmp.eq.s32.totalorder %s19, 1
    %p230 = por %p228, %p229
    %p231 = scmp.ne.s32.totalorder %s220, %s221
    %p232 = scmp.eq.s32.totalorder %s19, 0
    %p233 = por %p231, %p232
    %p234 = scmp.ne.s32.totalorder %s220, %s221
    %p235 = scmp.eq.s32.totalorder %s20, 1
    %p236 = por %p234, %p235
    %p238 = scmp.ne.s32.totalorder %s221, %s237
    %p239 = scmp.eq.s32.totalorder %s20, 0
    %p240 = por %p238, %p239
    %p241 = scmp.le.s32.totalorder 1, %s14
    %p242 = scmp.lt.s32.totalorder %s14, 3
    %p243 = pnand %p241, %p242
    %p244 = pneg %p243
    // Predicated region
    $region9: #{decoder_block_forward.7} parent=5 // pred_check
      _
    $region10: #{decoder_block_forward.7} parent=5 // pred_check_branch
      %246 = sbr.rel (%p243) target = $region12
    $region11: #{decoder_block_forward.7} parent=5 // pred_region
      %s247 = ssub.s32 %s14, 1
      // Predicated region
      $region13: #{decoder_block_forward.7} parent=11 // pred_check
        %p248 = pneg %p139
      $region14: #{decoder_block_forward.7} parent=11 // pred_check_branch
        %250 = sbr.rel (%p248) target = $region16
      $region15: #{decoder_block_forward.7} parent=11 // pred_region
        _
      $region16: #{decoder_block_forward.7} parent=11 // pred_fallthru
        _
      // Predicated region
      $region17: #{decoder_block_forward.7} parent=11 // pred_check
        %p251 = pneg %p186
      $region18: #{decoder_block_forward.7} parent=11 // pred_check_branch
        %253 = sbr.rel (%p251) target = $region20
      $region19: #{decoder_block_forward.7} parent=11 // pred_region
        _
      $region20: #{decoder_block_forward.7} parent=11 // pred_fallthru
        _
      // Predicated region
      $region21: #{decoder_block_forward.7} parent=11 // pred_check
        %p254 = pneg %p207
      $region22: #{decoder_block_forward.7} parent=11 // pred_check_branch
        %256 = sbr.rel (%p254) target = $region24
      $region23: #{decoder_block_forward.7} parent=11 // pred_region
        _
      $region24: #{decoder_block_forward.7} parent=11 // pred_fallthru
        _
    $region12: #{decoder_block_forward.7} parent=5 // pred_fallthru
      _
    %p257 = scmp.lt.s32.totalorder %s14, 2
    // Predicated region
    $region25: #{decoder_block_forward.7} parent=5 // pred_check
      %p258 = pneg %p257
    $region26: #{decoder_block_forward.7} parent=5 // pred_check_branch
      %260 = sbr.rel (%p258) target = $region28
    $region27: #{decoder_block_forward.7} parent=5 // pred_region
      // Predicated region
      $region29: #{decoder_block_forward.7} parent=27 // pred_check
        %p261 = pneg %p34
      $region30: #{decoder_block_forward.7} parent=27 // pred_check_branch
        %263 = sbr.rel (%p261) target = $region32
      $region31: #{decoder_block_forward.7} parent=27 // pred_region
        %p264 = scmp.lt.s32.totalorder %s14, 1
        %s265 = scalar_select %p264, %s14, 1
        %s266 = smul.addr %s265, 8
        %s267 = scalar_lea.vmem %s0, %s266
      $region32: #{decoder_block_forward.7} parent=27 // pred_fallthru
        _
      // Predicated region
      $region33: #{decoder_block_forward.7} parent=27 // pred_check
        %p268 = pneg %p60
      $region34: #{decoder_block_forward.7} parent=27 // pred_check_branch
        %270 = sbr.rel (%p268) target = $region36
      $region35: #{decoder_block_forward.7} parent=27 // pred_region
        %p271 = scmp.lt.s32.totalorder %s14, 1
        %s272 = scalar_select %p271, %s14, 1
        %s273 = smul.addr %s272, 8
        %s274 = scalar_lea.vmem %s1, %s273
      $region36: #{decoder_block_forward.7} parent=27 // pred_fallthru
        _
      // Predicated region
      $region37: #{decoder_block_forward.7} parent=27 // pred_check
        %p275 = pneg %p86
      $region38: #{decoder_block_forward.7} parent=27 // pred_check_branch
        %277 = sbr.rel (%p275) target = $region40
      $region39: #{decoder_block_forward.7} parent=27 // pred_region
        %p278 = scmp.lt.s32.totalorder %s14, 1
        %s279 = scalar_select %p278, %s14, 1
        %s280 = smul.addr %s279, 8
        %s281 = scalar_lea.vmem %s2, %s280
      $region40: #{decoder_block_forward.7} parent=27 // pred_fallthru
        _
      // Predicated region
      $region41: #{decoder_block_forward.7} parent=27 // pred_check
        %p282 = pneg %p112
      $region42: #{decoder_block_forward.7} parent=27 // pred_check_branch
        %284 = sbr.rel (%p282) target = $region44
      $region43: #{decoder_block_forward.7} parent=27 // pred_region
        %p285 = scmp.lt.s32.totalorder %s14, 1
        %s286 = scalar_select %p285, %s14, 1
        %s287 = scalar_lea.vmem %s3, %s286
      $region44: #{decoder_block_forward.7} parent=27 // pred_fallthru
        _
      // Predicated region
      $region45: #{decoder_block_forward.7} parent=27 // pred_check
        %p288 = pneg %p159
      $region46: #{decoder_block_forward.7} parent=27 // pred_check_branch
        %290 = sbr.rel (%p288) target = $region48
      $region47: #{decoder_block_forward.7} parent=27 // pred_region
        %p291 = scmp.lt.s32.totalorder %s14, 1
        %s292 = scalar_select %p291, %s14, 1
        %s293 = smul.addr %s292, 8
        %s294 = scalar_lea.vmem %s5, %s293
      $region48: #{decoder_block_forward.7} parent=27 // pred_fallthru
        _
    $region28: #{decoder_block_forward.7} parent=5 // pred_fallthru
      _
    %p295 = scmp.le.s32.totalorder 1, %s14
    %p296 = scmp.lt.s32.totalorder %s14, 3
    %p297 = pnand %p295, %p296
    %p298 = pneg %p297
    // Predicated region
    $region49: #{decoder_block_forward.7} parent=5 // pred_check
      _
    $region50: #{decoder_block_forward.7} parent=5 // pred_check_branch
      %300 = sbr.rel (%p297) target = $region52
    $region51: #{decoder_block_forward.7} parent=5 // pred_region
      %s301 = ssub.s32 %s14, 1
      %p302 = scmp.lt.s32.totalorder %s19, 1
      %s303 = scalar_select %p302, %s19, 1
      %s304 = smul.addr %s303, 8
      %s305 = scalar_lea.vmem %s0, %s304
      %p306 = pneg %p40
      %p307 = pneg %p37
      %p308 = scmp.lt.s32.totalorder %s19, 1
      %s309 = scalar_select %p308, %s19, 1
      %s310 = smul.addr %s309, 8
      %s311 = scalar_lea.vmem %s1, %s310
      %p312 = pneg %p66
      %p313 = pneg %p63
      %p314 = scmp.lt.s32.totalorder %s19, 1
      %s315 = scalar_select %p314, %s19, 1
      %s316 = smul.addr %s315, 8
      %s317 = scalar_lea.vmem %s2, %s316
      %p318 = pneg %p92
      %p319 = pneg %p89
      %p320 = scmp.lt.s32.totalorder %s19, 1
      %s321 = scalar_select %p320, %s19, 1
      %s322 = scalar_lea.vmem %s3, %s321
      %p323 = pneg %p118
      %p324 = pneg %p115
      %p325 = pneg %p139
      %p326 = pneg %p136
      %p327 = scmp.lt.s32.totalorder %s19, 1
      %s328 = scalar_select %p327, %s19, 1
      %s329 = smul.addr %s328, 8
      %s330 = scalar_lea.vmem %s5, %s329
      %p331 = pneg %p165
      %p332 = pneg %p162
      %p333 = pneg %p186
      %p334 = pneg %p183
      %p335 = pneg %p207
      %p336 = pneg %p204
      %p337 = pneg %p233
      %p338 = pneg %p230
      %p339 = scmp.lt.s32.totalorder %s19, 1
      %s340 = scalar_select %p339, %s19, 1
      %s341 = smul.addr %s340, 8
      %s342 = scalar_lea.vmem %s8, %s341
      %p343 = scmp.lt.s32.totalorder %s19, 1
      %s344 = scalar_select %p343, %s19, 1
      %s345 = smul.addr %s344, 8
      %s346 = scalar_lea.vmem %s0, %s345
      %p347 = scmp.lt.s32.totalorder %s19, 1
      %s348 = scalar_select %p347, %s19, 1
      %s349 = smul.addr %s348, 8
      %s350 = scalar_lea.vmem %s1, %s349
      %p351 = scmp.lt.s32.totalorder %s19, 1
      %s352 = scalar_select %p351, %s19, 1
      %s353 = smul.addr %s352, 8
      %s354 = scalar_lea.vmem %s2, %s353
      %p355 = scmp.lt.s32.totalorder %s19, 1
      %s356 = scalar_select %p355, %s19, 1
      %s357 = scalar_lea.vmem %s3, %s356
      %p358 = scmp.lt.s32.totalorder %s19, 1
      %s359 = scalar_select %p358, %s19, 1
      %s360 = smul.addr %s359, 8
      %s361 = scalar_lea.vmem %s5, %s360
      %p362 = scmp.lt.s32.totalorder %s19, 1
      %s363 = scalar_select %p362, %s19, 1
      %s364 = smul.addr %s363, 8
      %s365 = scalar_lea.vmem %s8, %s364
      %v366 = vld [vmem:[%s346] sm:$0xff]
      %v367 = vmul.f32 %v366, 0.35355338
      %v368 = vld [vmem:[%s350] sm:$0xff]
      %v369 = vld [vmem:[%s354] sm:$0xff]
      %v370 = vld [vmem:[%s357] sm:$0x1]
      %v372 = vlaneseq
      %v373 = vshrl.u32 %v372, 7
      %v374 = vsub.s32 0, %v373
      %v375 = vrot.slane %v370, %v374
      %v377 = vld [vmem:[%s4] sm:$0xff]
      %v378 = vadd.f32 %v375, %v377
      %vm379 = vcmask 64512
      %v381 = vsel %vm379, %v367, 0
      %v384 = vsel %vm379, %v368, 0
      %386 = vmatprep.subr.mxu0 0.0
      %387 = vmatpush1.xpose.msra.mxu0 0.0
      %388 = vmatprep.subr.mxu0 0.0
      %389 = vmatpush1.xpose.msra.mxu0 0.0
      %390 = vmatprep.subr.mxu0 0.0
      %391 = vmatpush1.xpose.msra.mxu0 0.0
      %392 = vmatprep.subr.mxu0 0.0
      %393 = vmatpush1.xpose.msra.mxu0 0.0
      %394 = vmatprep.subr.mxu0 0.0
      %395 = vmatpush1.xpose.msra.mxu0 0.0
      %396 = vmatprep.subr.mxu0 0.0
      %397 = vmatpush1.xpose.msra.mxu0 0.0
      %398 = vmatprep.subr.mxu0 0.0
      %399 = vmatpush1.xpose.msra.mxu0 0.0
      %400 = vmatprep.subr.mxu0 0.0
      %401 = vmatpush1.xpose.msra.mxu0 0.0
      %402 = vmatprep.subr.mxu0 0.0
      %403 = vmatpush1.xpose.msra.mxu0 0.0
      %404 = vmatprep.subr.mxu0 0.0
      %405 = vmatpush1.xpose.msra.mxu0 0.0
      %406 = vmatprep.subr.mxu0 0.0
      %407 = vmatpush1.xpose.msra.mxu0 0.0
      %408 = vmatprep.subr.mxu0 0.0
      %409 = vmatpush1.xpose.msra.mxu0 0.0
      %410 = vmatprep.subr.mxu0 0.0
      %411 = vmatpush1.xpose.msra.mxu0 0.0
      %412 = vmatprep.subr.mxu0 0.0
      %413 = vmatpush1.xpose.msra.mxu0 0.0
      %414 = vmatprep.subr.mxu0 0.0
      %415 = vmatpush1.xpose.msra.mxu0 0.0
      %416 = vmatprep.subr.mxu0 0.0
      %417 = vmatpush1.xpose.msra.mxu0 %v384
      %418 = vmatprep.subr.mxu0 0.0
      %419 = vmatpush2.xpose.msra.mxu0 0.0
      %420 = vmatprep.subr.mxu0 0.0
      %421 = vmatpush2.xpose.msra.mxu0 0.0
      %422 = vmatprep.subr.mxu0 0.0
      %423 = vmatpush2.xpose.msra.mxu0 0.0
      %424 = vmatprep.subr.mxu0 0.0
      %425 = vmatpush2.xpose.msra.mxu0 0.0
      %426 = vmatprep.subr.mxu0 0.0
      %427 = vmatpush2.xpose.msra.mxu0 0.0
      %428 = vmatprep.subr.mxu0 0.0
      %429 = vmatpush2.xpose.msra.mxu0 0.0
      %430 = vmatprep.subr.mxu0 0.0
      %431 = vmatpush2.xpose.msra.mxu0 0.0
      %432 = vmatprep.subr.mxu0 0.0
      %433 = vmatpush2.xpose.msra.mxu0 0.0
      %434 = vmatprep.subr.mxu0 0.0
      %435 = vmatpush2.xpose.msra.mxu0 0.0
      %436 = vmatprep.subr.mxu0 0.0
      %437 = vmatpush2.xpose.msra.mxu0 0.0
      %438 = vmatprep.subr.mxu0 0.0
      %439 = vmatpush2.xpose.msra.mxu0 0.0
      %440 = vmatprep.subr.mxu0 0.0
      %441 = vmatpush2.xpose.msra.mxu0 0.0
      %442 = vmatprep.subr.mxu0 0.0
      %443 = vmatpush2.xpose.msra.mxu0 0.0
      %444 = vmatprep.subr.mxu0 0.0
      %445 = vmatpush2.xpose.msra.mxu0 0.0
      %446 = vmatprep.subr.mxu0 0.0
      %447 = vmatpush2.xpose.msra.mxu0 0.0
      %448 = vmatprep.subr.mxu0 0.0
      %449 = vmatpush2.xpose.msra.mxu0 0.0
      %450 = vmatprep.mubr.f32.mxu0 0.0
      %451 = vmatmul.mubr.f32.gmra.mxu0 %v381
      %v452 = vpop.f32.mrf.mxu0
      %v453 = vadd.f32 %v378, %v452
      %v454 = vpop.f32.mrf.mxu0
      %455 = vdwg.mxu0
      %v456 = vsel %vm379, %v453, -inf
      %457 = vmax.xlane.f32.xlu0 %v456
      %v458 = vpop.xlane.xlu0 %457
      %v459 = vsub.f32 %v453, %v458
      %v460 = vmul.f32 %v459, 1.442695
      %v461 = vpow.pop %v460
      %v462 = vsel %vm379, %v461, 0.0
      %463 = vadd.xlane.f32.xlu0 %v462
      %v464 = vpop.xlane.xlu0 %463
      %v465 = vrcp.pop %v464
      %v466 = vmul.f32 %v461, %v465
      %v468 = vsel %vm379, %v466, 0
      %470 = vmatprep.subr.mxu0 0.0
      %471 = vmatpush1.msra.mxu0 0.0
      %472 = vmatprep.subr.mxu0 0.0
      %473 = vmatpush1.msra.mxu0 0.0
      %474 = vmatprep.subr.mxu0 0.0
      %475 = vmatpush1.msra.mxu0 0.0
      %476 = vmatprep.subr.mxu0 0.0
      %477 = vmatpush1.msra.mxu0 0.0
      %478 = vmatprep.subr.mxu0 0.0
      %479 = vmatpush1.msra.mxu0 0.0
      %480 = vmatprep.subr.mxu0 0.0
      %481 = vmatpush1.msra.mxu0 0.0
      %482 = vmatprep.subr.mxu0 0.0
      %483 = vmatpush1.msra.mxu0 0.0
      %484 = vmatprep.subr.mxu0 0.0
      %485 = vmatpush1.msra.mxu0 0.0
      %486 = vmatprep.subr.mxu0 0.0
      %487 = vmatpush1.msra.mxu0 0.0
      %488 = vmatprep.subr.mxu0 0.0
      %489 = vmatpush1.msra.mxu0 0.0
      %490 = vmatprep.subr.mxu0 0.0
      %491 = vmatpush1.msra.mxu0 0.0
      %492 = vmatprep.subr.mxu0 0.0
      %493 = vmatpush1.msra.mxu0 0.0
      %494 = vmatprep.subr.mxu0 0.0
      %495 = vmatpush1.msra.mxu0 0.0
      %496 = vmatprep.subr.mxu0 0.0
      %497 = vmatpush1.msra.mxu0 0.0
      %498 = vmatprep.subr.mxu0 0.0
      %499 = vmatpush1.msra.mxu0 0.0
      %500 = vmatprep.subr.mxu0 0.0
      %501 = vmatpush1.msra.mxu0 %v369
      %502 = vmatprep.subr.mxu0 0.0
      %503 = vmatpush2.msra.mxu0 0.0
      %504 = vmatprep.subr.mxu0 0.0
      %505 = vmatpush2.msra.mxu0 0.0
      %506 = vmatprep.subr.mxu0 0.0
      %507 = vmatpush2.msra.mxu0 0.0
      %508 = vmatprep.subr.mxu0 0.0
      %509 = vmatpush2.msra.mxu0 0.0
      %510 = vmatprep.subr.mxu0 0.0
      %511 = vmatpush2.msra.mxu0 0.0
      %512 = vmatprep.subr.mxu0 0.0
      %513 = vmatpush2.msra.mxu0 0.0
      %514 = vmatprep.subr.mxu0 0.0
      %515 = vmatpush2.msra.mxu0 0.0
      %516 = vmatprep.subr.mxu0 0.0
      %517 = vmatpush2.msra.mxu0 0.0
      %518 = vmatprep.subr.mxu0 0.0
      %519 = vmatpush2.msra.mxu0 0.0
      %520 = vmatprep.subr.mxu0 0.0
      %521 = vmatpush2.msra.mxu0 0.0
      %522 = vmatprep.subr.mxu0 0.0
      %523 = vmatpush2.msra.mxu0 0.0
      %524 = vmatprep.subr.mxu0 0.0
      %525 = vmatpush2.msra.mxu0 0.0
      %526 = vmatprep.subr.mxu0 0.0
      %527 = vmatpush2.msra.mxu0 0.0
      %528 = vmatprep.subr.mxu0 0.0
      %529 = vmatpush2.msra.mxu0 0.0
      %530 = vmatprep.subr.mxu0 0.0
      %531 = vmatpush2.msra.mxu0 0.0
      %532 = vmatprep.subr.mxu0 0.0
      %533 = vmatpush2.msra.mxu0 0.0
      %534 = vmatprep.mubr.f32.mxu0 0.0
      %535 = vmatmul.mubr.f32.gmra.mxu0 %v468
      %v536 = vpop.f32.mrf.mxu0
      %v537 = vadd.f32 0.0, %v536
      %v538 = vpop.f32.mrf.mxu0
      %539 = vdwg.mxu0
      %540 = vrot.lane.b32.xlu0 %v367, 120
      %v541 = vpop.permute.xlu0 %540
      %542 = vrot.lane.b32.xlu0 %v368, 120
      %v543 = vpop.permute.xlu0 %542
      %v544 = vsel %vm379, %v541, 0
      %v546 = vsel %vm379, %v543, 0
      %548 = vmatprep.subr.mxu0 0.0
      %549 = vmatpush1.xpose.msra.mxu0 0.0
      %550 = vmatprep.subr.mxu0 0.0
      %551 = vmatpush1.xpose.msra.mxu0 0.0
      %552 = vmatprep.subr.mxu0 0.0
      %553 = vmatpush1.xpose.msra.mxu0 0.0
      %554 = vmatprep.subr.mxu0 0.0
      %555 = vmatpush1.xpose.msra.mxu0 0.0
      %556 = vmatprep.subr.mxu0 0.0
      %557 = vmatpush1.xpose.msra.mxu0 0.0
      %558 = vmatprep.subr.mxu0 0.0
      %559 = vmatpush1.xpose.msra.mxu0 0.0
      %560 = vmatprep.subr.mxu0 0.0
      %561 = vmatpush1.xpose.msra.mxu0 0.0
      %562 = vmatprep.subr.mxu0 0.0
      %563 = vmatpush1.xpose.msra.mxu0 0.0
      %564 = vmatprep.subr.mxu0 0.0
      %565 = vmatpush1.xpose.msra.mxu0 0.0
      %566 = vmatprep.subr.mxu0 0.0
      %567 = vmatpush1.xpose.msra.mxu0 0.0
      %568 = vmatprep.subr.mxu0 0.0
      %569 = vmatpush1.xpose.msra.mxu0 0.0
      %570 = vmatprep.subr.mxu0 0.0
      %571 = vmatpush1.xpose.msra.mxu0 0.0
      %572 = vmatprep.subr.mxu0 0.0
      %573 = vmatpush1.xpose.msra.mxu0 0.0
      %574 = vmatprep.subr.mxu0 0.0
      %575 = vmatpush1.xpose.msra.mxu0 0.0
      %576 = vmatprep.subr.mxu0 0.0
      %577 = vmatpush1.xpose.msra.mxu0 0.0
      %578 = vmatprep.subr.mxu0 0.0
      %579 = vmatpush1.xpose.msra.mxu0 %v546
      %580 = vmatprep.subr.mxu0 0.0
      %581 = vmatpush2.xpose.msra.mxu0 0.0
      %582 = vmatprep.subr.mxu0 0.0
      %583 = vmatpush2.xpose.msra.mxu0 0.0
      %584 = vmatprep.subr.mxu0 0.0
      %585 = vmatpush2.xpose.msra.mxu0 0.0
      %586 = vmatprep.subr.mxu0 0.0
      %587 = vmatpush2.xpose.msra.mxu0 0.0
      %588 = vmatprep.subr.mxu0 0.0
      %589 = vmatpush2.xpose.msra.mxu0 0.0
      %590 = vmatprep.subr.mxu0 0.0
      %591 = vmatpush2.xpose.msra.mxu0 0.0
      %592 = vmatprep.subr.mxu0 0.0
      %593 = vmatpush2.xpose.msra.mxu0 0.0
      %594 = vmatprep.subr.mxu0 0.0
      %595 = vmatpush2.xpose.msra.mxu0 0.0
      %596 = vmatprep.subr.mxu0 0.0
      %597 = vmatpush2.xpose.msra.mxu0 0.0
      %598 = vmatprep.subr.mxu0 0.0
      %599 = vmatpush2.xpose.msra.mxu0 0.0
      %600 = vmatprep.subr.mxu0 0.0
      %601 = vmatpush2.xpose.msra.mxu0 0.0
      %602 = vmatprep.subr.mxu0 0.0
      %603 = vmatpush2.xpose.msra.mxu0 0.0
      %604 = vmatprep.subr.mxu0 0.0
      %605 = vmatpush2.xpose.msra.mxu0 0.0
      %606 = vmatprep.subr.mxu0 0.0
      %607 = vmatpush2.xpose.msra.mxu0 0.0
      %608 = vmatprep.subr.mxu0 0.0
      %609 = vmatpush2.xpose.msra.mxu0 0.0
      %610 = vmatprep.subr.mxu0 0.0
      %611 = vmatpush2.xpose.msra.mxu0 0.0
      %612 = vmatprep.mubr.f32.mxu0 0.0
      %613 = vmatmul.mubr.f32.gmra.mxu0 %v544
      %v614 = vpop.f32.mrf.mxu0
      %v615 = vadd.f32 %v378, %v614
      %v616 = vpop.f32.mrf.mxu0
      %617 = vdwg.mxu0
      %v618 = vsel %vm379, %v615, -inf
      %619 = vmax.xlane.f32.xlu0 %v618
      %v620 = vpop.xlane.xlu0 %619
      %v621 = vsub.f32 %v615, %v620
      %v622 = vmul.f32 %v621, 1.442695
      %v623 = vpow.pop %v622
      %v624 = vsel %vm379, %v623, 0.0
      %625 = vadd.xlane.f32.xlu0 %v624
      %v626 = vpop.xlane.xlu0 %625
      %v627 = vrcp.pop %v626
      %v628 = vmul.f32 %v623, %v627
      %630 = vrot.lane.b32.xlu0 %v369, 120
      %v631 = vpop.permute.xlu0 %630
      %v634 = vsel %vm379, %v628, 0
      %636 = vmatprep.subr.mxu0 0.0
      %637 = vmatpush1.msra.mxu0 0.0
      %638 = vmatprep.subr.mxu0 0.0
      %639 = vmatpush1.msra.mxu0 0.0
      %640 = vmatprep.subr.mxu0 0.0
      %641 = vmatpush1.msra.mxu0 0.0
      %642 = vmatprep.subr.mxu0 0.0
      %643 = vmatpush1.msra.mxu0 0.0
      %644 = vmatprep.subr.mxu0 0.0
      %645 = vmatpush1.msra.mxu0 0.0
      %646 = vmatprep.subr.mxu0 0.0
      %647 = vmatpush1.msra.mxu0 0.0
      %648 = vmatprep.subr.mxu0 0.0
      %649 = vmatpush1.msra.mxu0 0.0
      %650 = vmatprep.subr.mxu0 0.0
      %651 = vmatpush1.msra.mxu0 0.0
      %652 = vmatprep.subr.mxu0 0.0
      %653 = vmatpush1.msra.mxu0 0.0
      %654 = vmatprep.subr.mxu0 0.0
      %655 = vmatpush1.msra.mxu0 0.0
      %656 = vmatprep.subr.mxu0 0.0
      %657 = vmatpush1.msra.mxu0 0.0
      %658 = vmatprep.subr.mxu0 0.0
      %659 = vmatpush1.msra.mxu0 0.0
      %660 = vmatprep.subr.mxu0 0.0
      %661 = vmatpush1.msra.mxu0 0.0
      %662 = vmatprep.subr.mxu0 0.0
      %663 = vmatpush1.msra.mxu0 0.0
      %664 = vmatprep.subr.mxu0 0.0
      %665 = vmatpush1.msra.mxu0 0.0
      %666 = vmatprep.subr.mxu0 0.0
      %667 = vmatpush1.msra.mxu0 %v631
      %668 = vmatprep.subr.mxu0 0.0
      %669 = vmatpush2.msra.mxu0 0.0
      %670 = vmatprep.subr.mxu0 0.0
      %671 = vmatpush2.msra.mxu0 0.0
      %672 = vmatprep.subr.mxu0 0.0
      %673 = vmatpush2.msra.mxu0 0.0
      %674 = vmatprep.subr.mxu0 0.0
      %675 = vmatpush2.msra.mxu0 0.0
      %676 = vmatprep.subr.mxu0 0.0
      %677 = vmatpush2.msra.mxu0 0.0
      %678 = vmatprep.subr.mxu0 0.0
      %679 = vmatpush2.msra.mxu0 0.0
      %680 = vmatprep.subr.mxu0 0.0
      %681 = vmatpush2.msra.mxu0 0.0
      %682 = vmatprep.subr.mxu0 0.0
      %683 = vmatpush2.msra.mxu0 0.0
      %684 = vmatprep.subr.mxu0 0.0
      %685 = vmatpush2.msra.mxu0 0.0
      %686 = vmatprep.subr.mxu0 0.0
      %687 = vmatpush2.msra.mxu0 0.0
      %688 = vmatprep.subr.mxu0 0.0
      %689 = vmatpush2.msra.mxu0 0.0
      %690 = vmatprep.subr.mxu0 0.0
      %691 = vmatpush2.msra.mxu0 0.0
      %692 = vmatprep.subr.mxu0 0.0
      %693 = vmatpush2.msra.mxu0 0.0
      %694 = vmatprep.subr.mxu0 0.0
      %695 = vmatpush2.msra.mxu0 0.0
      %696 = vmatprep.subr.mxu0 0.0
      %697 = vmatpush2.msra.mxu0 0.0
      %698 = vmatprep.subr.mxu0 0.0
      %699 = vmatpush2.msra.mxu0 0.0
      %700 = vmatprep.mubr.f32.mxu0 0.0
      %701 = vmatmul.mubr.f32.gmra.mxu0 %v634
      %v702 = vpop.f32.mrf.mxu0
      %v703 = vadd.f32 0.0, %v702
      %v704 = vpop.f32.mrf.mxu0
      %705 = vdwg.mxu0
      %706 = vrot.lane.b32.xlu0 %v367, 112
      %v707 = vpop.permute.xlu0 %706
      %708 = vrot.lane.b32.xlu0 %v368, 112
      %v709 = vpop.permute.xlu0 %708
      %v710 = vsel %vm379, %v707, 0
      %v712 = vsel %vm379, %v709, 0
      %714 = vmatprep.subr.mxu0 0.0
      %715 = vmatpush1.xpose.msra.mxu0 0.0
      %716 = vmatprep.subr.mxu0 0.0
      %717 = vmatpush1.xpose.msra.mxu0 0.0
      %718 = vmatprep.subr.mxu0 0.0
      %719 = vmatpush1.xpose.msra.mxu0 0.0
      %720 = vmatprep.subr.mxu0 0.0
      %721 = vmatpush1.xpose.msra.mxu0 0.0
      %722 = vmatprep.subr.mxu0 0.0
      %723 = vmatpush1.xpose.msra.mxu0 0.0
      %724 = vmatprep.subr.mxu0 0.0
      %725 = vmatpush1.xpose.msra.mxu0 0.0
      %726 = vmatprep.subr.mxu0 0.0
      %727 = vmatpush1.xpose.msra.mxu0 0.0
      %728 = vmatprep.subr.mxu0 0.0
      %729 = vmatpush1.xpose.msra.mxu0 0.0
      %730 = vmatprep.subr.mxu0 0.0
      %731 = vmatpush1.xpose.msra.mxu0 0.0
      %732 = vmatprep.subr.mxu0 0.0
      %733 = vmatpush1.xpose.msra.mxu0 0.0
      %734 = vmatprep.subr.mxu0 0.0
      %735 = vmatpush1.xpose.msra.mxu0 0.0
      %736 = vmatprep.subr.mxu0 0.0
      %737 = vmatpush1.xpose.msra.mxu0 0.0
      %738 = vmatprep.subr.mxu0 0.0
      %739 = vmatpush1.xpose.msra.mxu0 0.0
      %740 = vmatprep.subr.mxu0 0.0
      %741 = vmatpush1.xpose.msra.mxu0 0.0
      %742 = vmatprep.subr.mxu0 0.0
      %743 = vmatpush1.xpose.msra.mxu0 0.0
      %744 = vmatprep.subr.mxu0 0.0
      %745 = vmatpush1.xpose.msra.mxu0 %v712
      %746 = vmatprep.subr.mxu0 0.0
      %747 = vmatpush2.xpose.msra.mxu0 0.0
      %748 = vmatprep.subr.mxu0 0.0
      %749 = vmatpush2.xpose.msra.mxu0 0.0
      %750 = vmatprep.subr.mxu0 0.0
      %751 = vmatpush2.xpose.msra.mxu0 0.0
      %752 = vmatprep.subr.mxu0 0.0
      %753 = vmatpush2.xpose.msra.mxu0 0.0
      %754 = vmatprep.subr.mxu0 0.0
      %755 = vmatpush2.xpose.msra.mxu0 0.0
      %756 = vmatprep.subr.mxu0 0.0
      %757 = vmatpush2.xpose.msra.mxu0 0.0
      %758 = vmatprep.subr.mxu0 0.0
      %759 = vmatpush2.xpose.msra.mxu0 0.0
      %760 = vmatprep.subr.mxu0 0.0
      %761 = vmatpush2.xpose.msra.mxu0 0.0
      %762 = vmatprep.subr.mxu0 0.0
      %763 = vmatpush2.xpose.msra.mxu0 0.0
      %764 = vmatprep.subr.mxu0 0.0
      %765 = vmatpush2.xpose.msra.mxu0 0.0
      %766 = vmatprep.subr.mxu0 0.0
      %767 = vmatpush2.xpose.msra.mxu0 0.0
      %768 = vmatprep.subr.mxu0 0.0
      %769 = vmatpush2.xpose.msra.mxu0 0.0
      %770 = vmatprep.subr.mxu0 0.0
      %771 = vmatpush2.xpose.msra.mxu0 0.0
      %772 = vmatprep.subr.mxu0 0.0
      %773 = vmatpush2.xpose.msra.mxu0 0.0
      %774 = vmatprep.subr.mxu0 0.0
      %775 = vmatpush2.xpose.msra.mxu0 0.0
      %776 = vmatprep.subr.mxu0 0.0
      %777 = vmatpush2.xpose.msra.mxu0 0.0
      %778 = vmatprep.mubr.f32.mxu0 0.0
      %779 = vmatmul.mubr.f32.gmra.mxu0 %v710
      %v780 = vpop.f32.mrf.mxu0
      %v781 = vadd.f32 %v378, %v780
      %v782 = vpop.f32.mrf.mxu0
      %783 = vdwg.mxu0
      %v784 = vsel %vm379, %v781, -inf
      %785 = vmax.xlane.f32.xlu0 %v784
      %v786 = vpop.xlane.xlu0 %785
      %v787 = vsub.f32 %v781, %v786
      %v788 = vmul.f32 %v787, 1.442695
      %v789 = vpow.pop %v788
      %v790 = vsel %vm379, %v789, 0.0
      %791 = vadd.xlane.f32.xlu0 %v790
      %v792 = vpop.xlane.xlu0 %791
      %v793 = vrcp.pop %v792
      %v794 = vmul.f32 %v789, %v793
      %795 = vrot.lane.b32.xlu0 %v369, 112
      %v796 = vpop.permute.xlu0 %795
      %v799 = vsel %vm379, %v794, 0
      %801 = vmatprep.subr.mxu0 0.0
      %802 = vmatpush1.msra.mxu0 0.0
      %803 = vmatprep.subr.mxu0 0.0
      %804 = vmatpush1.msra.mxu0 0.0
      %805 = vmatprep.subr.mxu0 0.0
      %806 = vmatpush1.msra.mxu0 0.0
      %807 = vmatprep.subr.mxu0 0.0
      %808 = vmatpush1.msra.mxu0 0.0
      %809 = vmatprep.subr.mxu0 0.0
      %810 = vmatpush1.msra.mxu0 0.0
      %811 = vmatprep.subr.mxu0 0.0
      %812 = vmatpush1.msra.mxu0 0.0
      %813 = vmatprep.subr.mxu0 0.0
      %814 = vmatpush1.msra.mxu0 0.0
      %815 = vmatprep.subr.mxu0 0.0
      %816 = vmatpush1.msra.mxu0 0.0
      %817 = vmatprep.subr.mxu0 0.0
      %818 = vmatpush1.msra.mxu0 0.0
      %819 = vmatprep.subr.mxu0 0.0
      %820 = vmatpush1.msra.mxu0 0.0
      %821 = vmatprep.subr.mxu0 0.0
      %822 = vmatpush1.msra.mxu0 0.0
      %823 = vmatprep.subr.mxu0 0.0
      %824 = vmatpush1.msra.mxu0 0.0
      %825 = vmatprep.subr.mxu0 0.0
      %826 = vmatpush1.msra.mxu0 0.0
      %827 = vmatprep.subr.mxu0 0.0
      %828 = vmatpush1.msra.mxu0 0.0
      %829 = vmatprep.subr.mxu0 0.0
      %830 = vmatpush1.msra.mxu0 0.0
      %831 = vmatprep.subr.mxu0 0.0
      %832 = vmatpush1.msra.mxu0 %v796
      %833 = vmatprep.subr.mxu0 0.0
      %834 = vmatpush2.msra.mxu0 0.0
      %835 = vmatprep.subr.mxu0 0.0
      %836 = vmatpush2.msra.mxu0 0.0
      %837 = vmatprep.subr.mxu0 0.0
      %838 = vmatpush2.msra.mxu0 0.0
      %839 = vmatprep.subr.mxu0 0.0
      %840 = vmatpush2.msra.mxu0 0.0
      %841 = vmatprep.subr.mxu0 0.0
      %842 = vmatpush2.msra.mxu0 0.0
      %843 = vmatprep.subr.mxu0 0.0
      %844 = vmatpush2.msra.mxu0 0.0
      %845 = vmatprep.subr.mxu0 0.0
      %846 = vmatpush2.msra.mxu0 0.0
      %847 = vmatprep.subr.mxu0 0.0
      %848 = vmatpush2.msra.mxu0 0.0
      %849 = vmatprep.subr.mxu0 0.0
      %850 = vmatpush2.msra.mxu0 0.0
      %851 = vmatprep.subr.mxu0 0.0
      %852 = vmatpush2.msra.mxu0 0.0
      %853 = vmatprep.subr.mxu0 0.0
      %854 = vmatpush2.msra.mxu0 0.0
      %855 = vmatprep.subr.mxu0 0.0
      %856 = vmatpush2.msra.mxu0 0.0
      %857 = vmatprep.subr.mxu0 0.0
      %858 = vmatpush2.msra.mxu0 0.0
      %859 = vmatprep.subr.mxu0 0.0
      %860 = vmatpush2.msra.mxu0 0.0
      %861 = vmatprep.subr.mxu0 0.0
      %862 = vmatpush2.msra.mxu0 0.0
      %863 = vmatprep.subr.mxu0 0.0
      %864 = vmatpush2.msra.mxu0 0.0
      %865 = vmatprep.mubr.f32.mxu0 0.0
      %866 = vmatmul.mubr.f32.gmra.mxu0 %v799
      %v867 = vpop.f32.mrf.mxu0
      %v868 = vadd.f32 0.0, %v867
      %v869 = vpop.f32.mrf.mxu0
      %870 = vdwg.mxu0
      %871 = vrot.lane.b32.xlu0 %v367, 104
      %v872 = vpop.permute.xlu0 %871
      %873 = vrot.lane.b32.xlu0 %v368, 104
      %v874 = vpop.permute.xlu0 %873
      %v875 = vsel %vm379, %v872, 0
      %v877 = vsel %vm379, %v874, 0
      %879 = vmatprep.subr.mxu0 0.0
      %880 = vmatpush1.xpose.msra.mxu0 0.0
      %881 = vmatprep.subr.mxu0 0.0
      %882 = vmatpush1.xpose.msra.mxu0 0.0
      %883 = vmatprep.subr.mxu0 0.0
      %884 = vmatpush1.xpose.msra.mxu0 0.0
      %885 = vmatprep.subr.mxu0 0.0
      %886 = vmatpush1.xpose.msra.mxu0 0.0
      %887 = vmatprep.subr.mxu0 0.0
      %888 = vmatpush1.xpose.msra.mxu0 0.0
      %889 = vmatprep.subr.mxu0 0.0
      %890 = vmatpush1.xpose.msra.mxu0 0.0
      %891 = vmatprep.subr.mxu0 0.0
      %892 = vmatpush1.xpose.msra.mxu0 0.0
      %893 = vmatprep.subr.mxu0 0.0
      %894 = vmatpush1.xpose.msra.mxu0 0.0
      %895 = vmatprep.subr.mxu0 0.0
      %896 = vmatpush1.xpose.msra.mxu0 0.0
      %897 = vmatprep.subr.mxu0 0.0
      %898 = vmatpush1.xpose.msra.mxu0 0.0
      %899 = vmatprep.subr.mxu0 0.0
      %900 = vmatpush1.xpose.msra.mxu0 0.0
      %901 = vmatprep.subr.mxu0 0.0
      %902 = vmatpush1.xpose.msra.mxu0 0.0
      %903 = vmatprep.subr.mxu0 0.0
      %904 = vmatpush1.xpose.msra.mxu0 0.0
      %905 = vmatprep.subr.mxu0 0.0
      %906 = vmatpush1.xpose.msra.mxu0 0.0
      %907 = vmatprep.subr.mxu0 0.0
      %908 = vmatpush1.xpose.msra.mxu0 0.0
      %909 = vmatprep.subr.mxu0 0.0
      %910 = vmatpush1.xpose.msra.mxu0 %v877
      %911 = vmatprep.subr.mxu0 0.0
      %912 = vmatpush2.xpose.msra.mxu0 0.0
      %913 = vmatprep.subr.mxu0 0.0
      %914 = vmatpush2.xpose.msra.mxu0 0.0
      %915 = vmatprep.subr.mxu0 0.0
      %916 = vmatpush2.xpose.msra.mxu0 0.0
      %917 = vmatprep.subr.mxu0 0.0
      %918 = vmatpush2.xpose.msra.mxu0 0.0
      %919 = vmatprep.subr.mxu0 0.0
      %920 = vmatpush2.xpose.msra.mxu0 0.0
      %921 = vmatprep.subr.mxu0 0.0
      %922 = vmatpush2.xpose.msra.mxu0 0.0
      %923 = vmatprep.subr.mxu0 0.0
      %924 = vmatpush2.xpose.msra.mxu0 0.0
      %925 = vmatprep.subr.mxu0 0.0
      %926 = vmatpush2.xpose.msra.mxu0 0.0
      %927 = vmatprep.subr.mxu0 0.0
      %928 = vmatpush2.xpose.msra.mxu0 0.0
      %929 = vmatprep.subr.mxu0 0.0
      %930 = vmatpush2.xpose.msra.mxu0 0.0
      %931 = vmatprep.subr.mxu0 0.0
      %932 = vmatpush2.xpose.msra.mxu0 0.0
      %933 = vmatprep.subr.mxu0 0.0
      %934 = vmatpush2.xpose.msra.mxu0 0.0
      %935 = vmatprep.subr.mxu0 0.0
      %936 = vmatpush2.xpose.msra.mxu0 0.0
      %937 = vmatprep.subr.mxu0 0.0
      %938 = vmatpush2.xpose.msra.mxu0 0.0
      %939 = vmatprep.subr.mxu0 0.0
      %940 = vmatpush2.xpose.msra.mxu0 0.0
      %941 = vmatprep.subr.mxu0 0.0
      %942 = vmatpush2.xpose.msra.mxu0 0.0
      %943 = vmatprep.mubr.f32.mxu0 0.0
      %944 = vmatmul.mubr.f32.gmra.mxu0 %v875
      %v945 = vpop.f32.mrf.mxu0
      %v946 = vadd.f32 %v378, %v945
      %v947 = vpop.f32.mrf.mxu0
      %948 = vdwg.mxu0
      %v949 = vsel %vm379, %v946, -inf
      %950 = vmax.xlane.f32.xlu0 %v949
      %v951 = vpop.xlane.xlu0 %950
      %v952 = vsub.f32 %v946, %v951
      %v953 = vmul.f32 %v952, 1.442695
      %v954 = vpow.pop %v953
      %v955 = vsel %vm379, %v954, 0.0
      %956 = vadd.xlane.f32.xlu0 %v955
      %v957 = vpop.xlane.xlu0 %956
      %v958 = vrcp.pop %v957
      %v959 = vmul.f32 %v954, %v958
      %960 = vrot.lane.b32.xlu0 %v369, 104
      %v961 = vpop.permute.xlu0 %960
      %v964 = vsel %vm379, %v959, 0
      %966 = vmatprep.subr.mxu0 0.0
      %967 = vmatpush1.msra.mxu0 0.0
      %968 = vmatprep.subr.mxu0 0.0
      %969 = vmatpush1.msra.mxu0 0.0
      %970 = vmatprep.subr.mxu0 0.0
      %971 = vmatpush1.msra.mxu0 0.0
      %972 = vmatprep.subr.mxu0 0.0
      %973 = vmatpush1.msra.mxu0 0.0
      %974 = vmatprep.subr.mxu0 0.0
      %975 = vmatpush1.msra.mxu0 0.0
      %976 = vmatprep.subr.mxu0 0.0
      %977 = vmatpush1.msra.mxu0 0.0
      %978 = vmatprep.subr.mxu0 0.0
      %979 = vmatpush1.msra.mxu0 0.0
      %980 = vmatprep.subr.mxu0 0.0
      %981 = vmatpush1.msra.mxu0 0.0
      %982 = vmatprep.subr.mxu0 0.0
      %983 = vmatpush1.msra.mxu0 0.0
      %984 = vmatprep.subr.mxu0 0.0
      %985 = vmatpush1.msra.mxu0 0.0
      %986 = vmatprep.subr.mxu0 0.0
      %987 = vmatpush1.msra.mxu0 0.0
      %988 = vmatprep.subr.mxu0 0.0
      %989 = vmatpush1.msra.mxu0 0.0
      %990 = vmatprep.subr.mxu0 0.0
      %991 = vmatpush1.msra.mxu0 0.0
      %992 = vmatprep.subr.mxu0 0.0
      %993 = vmatpush1.msra.mxu0 0.0
      %994 = vmatprep.subr.mxu0 0.0
      %995 = vmatpush1.msra.mxu0 0.0
      %996 = vmatprep.subr.mxu0 0.0
      %997 = vmatpush1.msra.mxu0 %v961
      %998 = vmatprep.subr.mxu0 0.0
      %999 = vmatpush2.msra.mxu0 0.0
      %1000 = vmatprep.subr.mxu0 0.0
      %1001 = vmatpush2.msra.mxu0 0.0
      %1002 = vmatprep.subr.mxu0 0.0
      %1003 = vmatpush2.msra.mxu0 0.0
      %1004 = vmatprep.subr.mxu0 0.0
      %1005 = vmatpush2.msra.mxu0 0.0
      %1006 = vmatprep.subr.mxu0 0.0
      %1007 = vmatpush2.msra.mxu0 0.0
      %1008 = vmatprep.subr.mxu0 0.0
      %1009 = vmatpush2.msra.mxu0 0.0
      %1010 = vmatprep.subr.mxu0 0.0
      %1011 = vmatpush2.msra.mxu0 0.0
      %1012 = vmatprep.subr.mxu0 0.0
      %1013 = vmatpush2.msra.mxu0 0.0
      %1014 = vmatprep.subr.mxu0 0.0
      %1015 = vmatpush2.msra.mxu0 0.0
      %1016 = vmatprep.subr.mxu0 0.0
      %1017 = vmatpush2.msra.mxu0 0.0
      %1018 = vmatprep.subr.mxu0 0.0
      %1019 = vmatpush2.msra.mxu0 0.0
      %1020 = vmatprep.subr.mxu0 0.0
      %1021 = vmatpush2.msra.mxu0 0.0
      %1022 = vmatprep.subr.mxu0 0.0
      %1023 = vmatpush2.msra.mxu0 0.0
      %1024 = vmatprep.subr.mxu0 0.0
      %1025 = vmatpush2.msra.mxu0 0.0
      %1026 = vmatprep.subr.mxu0 0.0
      %1027 = vmatpush2.msra.mxu0 0.0
      %1028 = vmatprep.subr.mxu0 0.0
      %1029 = vmatpush2.msra.mxu0 0.0
      %1030 = vmatprep.mubr.f32.mxu0 0.0
      %1031 = vmatmul.mubr.f32.gmra.mxu0 %v964
      %v1032 = vpop.f32.mrf.mxu0
      %v1033 = vadd.f32 0.0, %v1032
      %v1034 = vpop.f32.mrf.mxu0
      %1035 = vdwg.mxu0
      %1037 = vrot.lane.b32.xlu0 %v703, 8
      %v1038 = vpop.permute.xlu0 %1037
      %1041 = vrot.lane.b32.xlu0 %v868, 16
      %v1042 = vpop.permute.xlu0 %1041
      %1045 = vrot.lane.b32.xlu0 %v1033, 24
      %v1046 = vpop.permute.xlu0 %1045
      %v1048 = vsel %vm379, %v537, %v1038
      %vm1049 = vcmask 130048
      %v1050 = vsel %vm1049, %v1048, %v1042
      %vm1051 = vcmask 195584
      %v1052 = vsel %vm1051, %v1050, %v1046
      %v1053 = vld [vmem:[%s6] sm:$0xff]
      %v1054 = vld [vmem:[%s6 + $0x8] sm:$0xff]
      %v1055 = vld [vmem:[%s6 + $0x10] sm:$0xff]
      %v1056 = vld [vmem:[%s6 + $0x18] sm:$0xff]
      %v1057 = vld [vmem:[%s7] sm:$0x1]
      %v1059 = vlaneseq
      %v1060 = vshrl.u32 %v1059, 7
      %v1061 = vsub.s32 0, %v1060
      %v1062 = vrot.slane %v1057, %v1061
      %vm1064 = vcmask 261120
      %v1066 = vsel %vm1064, %v1052, 0
      %1068 = vmatprep.subr.mxu0 0.0
      %1069 = vmatpush1.msra.mxu0 0.0
      %1070 = vmatprep.subr.mxu0 0.0
      %1071 = vmatpush1.msra.mxu0 0.0
      %1072 = vmatprep.subr.mxu0 0.0
      %1073 = vmatpush1.msra.mxu0 0.0
      %1074 = vmatprep.subr.mxu0 0.0
      %1075 = vmatpush1.msra.mxu0 0.0
      %1076 = vmatprep.subr.mxu0 0.0
      %1077 = vmatpush1.msra.mxu0 0.0
      %1078 = vmatprep.subr.mxu0 0.0
      %1079 = vmatpush1.msra.mxu0 0.0
      %1080 = vmatprep.subr.mxu0 0.0
      %1081 = vmatpush1.msra.mxu0 0.0
      %1082 = vmatprep.subr.mxu0 0.0
      %1083 = vmatpush1.msra.mxu0 0.0
      %1084 = vmatprep.subr.mxu0 0.0
      %1085 = vmatpush1.msra.mxu0 0.0
      %1086 = vmatprep.subr.mxu0 0.0
      %1087 = vmatpush1.msra.mxu0 0.0
      %1088 = vmatprep.subr.mxu0 0.0
      %1089 = vmatpush1.msra.mxu0 0.0
      %1090 = vmatprep.subr.mxu0 0.0
      %1091 = vmatpush1.msra.mxu0 0.0
      %1092 = vmatprep.subr.mxu0 0.0
      %1093 = vmatpush1.msra.mxu0 %v1056
      %1094 = vmatprep.subr.mxu0 0.0
      %1095 = vmatpush1.msra.mxu0 %v1055
      %1096 = vmatprep.subr.mxu0 0.0
      %1097 = vmatpush1.msra.mxu0 %v1054
      %1098 = vmatprep.subr.mxu0 0.0
      %1099 = vmatpush1.msra.mxu0 %v1053
      %1100 = vmatprep.subr.mxu0 0.0
      %1101 = vmatpush2.msra.mxu0 0.0
      %1102 = vmatprep.subr.mxu0 0.0
      %1103 = vmatpush2.msra.mxu0 0.0
      %1104 = vmatprep.subr.mxu0 0.0
      %1105 = vmatpush2.msra.mxu0 0.0
      %1106 = vmatprep.subr.mxu0 0.0
      %1107 = vmatpush2.msra.mxu0 0.0
      %1108 = vmatprep.subr.mxu0 0.0
      %1109 = vmatpush2.msra.mxu0 0.0
      %1110 = vmatprep.subr.mxu0 0.0
      %1111 = vmatpush2.msra.mxu0 0.0
      %1112 = vmatprep.subr.mxu0 0.0
      %1113 = vmatpush2.msra.mxu0 0.0
      %1114 = vmatprep.subr.mxu0 0.0
      %1115 = vmatpush2.msra.mxu0 0.0
      %1116 = vmatprep.subr.mxu0 0.0
      %1117 = vmatpush2.msra.mxu0 0.0
      %1118 = vmatprep.subr.mxu0 0.0
      %1119 = vmatpush2.msra.mxu0 0.0
      %1120 = vmatprep.subr.mxu0 0.0
      %1121 = vmatpush2.msra.mxu0 0.0
      %1122 = vmatprep.subr.mxu0 0.0
      %1123 = vmatpush2.msra.mxu0 0.0
      %1124 = vmatprep.subr.mxu0 0.0
      %1125 = vmatpush2.msra.mxu0 0.0
      %1126 = vmatprep.subr.mxu0 0.0
      %1127 = vmatpush2.msra.mxu0 0.0
      %1128 = vmatprep.subr.mxu0 0.0
      %1129 = vmatpush2.msra.mxu0 0.0
      %1130 = vmatprep.subr.mxu0 0.0
      %1131 = vmatpush2.msra.mxu0 0.0
      %1132 = vmatprep.mubr.f32.mxu0 0.0
      %1133 = vmatmul.mubr.f32.gmra.mxu0 %v1066
      %v1134 = vpop.f32.mrf.mxu0
      %v1135 = vadd.f32 %v1062, %v1134
      %v1136 = vpop.f32.mrf.mxu0
      %1137 = vdwg.mxu0
      %v1138 = vld [vmem:[%s361] sm:$0xff]
      %v1139 = vadd.f32 %v1135, %v1138
      %1140 = vst.msk [vmem:[%s365] sm:$0xff] %vm1064, %v1139
      %p1141 = scmp.lt.s32.totalorder %s19, 1
      %s1142 = scalar_select %p1141, %s19, 1
      %s1143 = smul.addr %s1142, 8
      %s1144 = scalar_lea.vmem %s8, %s1143
      // Predicated region
      $region53: #{decoder_block_forward.7} parent=51 // pred_check
        %p1145 = pneg %p230
      $region54: #{decoder_block_forward.7} parent=51 // pred_check_branch
        %1147 = sbr.rel (%p1145) target = $region56
      $region55: #{decoder_block_forward.7} parent=51 // pred_region
        _
      $region56: #{decoder_block_forward.7} parent=51 // pred_fallthru
        _
    $region52: #{decoder_block_forward.7} parent=5 // pred_fallthru
      _
    %p1148 = scmp.le.s32.totalorder 2, %s14
    // Predicated region
    $region57: #{decoder_block_forward.7} parent=5 // pred_check
      %p1149 = pneg %p1148
    $region58: #{decoder_block_forward.7} parent=5 // pred_check_branch
      %1151 = sbr.rel (%p1149) target = $region60
    $region59: #{decoder_block_forward.7} parent=5 // pred_region
      %s1152 = ssub.s32 %s14, 2
      // Predicated region
      $region61: #{decoder_block_forward.7} parent=59 // pred_check
        %p1153 = pneg %p236
      $region62: #{decoder_block_forward.7} parent=59 // pred_check_branch
        %1155 = sbr.rel (%p1153) target = $region64
      $region63: #{decoder_block_forward.7} parent=59 // pred_region
        %p1156 = scmp.lt.s32.totalorder %s20, 1
        %s1157 = scalar_select %p1156, %s20, 1
        %s1158 = smul.addr %s1157, 8
        %s1159 = scalar_lea.vmem %s8, %s1158
      $region64: #{decoder_block_forward.7} parent=59 // pred_fallthru
        _
    $region60: #{decoder_block_forward.7} parent=5 // pred_fallthru
      _
  $region6: #{decoder_block_forward.7} parent=0 // loop_footer
    %s18 = sadd.s32 1, %s14
  $region7: #{decoder_block_forward.7} parent=0 // loop_footer_branch
    %13 = sbr.rel target = $region3
  $region8: #{decoder_block_forward.7} parent=0 // loop_exit
    _

// kernel: decoder_block_forward.11
$region0: #{decoder_block_forward.11}
  #allocation0 [shape = 'u32[]', space=smem, size = 0x4, offset = 0x4, fixed_abs, tag = 'smem constant byte address 0x4 - core index']
  #allocation1 [shape = 'u32[144,128]{1,0:T(1,128)}', space=vmem, size = 0x12000, scoped, tag = 'internal scratch']
  %s0 = inlined_call_operand.vmem [shape: f32[2,8,32], index: 0, kind: input, shape index: {}]
  %s1 = inlined_call_operand.vmem [shape: f32[1,32], index: 1, kind: input, shape index: {}]
  %s2 = inlined_call_operand.vmem [shape: f32[1,32], index: 2, kind: input, shape index: {}]
  %s3 = inlined_call_operand.vmem [shape: f32[32,64], index: 3, kind: input, shape index: {}]
  %s4 = inlined_call_operand.vmem [shape: f32[1,64], index: 4, kind: input, shape index: {}]
  %s5 = inlined_call_operand.vmem [shape: f32[64,32], index: 5, kind: input, shape index: {}]
  %s6 = inlined_call_operand.vmem [shape: f32[1,32], index: 6, kind: input, shape index: {}]
  %s7 = inlined_call_operand.hbm [shape: f32[2,8,32], index: 7, kind: output, shape index: {}]
  %s8 = sld [smem:[#allocation0]]
  $region61: #{decoder_block_forward.11} parent=0
    _
  %s10 = ssub.s32 1, %s8
  %s11 = scalar_select 0, %s10, %s8
  $region1: #{decoder_block_forward.11} parent=0
    #allocation2 [shape = 'u8[8192]{0}', space=vmem, size = 0x2000, scoped, tag = 'output window, operand 0']
    #allocation3 [shape = 's32[2]{0}', space=sflag, size = 0x8, scoped, tag = 'scoped memory for decoder_block_forward.11']
    %12 = vsyncpa [#allocation3], 0
    %s13 = scalar_lea.sflag [#allocation3], 1
    %14 = vsyncpa %s13, 0
    loop: start=0, step=1, limit=4
    $region2: #{decoder_block_forward.11} parent=1 // loop_pre_header
      _
    $region3: #{decoder_block_forward.11} parent=1 // loop_header
      %s16 = sphi 0, %s20
      %p17 = scmp.ge.s32.totalorder %s16, 4
      %s26 = sphi 0, %s28
      %s29 = sphi 0, %s26
      %s30 = sphi 0, %s29
      %s46 = sphi 0, %s30
      %s50 = sphi 0, %s50
      %s52 = sphi 0, %s50
      %s53 = sphi 0, %s52
      %s67 = sphi 0, %s53
      %s71 = sphi 0, %s71
      %s73 = sphi 0, %s71
      %s74 = sphi 0, %s73
      %s88 = sphi 0, %s74
      %s92 = sphi 0, %s92
      %s94 = sphi 0, %s92
      %s95 = sphi 0, %s94
      %s109 = sphi 0, %s95
      %s113 = sphi 0, %s113
      %s115 = sphi 0, %s113
      %s116 = sphi 0, %s115
      %s130 = sphi 0, %s116
      %s134 = sphi 0, %s134
      %s136 = sphi 0, %s134
      %s137 = sphi 0, %s136
      %s151 = sphi 0, %s137
      %s155 = sphi 0, %s155
      %s157 = sphi 0, %s155
      %s158 = sphi 0, %s157
      %s172 = sphi 0, %s158
      %s178 = sphi 0, %s180
      %s181 = sphi 0, %s178
      %s182 = sphi 0, %s181
      %s198 = sphi 0, %s182
    $region4: #{decoder_block_forward.11} parent=1 // loop_header_branch
      %19 = sbr.rel (%p17) target = $region8
    $region5: #{decoder_block_forward.11} parent=1 // loop_body
      %s21 = ssub.s32 %s16, 1
      %s22 = ssub.s32 %s16, 2
      %s23 = sadd.s32 %s16, 1
      %s24 = ssub.s32 %s16, %s23
      %p25 = scmp.eq.s32.totalorder %s24, 0
      %s27 = sadd.s32 %s26, 1
      %s28 = scalar_select %p25, %s26, %s27
      %p31 = pneg %p25
      %p32 = scmp.eq.s32.totalorder %s16, 1
      %p33 = por %p31, %p32
      %p34 = scmp.ne.s32.totalorder %s26, %s29
      %p35 = scmp.eq.s32.totalorder %s16, 0
      %p36 = por %p34, %p35
      %p37 = scmp.ne.s32.totalorder %s26, %s29
      %p38 = scmp.eq.s32.totalorder %s21, 1
      %p39 = por %p37, %p38
      %p40 = scmp.ne.s32.totalorder %s29, %s30
      %p41 = scmp.eq.s32.totalorder %s21, 0
      %p42 = por %p40, %p41
      %p43 = scmp.ne.s32.totalorder %s29, %s30
      %p44 = scmp.eq.s32.totalorder %s22, 1
      %p45 = por %p43, %p44
      %p47 = scmp.ne.s32.totalorder %s30, %s46
      %p48 = scmp.eq.s32.totalorder %s22, 0
      %p49 = por %p47, %p48
      %s51 = sadd.s32 %s50, 1
      %p54 = scmp.eq.s32.totalorder %s16, 1
      %p55 = scmp.ne.s32.totalorder %s50, %s52
      %p56 = scmp.eq.s32.totalorder %s16, 0
      %p57 = por %p55, %p56
      %p58 = scmp.ne.s32.totalorder %s50, %s52
      %p59 = scmp.eq.s32.totalorder %s21, 1
      %p60 = por %p58, %p59
      %p61 = scmp.ne.s32.totalorder %s52, %s53
      %p62 = scmp.eq.s32.totalorder %s21, 0
      %p63 = por %p61, %p62
      %p64 = scmp.ne.s32.totalorder %s52, %s53
      %p65 = scmp.eq.s32.totalorder %s22, 1
      %p66 = por %p64, %p65
      %p68 = scmp.ne.s32.totalorder %s53, %s67
      %p69 = scmp.eq.s32.totalorder %s22, 0
      %p70 = por %p68, %p69
      %s72 = sadd.s32 %s71, 1
      %p75 = scmp.eq.s32.totalorder %s16, 1
      %p76 = scmp.ne.s32.totalorder %s71, %s73
      %p77 = scmp.eq.s32.totalorder %s16, 0
      %p78 = por %p76, %p77
      %p79 = scmp.ne.s32.totalorder %s71, %s73
      %p80 = scmp.eq.s32.totalorder %s21, 1
      %p81 = por %p79, %p80
      %p82 = scmp.ne.s32.totalorder %s73, %s74
      %p83 = scmp.eq.s32.totalorder %s21, 0
      %p84 = por %p82, %p83
      %p85 = scmp.ne.s32.totalorder %s73, %s74
      %p86 = scmp.eq.s32.totalorder %s22, 1
      %p87 = por %p85, %p86
      %p89 = scmp.ne.s32.totalorder %s74, %s88
      %p90 = scmp.eq.s32.totalorder %s22, 0
      %p91 = por %p89, %p90
      %s93 = sadd.s32 %s92, 1
      %p96 = scmp.eq.s32.totalorder %s16, 1
      %p97 = scmp.ne.s32.totalorder %s92, %s94
      %p98 = scmp.eq.s32.totalorder %s16, 0
      %p99 = por %p97, %p98
      %p100 = scmp.ne.s32.totalorder %s92, %s94
      %p101 = scmp.eq.s32.totalorder %s21, 1
      %p102 = por %p100, %p101
      %p103 = scmp.ne.s32.totalorder %s94, %s95
      %p104 = scmp.eq.s32.totalorder %s21, 0
      %p105 = por %p103, %p104
      %p106 = scmp.ne.s32.totalorder %s94, %s95
      %p107 = scmp.eq.s32.totalorder %s22, 1
      %p108 = por %p106, %p107
      %p110 = scmp.ne.s32.totalorder %s95, %s109
      %p111 = scmp.eq.s32.totalorder %s22, 0
      %p112 = por %p110, %p111
      %s114 = sadd.s32 %s113, 1
      %p117 = scmp.eq.s32.totalorder %s16, 1
      %p118 = scmp.ne.s32.totalorder %s113, %s115
      %p119 = scmp.eq.s32.totalorder %s16, 0
      %p120 = por %p118, %p119
      %p121 = scmp.ne.s32.totalorder %s113, %s115
      %p122 = scmp.eq.s32.totalorder %s21, 1
      %p123 = por %p121, %p122
      %p124 = scmp.ne.s32.totalorder %s115, %s116
      %p125 = scmp.eq.s32.totalorder %s21, 0
      %p126 = por %p124, %p125
      %p127 = scmp.ne.s32.totalorder %s115, %s116
      %p128 = scmp.eq.s32.totalorder %s22, 1
      %p129 = por %p127, %p128
      %p131 = scmp.ne.s32.totalorder %s116, %s130
      %p132 = scmp.eq.s32.totalorder %s22, 0
      %p133 = por %p131, %p132
      %s135 = sadd.s32 %s134, 1
      %p138 = scmp.eq.s32.totalorder %s16, 1
      %p139 = scmp.ne.s32.totalorder %s134, %s136
      %p140 = scmp.eq.s32.totalorder %s16, 0
      %p141 = por %p139, %p140
      %p142 = scmp.ne.s32.totalorder %s134, %s136
      %p143 = scmp.eq.s32.totalorder %s21, 1
      %p144 = por %p142, %p143
      %p145 = scmp.ne.s32.totalorder %s136, %s137
      %p146 = scmp.eq.s32.totalorder %s21, 0
      %p147 = por %p145, %p146
      %p148 = scmp.ne.s32.totalorder %s136, %s137
      %p149 = scmp.eq.s32.totalorder %s22, 1
      %p150 = por %p148, %p149
      %p152 = scmp.ne.s32.totalorder %s137, %s151
      %p153 = scmp.eq.s32.totalorder %s22, 0
      %p154 = por %p152, %p153
      %s156 = sadd.s32 %s155, 1
      %p159 = scmp.eq.s32.totalorder %s16, 1
      %p160 = scmp.ne.s32.totalorder %s155, %s157
      %p161 = scmp.eq.s32.totalorder %s16, 0
      %p162 = por %p160, %p161
      %p163 = scmp.ne.s32.totalorder %s155, %s157
      %p164 = scmp.eq.s32.totalorder %s21, 1
      %p165 = por %p163, %p164
      %p166 = scmp.ne.s32.totalorder %s157, %s158
      %p167 = scmp.eq.s32.totalorder %s21, 0
      %p168 = por %p166, %p167
      %p169 = scmp.ne.s32.totalorder %s157, %s158
      %p170 = scmp.eq.s32.totalorder %s22, 1
      %p171 = por %p169, %p170
      %p173 = scmp.ne.s32.totalorder %s158, %s172
      %p174 = scmp.eq.s32.totalorder %s22, 0
      %p175 = por %p173, %p174
      %s176 = ssub.s32 %s16, %s23
      %p177 = scmp.eq.s32.totalorder %s176, 0
      %s179 = sadd.s32 %s178, 1
      %s180 = scalar_select %p177, %s178, %s179
      %p183 = pneg %p177
      %p184 = scmp.eq.s32.totalorder %s16, 1
      %p185 = por %p183, %p184
      %p186 = scmp.ne.s32.totalorder %s178, %s181
      %p187 = scmp.eq.s32.totalorder %s16, 0
      %p188 = por %p186, %p187
      %p189 = scmp.ne.s32.totalorder %s178, %s181
      %p190 = scmp.eq.s32.totalorder %s21, 1
      %p191 = por %p189, %p190
      %p192 = scmp.ne.s32.totalorder %s181, %s182
      %p193 = scmp.eq.s32.totalorder %s21, 0
      %p194 = por %p192, %p193
      %p195 = scmp.ne.s32.totalorder %s181, %s182
      %p196 = scmp.eq.s32.totalorder %s22, 1
      %p197 = por %p195, %p196
      %p199 = scmp.ne.s32.totalorder %s182, %s198
      %p200 = scmp.eq.s32.totalorder %s22, 0
      %p201 = por %p199, %p200
      %p202 = scmp.le.s32.totalorder 1, %s16
      %p203 = scmp.lt.s32.totalorder %s16, 3
      %p204 = pnand %p202, %p203
      %p205 = pneg %p204
      // Predicated region
      $region9: #{decoder_block_forward.11} parent=5 // pred_check
        _
      $region10: #{decoder_block_forward.11} parent=5 // pred_check_branch
        %207 = sbr.rel (%p204) target = $region12
      $region11: #{decoder_block_forward.11} parent=5 // pred_region
        %s208 = ssub.s32 %s16, 1
        // Predicated region
        $region13: #{decoder_block_forward.11} parent=11 // pred_check
          %p209 = pneg %p63
        $region14: #{decoder_block_forward.11} parent=11 // pred_check_branch
          %211 = sbr.rel (%p209) target = $region16
        $region15: #{decoder_block_forward.11} parent=11 // pred_region
          _
        $region16: #{decoder_block_forward.11} parent=11 // pred_fallthru
          _
        // Predicated region
        $region17: #{decoder_block_forward.11} parent=11 // pred_check
          %p212 = pneg %p84
        $region18: #{decoder_block_forward.11} parent=11 // pred_check_branch
          %214 = sbr.rel (%p212) target = $region20
        $region19: #{decoder_block_forward.11} parent=11 // pred_region
          _
        $region20: #{decoder_block_forward.11} parent=11 // pred_fallthru
          _
        // Predicated region
        $region21: #{decoder_block_forward.11} parent=11 // pred_check
          %p215 = pneg %p105
        $region22: #{decoder_block_forward.11} parent=11 // pred_check_branch
          %217 = sbr.rel (%p215) target = $region24
        $region23: #{decoder_block_forward.11} parent=11 // pred_region
          _
        $region24: #{decoder_block_forward.11} parent=11 // pred_fallthru
          _
        // Predicated region
        $region25: #{decoder_block_forward.11} parent=11 // pred_check
          %p218 = pneg %p126
        $region26: #{decoder_block_forward.11} parent=11 // pred_check_branch
          %220 = sbr.rel (%p218) target = $region28
        $region27: #{decoder_block_forward.11} parent=11 // pred_region
          _
        $region28: #{decoder_block_forward.11} parent=11 // pred_fallthru
          _
        // Predicated region
        $region29: #{decoder_block_forward.11} parent=11 // pred_check
          %p221 = pneg %p147
        $region30: #{decoder_block_forward.11} parent=11 // pred_check_branch
          %223 = sbr.rel (%p221) target = $region32
        $region31: #{decoder_block_forward.11} parent=11 // pred_region
          _
        $region32: #{decoder_block_forward.11} parent=11 // pred_fallthru
          _
        // Predicated region
        $region33: #{decoder_block_forward.11} parent=11 // pred_check
          %p224 = pneg %p168
        $region34: #{decoder_block_forward.11} parent=11 // pred_check_branch
          %226 = sbr.rel (%p224) target = $region36
        $region35: #{decoder_block_forward.11} parent=11 // pred_region
          _
        $region36: #{decoder_block_forward.11} parent=11 // pred_fallthru
          _
      $region12: #{decoder_block_forward.11} parent=5 // pred_fallthru
        _
      %p227 = scmp.lt.s32.totalorder %s16, 2
      // Predicated region
      $region37: #{decoder_block_forward.11} parent=5 // pred_check
        %p228 = pneg %p227
      $region38: #{decoder_block_forward.11} parent=5 // pred_check_branch
        %230 = sbr.rel (%p228) target = $region40
      $region39: #{decoder_block_forward.11} parent=5 // pred_region
        // Predicated region
        $region41: #{decoder_block_forward.11} parent=39 // pred_check
          %p231 = pneg %p36
        $region42: #{decoder_block_forward.11} parent=39 // pred_check_branch
          %233 = sbr.rel (%p231) target = $region44
        $region43: #{decoder_block_forward.11} parent=39 // pred_region
          %p234 = scmp.lt.s32.totalorder %s16, 1
          %s235 = scalar_select %p234, %s16, 1
          %s236 = smul.addr %s235, 8
          %s237 = scalar_lea.vmem %s0, %s236
        $region44: #{decoder_block_forward.11} parent=39 // pred_fallthru
          _
      $region40: #{decoder_block_forward.11} parent=5 // pred_fallthru
        _
      %p238 = scmp.le.s32.totalorder 1, %s16
      %p239 = scmp.lt.s32.totalorder %s16, 3
      %p240 = pnand %p238, %p239
      %p241 = pneg %p240
      // Predicated region
      $region45: #{decoder_block_forward.11} parent=5 // pred_check
        _
      $region46: #{decoder_block_forward.11} parent=5 // pred_check_branch
        %243 = sbr.rel (%p240) target = $region48
      $region47: #{decoder_block_forward.11} parent=5 // pred_region
        %s244 = ssub.s32 %s16, 1
        %p245 = scmp.lt.s32.totalorder %s21, 1
        %s246 = scalar_select %p245, %s21, 1
        %s247 = smul.addr %s246, 8
        %s248 = scalar_lea.vmem %s0, %s247
        %p249 = pneg %p42
        %p250 = pneg %p39
        %p251 = pneg %p63
        %p252 = pneg %p60
        %p253 = pneg %p84
        %p254 = pneg %p81
        %p255 = pneg %p105
        %p256 = pneg %p102
        %p257 = pneg %p126
        %p258 = pneg %p123
        %p259 = pneg %p147
        %p260 = pneg %p144
        %p261 = pneg %p168
        %p262 = pneg %p165
        %p263 = pneg %p194
        %p264 = pneg %p191
        %s265 = sand.u32 %s181, 1
        %s266 = scalar_lea.sflag [#allocation3], %s265
        %s267 = sand.u32 %s181, 1
        %s268 = smul.addr %s267, 8
        %s269 = scalar_lea.vmem [#allocation2], %s268
        %p270 = scmp.lt.s32.totalorder %s21, 1
        %s271 = scalar_select %p270, %s21, 1
        %s272 = smul.addr %s271, 8
        %s273 = scalar_lea.vmem %s0, %s272
        %v274 = vld [vmem:[%s273] sm:$0xff]
        %v275 = vld [vmem:[%s1] sm:$0x1]
        %v276 = vld [vmem:[%s2] sm:$0x1]
        %vm277 = vcmask 261120
        %v278 = vsel %vm277, %v274, 0.0
        %279 = vadd.xlane.f32.xlu0 %v278
        %v280 = vpop.xlane.xlu0 %279
        %v281 = vrcp.pop 32.0
        %v282 = vmul.f32 %v280, %v281
        %v283 = vsub.f32 %v274, %v282
        %v284 = vmul.f32 %v283, %v283
        %v285 = vsel %vm277, %v284, 0.0
        %286 = vadd.xlane.f32.xlu0 %v285
        %v287 = vpop.xlane.xlu0 %286
        %v288 = vmul.f32 %v287, %v281
        %v289 = vadd.f32 %v288, 1e-05
        %v290 = vrsqrt.pop %v289
        %v291 = vmul.f32 %v283, %v290
        %v293 = vlaneseq
        %v294 = vshrl.u32 %v293, 7
        %v295 = vsub.s32 0, %v294
        %v296 = vrot.slane %v275, %v295
        %v298 = vmul.f32 %v291, %v296
        %v300 = vlaneseq
        %v301 = vshrl.u32 %v300, 7
        %v302 = vsub.s32 0, %v301
        %v303 = vrot.slane %v276, %v302
        %v305 = vadd.f32 %v298, %v303
        %v306 = vld [vmem:[%s3] sm:$0xff]
        %v307 = vld [vmem:[%s3 + $0x8] sm:$0xff]
        %v308 = vld [vmem:[%s3 + $0x10] sm:$0xff]
        %v309 = vld [vmem:[%s3 + $0x18] sm:$0xff]
        %v310 = vld [vmem:[%s4] sm:$0x1]
        %v312 = vlaneseq
        %v313 = vshrl.u32 %v312, 7
        %v314 = vsub.s32 0, %v313
        %v315 = vrot.slane %v310, %v314
        %v318 = vsel %vm277, %v305, 0
        %320 = vmatprep.subr.mxu0 0.0
        %321 = vmatpush1.msra.mxu0 0.0
        %322 = vmatprep.subr.mxu0 0.0
        %323 = vmatpush1.msra.mxu0 0.0
        %324 = vmatprep.subr.mxu0 0.0
        %325 = vmatpush1.msra.mxu0 0.0
        %326 = vmatprep.subr.mxu0 0.0
        %327 = vmatpush1.msra.mxu0 0.0
        %328 = vmatprep.subr.mxu0 0.0
        %329 = vmatpush1.msra.mxu0 0.0
        %330 = vmatprep.subr.mxu0 0.0
        %331 = vmatpush1.msra.mxu0 0.0
        %332 = vmatprep.subr.mxu0 0.0
        %333 = vmatpush1.msra.mxu0 0.0
        %334 = vmatprep.subr.mxu0 0.0
        %335 = vmatpush1.msra.mxu0 0.0
        %336 = vmatprep.subr.mxu0 0.0
        %337 = vmatpush1.msra.mxu0 0.0
        %338 = vmatprep.subr.mxu0 0.0
        %339 = vmatpush1.msra.mxu0 0.0
        %340 = vmatprep.subr.mxu0 0.0
        %341 = vmatpush1.msra.mxu0 0.0
        %342 = vmatprep.subr.mxu0 0.0
        %343 = vmatpush1.msra.mxu0 0.0
        %344 = vmatprep.subr.mxu0 0.0
        %345 = vmatpush1.msra.mxu0 %v309
        %346 = vmatprep.subr.mxu0 0.0
        %347 = vmatpush1.msra.mxu0 %v308
        %348 = vmatprep.subr.mxu0 0.0
        %349 = vmatpush1.msra.mxu0 %v307
        %350 = vmatprep.subr.mxu0 0.0
        %351 = vmatpush1.msra.mxu0 %v306
        %352 = vmatprep.subr.mxu0 0.0
        %353 = vmatpush2.msra.mxu0 0.0
        %354 = vmatprep.subr.mxu0 0.0
        %355 = vmatpush2.msra.mxu0 0.0
        %356 = vmatprep.subr.mxu0 0.0
        %357 = vmatpush2.msra.mxu0 0.0
        %358 = vmatprep.subr.mxu0 0.0
        %359 = vmatpush2.msra.mxu0 0.0
        %360 = vmatprep.subr.mxu0 0.0
        %361 = vmatpush2.msra.mxu0 0.0
        %362 = vmatprep.subr.mxu0 0.0
        %363 = vmatpush2.msra.mxu0 0.0
        %364 = vmatprep.subr.mxu0 0.0
        %365 = vmatpush2.msra.mxu0 0.0
        %366 = vmatprep.subr.mxu0 0.0
        %367 = vmatpush2.msra.mxu0 0.0
        %368 = vmatprep.subr.mxu0 0.0
        %369 = vmatpush2.msra.mxu0 0.0
        %370 = vmatprep.subr.mxu0 0.0
        %371 = vmatpush2.msra.mxu0 0.0
        %372 = vmatprep.subr.mxu0 0.0
        %373 = vmatpush2.msra.mxu0 0.0
        %374 = vmatprep.subr.mxu0 0.0
        %375 = vmatpush2.msra.mxu0 0.0
        %376 = vmatprep.subr.mxu0 0.0
        %377 = vmatpush2.msra.mxu0 0.0
        %378 = vmatprep.subr.mxu0 0.0
        %379 = vmatpush2.msra.mxu0 0.0
        %380 = vmatprep.subr.mxu0 0.0
        %381 = vmatpush2.msra.mxu0 0.0
        %382 = vmatprep.subr.mxu0 0.0
        %383 = vmatpush2.msra.mxu0 0.0
        %384 = vmatprep.mubr.f32.mxu0 0.0
        %385 = vmatmul.mubr.f32.gmra.mxu0 %v318
        %v386 = vpop.f32.mrf.mxu0
        %v387 = vadd.f32 %v315, %v386
        %v388 = vpop.f32.mrf.mxu0
        %389 = vdwg.mxu0
        %v390 = vmax.f32 %v387, 0.0
        %v391 = vld [vmem:[%s5] sm:$0xff]
        %v392 = vld [vmem:[%s5 + $0x8] sm:$0xff]
        %v393 = vld [vmem:[%s5 + $0x10] sm:$0xff]
        %v394 = vld [vmem:[%s5 + $0x18] sm:$0xff]
        %v395 = vld [vmem:[%s5 + $0x20] sm:$0xff]
        %v396 = vld [vmem:[%s5 + $0x28] sm:$0xff]
        %v397 = vld [vmem:[%s5 + $0x30] sm:$0xff]
        %v398 = vld [vmem:[%s5 + $0x38] sm:$0xff]
        %v399 = vld [vmem:[%s6] sm:$0x1]
        %v401 = vlaneseq
        %v402 = vshrl.u32 %v401, 7
        %v403 = vsub.s32 0, %v402
        %v404 = vrot.slane %v399, %v403
        %vm406 = vcmask 523264
        %v408 = vsel %vm406, %v390, 0
        %410 = vmatprep.subr.mxu0 0.0
        %411 = vmatpush1.msra.mxu0 0.0
        %412 = vmatprep.subr.mxu0 0.0
        %413 = vmatpush1.msra.mxu0 0.0
        %414 = vmatprep.subr.mxu0 0.0
        %415 = vmatpush1.msra.mxu0 0.0
        %416 = vmatprep.subr.mxu0 0.0
        %417 = vmatpush1.msra.mxu0 0.0
        %418 = vmatprep.subr.mxu0 0.0
        %419 = vmatpush1.msra.mxu0 0.0
        %420 = vmatprep.subr.mxu0 0.0
        %421 = vmatpush1.msra.mxu0 0.0
        %422 = vmatprep.subr.mxu0 0.0
        %423 = vmatpush1.msra.mxu0 0.0
        %424 = vmatprep.subr.mxu0 0.0
        %425 = vmatpush1.msra.mxu0 0.0
        %426 = vmatprep.subr.mxu0 0.0
        %427 = vmatpush1.msra.mxu0 %v398
        %428 = vmatprep.subr.mxu0 0.0
        %429 = vmatpush1.msra.mxu0 %v397
        %430 = vmatprep.subr.mxu0 0.0
        %431 = vmatpush1.msra.mxu0 %v396
        %432 = vmatprep.subr.mxu0 0.0
        %433 = vmatpush1.msra.mxu0 %v395
        %434 = vmatprep.subr.mxu0 0.0
        %435 = vmatpush1.msra.mxu0 %v394
        %436 = vmatprep.subr.mxu0 0.0
        %437 = vmatpush1.msra.mxu0 %v393
        %438 = vmatprep.subr.mxu0 0.0
        %439 = vmatpush1.msra.mxu0 %v392
        %440 = vmatprep.subr.mxu0 0.0
        %441 = vmatpush1.msra.mxu0 %v391
        %442 = vmatprep.subr.mxu0 0.0
        %443 = vmatpush2.msra.mxu0 0.0
        %444 = vmatprep.subr.mxu0 0.0
        %445 = vmatpush2.msra.mxu0 0.0
        %446 = vmatprep.subr.mxu0 0.0
        %447 = vmatpush2.msra.mxu0 0.0
        %448 = vmatprep.subr.mxu0 0.0
        %449 = vmatpush2.msra.mxu0 0.0
        %450 = vmatprep.subr.mxu0 0.0
        %451 = vmatpush2.msra.mxu0 0.0
        %452 = vmatprep.subr.mxu0 0.0
        %453 = vmatpush2.msra.mxu0 0.0
        %454 = vmatprep.subr.mxu0 0.0
        %455 = vmatpush2.msra.mxu0 0.0
        %456 = vmatprep.subr.mxu0 0.0
        %457 = vmatpush2.msra.mxu0 0.0
        %458 = vmatprep.subr.mxu0 0.0
        %459 = vmatpush2.msra.mxu0 0.0
        %460 = vmatprep.subr.mxu0 0.0
        %461 = vmatpush2.msra.mxu0 0.0
        %462 = vmatprep.subr.mxu0 0.0
        %463 = vmatpush2.msra.mxu0 0.0
        %464 = vmatprep.subr.mxu0 0.0
        %465 = vmatpush2.msra.mxu0 0.0
        %466 = vmatprep.subr.mxu0 0.0
        %467 = vmatpush2.msra.mxu0 0.0
        %468 = vmatprep.subr.mxu0 0.0
        %469 = vmatpush2.msra.mxu0 0.0
        %470 = vmatprep.subr.mxu0 0.0
        %471 = vmatpush2.msra.mxu0 0.0
        %472 = vmatprep.subr.mxu0 0.0
        %473 = vmatpush2.msra.mxu0 0.0
        %474 = vmatprep.mubr.f32.mxu0 0.0
        %475 = vmatmul.mubr.f32.gmra.mxu0 %v408
        %v476 = vpop.f32.mrf.mxu0
        %v477 = vadd.f32 %v404, %v476
        %v478 = vpop.f32.mrf.mxu0
        %479 = vdwg.mxu0
        %v480 = vadd.f32 %v305, %v477
        %481 = vst.msk [vmem:[%s269] sm:$0xff] %vm277, %v480
        %s482 = sand.u32 %s181, 1
        %s483 = scalar_lea.sflag [#allocation3], %s482
        %s484 = sand.u32 %s181, 1
        %s485 = smul.addr %s484, 8
        %s486 = scalar_lea.vmem [#allocation2], %s485
        // Predicated region
        $region49: #{decoder_block_forward.11} parent=47 // pred_check
          %p487 = pneg %p191
        $region50: #{decoder_block_forward.11} parent=47 // pred_check_branch
          %489 = sbr.rel (%p487) target = $region52
        $region51: #{decoder_block_forward.11} parent=47 // pred_region
          %s491 = ssub.s32 128, 128
          %492 = vsyncadd %s483, %s491
          %s493 = smul.addr %s21, 128
          %s494 = scalar_lea.hbm %s7, %s493
          %s496 = sshll.u32 %s486, 4
          %s497 = int_to_ptr.vmem [resolvable:$true] %s496
          %499 = dma.vmem_to_hbm [thread:$0]  %s497, 128, %s494, %s483
        $region52: #{decoder_block_forward.11} parent=47 // pred_fallthru
          _
      $region48: #{decoder_block_forward.11} parent=5 // pred_fallthru
        _
      %p500 = scmp.le.s32.totalorder 2, %s16
      // Predicated region
      $region53: #{decoder_block_forward.11} parent=5 // pred_check
        %p501 = pneg %p500
      $region54: #{decoder_block_forward.11} parent=5 // pred_check_branch
        %503 = sbr.rel (%p501) target = $region56
      $region55: #{decoder_block_forward.11} parent=5 // pred_region
        %s504 = ssub.s32 %s16, 2
        // Predicated region
        $region57: #{decoder_block_forward.11} parent=55 // pred_check
          %p505 = pneg %p197
        $region58: #{decoder_block_forward.11} parent=55 // pred_check_branch
          %507 = sbr.rel (%p505) target = $region60
        $region59: #{decoder_block_forward.11} parent=55 // pred_region
          %s508 = sand.u32 %s182, 1
          %s509 = scalar_lea.sflag [#allocation3], %s508
          %s510 = sand.u32 %s182, 1
          %s511 = smul.addr %s510, 8
          %s512 = scalar_lea.vmem [#allocation2], %s511
          %513 = dma.done %s509, 128
        $region60: #{decoder_block_forward.11} parent=55 // pred_fallthru
          _
      $region56: #{decoder_block_forward.11} parent=5 // pred_fallthru
        _
    $region6: #{decoder_block_forward.11} parent=1 // loop_footer
      %s20 = sadd.s32 1, %s16
    $region7: #{decoder_block_forward.11} parent=1 // loop_footer_branch
      %15 = sbr.rel target = $region3
    $region8: #{decoder_block_forward.11} parent=1 // loop_exit
      _
    %514 = vsyncpa [#allocation3], 1
    %s515 = scalar_lea.sflag [#allocation3], 1
    %516 = vsyncpa %s515, 1

// kernel: decoder_block_forward.10
$region0: #{decoder_block_forward.10}
  #allocation0 [shape = 'u32[]', space=smem, size = 0x4, offset = 0x4, fixed_abs, tag = 'smem constant byte address 0x4 - core index']
  #allocation1 [shape = 'u32[144,128]{1,0:T(1,128)}', space=vmem, size = 0x12000, scoped, tag = 'internal scratch']
  %s0 = inlined_call_operand.vmem [shape: f32[2,8,32], index: 0, kind: input, shape index: {}]
  %s1 = inlined_call_operand.vmem [shape: f32[2,8,32], index: 1, kind: input, shape index: {}]
  %s2 = inlined_call_operand.vmem [shape: f32[2,8,32], index: 2, kind: input, shape index: {}]
  %s3 = inlined_call_operand.vmem [shape: f32[2,1,8], index: 3, kind: input, shape index: {}]
  %s4 = inlined_call_operand.vmem [shape: f32[2,8,32], index: 4, kind: input, shape index: {}]
  %s5 = inlined_call_operand.vmem [shape: f32[32,32], index: 5, kind: input, shape index: {}]
  %s6 = inlined_call_operand.vmem [shape: f32[1,32], index: 6, kind: input, shape index: {}]
  %s7 = inlined_call_operand.vmem [shape: f32[2,8,32], index: 7, kind: output, shape index: {}]
  %s8 = sld [smem:[#allocation0]]
  $region61: #{decoder_block_forward.10} parent=0
    _
  %s10 = ssub.s32 1, %s8
  %s11 = scalar_select 0, %s10, %s8
  loop: start=0, step=1, limit=4
  $region2: #{decoder_block_forward.10} parent=0 // loop_pre_header
    _
  $region3: #{decoder_block_forward.10} parent=0 // loop_header
    %s13 = sphi 0, %s17
    %p14 = scmp.ge.s32.totalorder %s13, 4
    %s23 = sphi 0, %s25
    %s26 = sphi 0, %s23
    %s27 = sphi 0, %s26
    %s43 = sphi 0, %s27
    %s49 = sphi 0, %s51
    %s52 = sphi 0, %s49
    %s53 = sphi 0, %s52
    %s69 = sphi 0, %s53
    %s75 = sphi 0, %s77
    %s78 = sphi 0, %s75
    %s79 = sphi 0, %s78
    %s95 = sphi 0, %s79
    %s101 = sphi 0, %s103
    %s104 = sphi 0, %s101
    %s105 = sphi 0, %s104
    %s121 = sphi 0, %s105
    %s127 = sphi 0, %s129
    %s130 = sphi 0, %s127
    %s131 = sphi 0, %s130
    %s147 = sphi 0, %s131
    %s151 = sphi 0, %s151
    %s153 = sphi 0, %s151
    %s154 = sphi 0, %s153
    %s168 = sphi 0, %s154
    %s172 = sphi 0, %s172
    %s174 = sphi 0, %s172
    %s175 = sphi 0, %s174
    %s189 = sphi 0, %s175
    %s195 = sphi 0, %s197
    %s198 = sphi 0, %s195
    %s199 = sphi 0, %s198
    %s215 = sphi 0, %s199
  $region4: #{decoder_block_forward.10} parent=0 // loop_header_branch
    %16 = sbr.rel (%p14) target = $region8
  $region5: #{decoder_block_forward.10} parent=0 // loop_body
    %s18 = ssub.s32 %s13, 1
    %s19 = ssub.s32 %s13, 2
    %s20 = sadd.s32 %s13, 1
    %s21 = ssub.s32 %s13, %s20
    %p22 = scmp.eq.s32.totalorder %s21, 0
    %s24 = sadd.s32 %s23, 1
    %s25 = scalar_select %p22, %s23, %s24
    %p28 = pneg %p22
    %p29 = scmp.eq.s32.totalorder %s13, 1
    %p30 = por %p28, %p29
    %p31 = scmp.ne.s32.totalorder %s23, %s26
    %p32 = scmp.eq.s32.totalorder %s13, 0
    %p33 = por %p31, %p32
    %p34 = scmp.ne.s32.totalorder %s23, %s26
    %p35 = scmp.eq.s32.totalorder %s18, 1
    %p36 = por %p34, %p35
    %p37 = scmp.ne.s32.totalorder %s26, %s27
    %p38 = scmp.eq.s32.totalorder %s18, 0
    %p39 = por %p37, %p38
    %p40 = scmp.ne.s32.totalorder %s26, %s27
    %p41 = scmp.eq.s32.totalorder %s19, 1
    %p42 = por %p40, %p41
    %p44 = scmp.ne.s32.totalorder %s27, %s43
    %p45 = scmp.eq.s32.totalorder %s19, 0
    %p46 = por %p44, %p45
    %s47 = ssub.s32 %s13, %s20
    %p48 = scmp.eq.s32.totalorder %s47, 0
    %s50 = sadd.s32 %s49, 1
    %s51 = scalar_select %p48, %s49, %s50
    %p54 = pneg %p48
    %p55 = scmp.eq.s32.totalorder %s13, 1
    %p56 = por %p54, %p55
    %p57 = scmp.ne.s32.totalorder %s49, %s52
    %p58 = scmp.eq.s32.totalorder %s13, 0
    %p59 = por %p57, %p58
    %p60 = scmp.ne.s32.totalorder %s49, %s52
    %p61 = scmp.eq.s32.totalorder %s18, 1
    %p62 = por %p60, %p61
    %p63 = scmp.ne.s32.totalorder %s52, %s53
    %p64 = scmp.eq.s32.totalorder %s18, 0
    %p65 = por %p63, %p64
    %p66 = scmp.ne.s32.totalorder %s52, %s53
    %p67 = scmp.eq.s32.totalorder %s19, 1
    %p68 = por %p66, %p67
    %p70 = scmp.ne.s32.totalorder %s53, %s69
    %p71 = scmp.eq.s32.totalorder %s19, 0
    %p72 = por %p70, %p71
    %s73 = ssub.s32 %s13, %s20
    %p74 = scmp.eq.s32.totalorder %s73, 0
    %s76 = sadd.s32 %s75, 1
    %s77 = scalar_select %p74, %s75, %s76
    %p80 = pneg %p74
    %p81 = scmp.eq.s32.totalorder %s13, 1
    %p82 = por %p80, %p81
    %p83 = scmp.ne.s32.totalorder %s75, %s78
    %p84 = scmp.eq.s32.totalorder %s13, 0
    %p85 = por %p83, %p84
    %p86 = scmp.ne.s32.totalorder %s75, %s78
    %p87 = scmp.eq.s32.totalorder %s18, 1
    %p88 = por %p86, %p87
    %p89 = scmp.ne.s32.totalorder %s78, %s79
    %p90 = scmp.eq.s32.totalorder %s18, 0
    %p91 = por %p89, %p90
    %p92 = scmp.ne.s32.totalorder %s78, %s79
    %p93 = scmp.eq.s32.totalorder %s19, 1
    %p94 = por %p92, %p93
    %p96 = scmp.ne.s32.totalorder %s79, %s95
    %p97 = scmp.eq.s32.totalorder %s19, 0
    %p98 = por %p96, %p97
    %s99 = ssub.s32 %s13, %s20
    %p100 = scmp.eq.s32.totalorder %s99, 0
    %s102 = sadd.s32 %s101, 1
    %s103 = scalar_select %p100, %s101, %s102
    %p106 = pneg %p100
    %p107 = scmp.eq.s32.totalorder %s13, 1
    %p108 = por %p106, %p107
    %p109 = scmp.ne.s32.totalorder %s101, %s104
    %p110 = scmp.eq.s32.totalorder %s13, 0
    %p111 = por %p109, %p110
    %p112 = scmp.ne.s32.totalorder %s101, %s104
    %p113 = scmp.eq.s32.totalorder %s18, 1
    %p114 = por %p112, %p113
    %p115 = scmp.ne.s32.totalorder %s104, %s105
    %p116 = scmp.eq.s32.totalorder %s18, 0
    %p117 = por %p115, %p116
    %p118 = scmp.ne.s32.totalorder %s104, %s105
    %p119 = scmp.eq.s32.totalorder %s19, 1
    %p120 = por %p118, %p119
    %p122 = scmp.ne.s32.totalorder %s105, %s121
    %p123 = scmp.eq.s32.totalorder %s19, 0
    %p124 = por %p122, %p123
    %s125 = ssub.s32 %s13, %s20
    %p126 = scmp.eq.s32.totalorder %s125, 0
    %s128 = sadd.s32 %s127, 1
    %s129 = scalar_select %p126, %s127, %s128
    %p132 = pneg %p126
    %p133 = scmp.eq.s32.totalorder %s13, 1
    %p134 = por %p132, %p133
    %p135 = scmp.ne.s32.totalorder %s127, %s130
    %p136 = scmp.eq.s32.totalorder %s13, 0
    %p137 = por %p135, %p136
    %p138 = scmp.ne.s32.totalorder %s127, %s130
    %p139 = scmp.eq.s32.totalorder %s18, 1
    %p140 = por %p138, %p139
    %p141 = scmp.ne.s32.totalorder %s130, %s131
    %p142 = scmp.eq.s32.totalorder %s18, 0
    %p143 = por %p141, %p142
    %p144 = scmp.ne.s32.totalorder %s130, %s131
    %p145 = scmp.eq.s32.totalorder %s19, 1
    %p146 = por %p144, %p145
    %p148 = scmp.ne.s32.totalorder %s131, %s147
    %p149 = scmp.eq.s32.totalorder %s19, 0
    %p150 = por %p148, %p149
    %s152 = sadd.s32 %s151, 1
    %p155 = scmp.eq.s32.totalorder %s13, 1
    %p156 = scmp.ne.s32.totalorder %s151, %s153
    %p157 = scmp.eq.s32.totalorder %s13, 0
    %p158 = por %p156, %p157
    %p159 = scmp.ne.s32.totalorder %s151, %s153
    %p160 = scmp.eq.s32.totalorder %s18, 1
    %p161 = por %p159, %p160
    %p162 = scmp.ne.s32.totalorder %s153, %s154
    %p163 = scmp.eq.s32.totalorder %s18, 0
    %p164 = por %p162, %p163
    %p165 = scmp.ne.s32.totalorder %s153, %s154
    %p166 = scmp.eq.s32.totalorder %s19, 1
    %p167 = por %p165, %p166
    %p169 = scmp.ne.s32.totalorder %s154, %s168
    %p170 = scmp.eq.s32.totalorder %s19, 0
    %p171 = por %p169, %p170
    %s173 = sadd.s32 %s172, 1
    %p176 = scmp.eq.s32.totalorder %s13, 1
    %p177 = scmp.ne.s32.totalorder %s172, %s174
    %p178 = scmp.eq.s32.totalorder %s13, 0
    %p179 = por %p177, %p178
    %p180 = scmp.ne.s32.totalorder %s172, %s174
    %p181 = scmp.eq.s32.totalorder %s18, 1
    %p182 = por %p180, %p181
    %p183 = scmp.ne.s32.totalorder %s174, %s175
    %p184 = scmp.eq.s32.totalorder %s18, 0
    %p185 = por %p183, %p184
    %p186 = scmp.ne.s32.totalorder %s174, %s175
    %p187 = scmp.eq.s32.totalorder %s19, 1
    %p188 = por %p186, %p187
    %p190 = scmp.ne.s32.totalorder %s175, %s189
    %p191 = scmp.eq.s32.totalorder %s19, 0
    %p192 = por %p190, %p191
    %s193 = ssub.s32 %s13, %s20
    %p194 = scmp.eq.s32.totalorder %s193, 0
    %s196 = sadd.s32 %s195, 1
    %s197 = scalar_select %p194, %s195, %s196
    %p200 = pneg %p194
    %p201 = scmp.eq.s32.totalorder %s13, 1
    %p202 = por %p200, %p201
    %p203 = scmp.ne.s32.totalorder %s195, %s198
    %p204 = scmp.eq.s32.totalorder %s13, 0
    %p205 = por %p203, %p204
    %p206 = scmp.ne.s32.totalorder %s195, %s198
    %p207 = scmp.eq.s32.totalorder %s18, 1
    %p208 = por %p206, %p207
    %p209 = scmp.ne.s32.totalorder %s198, %s199
    %p210 = scmp.eq.s32.totalorder %s18, 0
    %p211 = por %p209, %p210
    %p212 = scmp.ne.s32.totalorder %s198, %s199
    %p213 = scmp.eq.s32.totalorder %s19, 1
    %p214 = por %p212, %p213
    %p216 = scmp.ne.s32.totalorder %s199, %s215
    %p217 = scmp.eq.s32.totalorder %s19, 0
    %p218 = por %p216, %p217
    %p219 = scmp.le.s32.totalorder 1, %s13
    %p220 = scmp.lt.s32.totalorder %s13, 3
    %p221 = pnand %p219, %p220
    %p222 = pneg %p221
    // Predicated region
    $region9: #{decoder_block_forward.10} parent=5 // pred_check
      _
    $region10: #{decoder_block_forward.10} parent=5 // pred_check_branch
      %224 = sbr.rel (%p221) target = $region12
    $region11: #{decoder_block_forward.10} parent=5 // pred_region
      %s225 = ssub.s32 %s13, 1
      // Predicated region
      $region13: #{decoder_block_forward.10} parent=11 // pred_check
        %p226 = pneg %p164
      $region14: #{decoder_block_forward.10} parent=11 // pred_check_branch
        %228 = sbr.rel (%p226) target = $region16
      $region15: #{decoder_block_forward.10} parent=11 // pred_region
        _
      $region16: #{decoder_block_forward.10} parent=11 // pred_fallthru
        _
      // Predicated region
      $region17: #{decoder_block_forward.10} parent=11 // pred_check
        %p229 = pneg %p185
      $region18: #{decoder_block_forward.10} parent=11 // pred_check_branch
        %231 = sbr.rel (%p229) target = $region20
      $region19: #{decoder_block_forward.10} parent=11 // pred_region
        _
      $region20: #{decoder_block_forward.10} parent=11 // pred_fallthru
        _
    $region12: #{decoder_block_forward.10} parent=5 // pred_fallthru
      _
    %p232 = scmp.lt.s32.totalorder %s13, 2
    // Predicated region
    $region21: #{decoder_block_forward.10} parent=5 // pred_check
      %p233 = pneg %p232
    $region22: #{decoder_block_forward.10} parent=5 // pred_check_branch
      %235 = sbr.rel (%p233) target = $region24
    $region23: #{decoder_block_forward.10} parent=5 // pred_region
      // Predicated region
      $region25: #{decoder_block_forward.10} parent=23 // pred_check
        %p236 = pneg %p33
      $region26: #{decoder_block_forward.10} parent=23 // pred_check_branch
        %238 = sbr.rel (%p236) target = $region28
      $region27: #{decoder_block_forward.10} parent=23 // pred_region
        %p239 = scmp.lt.s32.totalorder %s13, 1
        %s240 = scalar_select %p239, %s13, 1
        %s241 = smul.addr %s240, 8
        %s242 = scalar_lea.vmem %s0, %s241
      $region28: #{decoder_block_forward.10} parent=23 // pred_fallthru
        _
      // Predicated region
      $region29: #{decoder_block_forward.10} parent=23 // pred_check
        %p243 = pneg %p59
      $region30: #{decoder_block_forward.10} parent=23 // pred_check_branch
        %245 = sbr.rel (%p243) target = $region32
      $region31: #{decoder_block_forward.10} parent=23 // pred_region
        %p246 = scmp.lt.s32.totalorder %s13, 1
        %s247 = scalar_select %p246, %s13, 1
        %s248 = smul.addr %s247, 8
        %s249 = scalar_lea.vmem %s1, %s248
      $region32: #{decoder_block_forward.10} parent=23 // pred_fallthru
        _
      // Predicated region
      $region33: #{decoder_block_forward.10} parent=23 // pred_check
        %p250 = pneg %p85
      $region34: #{decoder_block_forward.10} parent=23 // pred_check_branch
        %252 = sbr.rel (%p250) target = $region36
      $region35: #{decoder_block_forward.10} parent=23 // pred_region
        %p253 = scmp.lt.s32.totalorder %s13, 1
        %s254 = scalar_select %p253, %s13, 1
        %s255 = smul.addr %s254, 8
        %s256 = scalar_lea.vmem %s2, %s255
      $region36: #{decoder_block_forward.10} parent=23 // pred_fallthru
        _
      // Predicated region
      $region37: #{decoder_block_forward.10} parent=23 // pred_check
        %p257 = pneg %p111
      $region38: #{decoder_block_forward.10} parent=23 // pred_check_branch
        %259 = sbr.rel (%p257) target = $region40
      $region39: #{decoder_block_forward.10} parent=23 // pred_region
        %p260 = scmp.lt.s32.totalorder %s13, 1
        %s261 = scalar_select %p260, %s13, 1
        %s262 = scalar_lea.vmem %s3, %s261
      $region40: #{decoder_block_forward.10} parent=23 // pred_fallthru
        _
      // Predicated region
      $region41: #{decoder_block_forward.10} parent=23 // pred_check
        %p263 = pneg %p137
      $region42: #{decoder_block_forward.10} parent=23 // pred_check_branch
        %265 = sbr.rel (%p263) target = $region44
      $region43: #{decoder_block_forward.10} parent=23 // pred_region
        %p266 = scmp.lt.s32.totalorder %s13, 1
        %s267 = scalar_select %p266, %s13, 1
        %s268 = smul.addr %s267, 8
        %s269 = scalar_lea.vmem %s4, %s268
      $region44: #{decoder_block_forward.10} parent=23 // pred_fallthru
        _
    $region24: #{decoder_block_forward.10} parent=5 // pred_fallthru
      _
    %p270 = scmp.le.s32.totalorder 1, %s13
    %p271 = scmp.lt.s32.totalorder %s13, 3
    %p272 = pnand %p270, %p271
    %p273 = pneg %p272
    // Predicated region
    $region45: #{decoder_block_forward.10} parent=5 // pred_check
      _
    $region46: #{decoder_block_forward.10} parent=5 // pred_check_branch
      %275 = sbr.rel (%p272) target = $region48
    $region47: #{decoder_block_forward.10} parent=5 // pred_region
      %s276 = ssub.s32 %s13, 1
      %p277 = scmp.lt.s32.totalorder %s18, 1
      %s278 = scalar_select %p277, %s18, 1
      %s279 = smul.addr %s278, 8
      %s280 = scalar_lea.vmem %s0, %s279
      %p281 = pneg %p39
      %p282 = pneg %p36
      %p283 = scmp.lt.s32.totalorder %s18, 1
      %s284 = scalar_select %p283, %s18, 1
      %s285 = smul.addr %s284, 8
      %s286 = scalar_lea.vmem %s1, %s285
      %p287 = pneg %p65
      %p288 = pneg %p62
      %p289 = scmp.lt.s32.totalorder %s18, 1
      %s290 = scalar_select %p289, %s18, 1
      %s291 = smul.addr %s290, 8
      %s292 = scalar_lea.vmem %s2, %s291
      %p293 = pneg %p91
      %p294 = pneg %p88
      %p295 = scmp.lt.s32.totalorder %s18, 1
      %s296 = scalar_select %p295, %s18, 1
      %s297 = scalar_lea.vmem %s3, %s296
      %p298 = pneg %p117
      %p299 = pneg %p114
      %p300 = scmp.lt.s32.totalorder %s18, 1
      %s301 = scalar_select %p300, %s18, 1
      %s302 = smul.addr %s301, 8
      %s303 = scalar_lea.vmem %s4, %s302
      %p304 = pneg %p143
      %p305 = pneg %p140
      %p306 = pneg %p164
      %p307 = pneg %p161
      %p308 = pneg %p185
      %p309 = pneg %p182
      %p310 = pneg %p211
      %p311 = pneg %p208
      %p312 = scmp.lt.s32.totalorder %s18, 1
      %s313 = scalar_select %p312, %s18, 1
      %s314 = smul.addr %s313, 8
      %s315 = scalar_lea.vmem %s7, %s314
      %p316 = scmp.lt.s32.totalorder %s18, 1
      %s317 = scalar_select %p316, %s18, 1
      %s318 = smul.addr %s317, 8
      %s319 = scalar_lea.vmem %s0, %s318
      %p320 = scmp.lt.s32.totalorder %s18, 1
      %s321 = scalar_select %p320, %s18, 1
      %s322 = smul.addr %s321, 8
      %s323 = scalar_lea.vmem %s1, %s322
      %p324 = scmp.lt.s32.totalorder %s18, 1
      %s325 = scalar_select %p324, %s18, 1
      %s326 = smul.addr %s325, 8
      %s327 = scalar_lea.vmem %s2, %s326
      %p328 = scmp.lt.s32.totalorder %s18, 1
      %s329 = scalar_select %p328, %s18, 1
      %s330 = scalar_lea.vmem %s3, %s329
      %p331 = scmp.lt.s32.totalorder %s18, 1
      %s332 = scalar_select %p331, %s18, 1
      %s333 = smul.addr %s332, 8
      %s334 = scalar_lea.vmem %s4, %s333
      %p335 = scmp.lt.s32.totalorder %s18, 1
      %s336 = scalar_select %p335, %s18, 1
      %s337 = smul.addr %s336, 8
      %s338 = scalar_lea.vmem %s7, %s337
      %v339 = vld [vmem:[%s319] sm:$0xff]
      %v340 = vmul.f32 %v339, 0.35355338
      %v341 = vld [vmem:[%s323] sm:$0xff]
      %v342 = vld [vmem:[%s327] sm:$0xff]
      %v343 = vld [vmem:[%s330] sm:$0x1]
      %v345 = vlaneseq
      %v346 = vshrl.u32 %v345, 7
      %v347 = vsub.s32 0, %v346
      %v348 = vrot.slane %v343, %v347
      %vm350 = vcmask 64512
      %v352 = vsel %vm350, %v340, 0
      %v355 = vsel %vm350, %v341, 0
      %357 = vmatprep.subr.mxu0 0.0
      %358 = vmatpush1.xpose.msra.mxu0 0.0
      %359 = vmatprep.subr.mxu0 0.0
      %360 = vmatpush1.xpose.msra.mxu0 0.0
      %361 = vmatprep.subr.mxu0 0.0
      %362 = vmatpush1.xpose.msra.mxu0 0.0
      %363 = vmatprep.subr.mxu0 0.0
      %364 = vmatpush1.xpose.msra.mxu0 0.0
      %365 = vmatprep.subr.mxu0 0.0
      %366 = vmatpush1.xpose.msra.mxu0 0.0
      %367 = vmatprep.subr.mxu0 0.0
      %368 = vmatpush1.xpose.msra.mxu0 0.0
      %369 = vmatprep.subr.mxu0 0.0
      %370 = vmatpush1.xpose.msra.mxu0 0.0
      %371 = vmatprep.subr.mxu0 0.0
      %372 = vmatpush1.xpose.msra.mxu0 0.0
      %373 = vmatprep.subr.mxu0 0.0
      %374 = vmatpush1.xpose.msra.mxu0 0.0
      %375 = vmatprep.subr.mxu0 0.0
      %376 = vmatpush1.xpose.msra.mxu0 0.0
      %377 = vmatprep.subr.mxu0 0.0
      %378 = vmatpush1.xpose.msra.mxu0 0.0
      %379 = vmatprep.subr.mxu0 0.0
      %380 = vmatpush1.xpose.msra.mxu0 0.0
      %381 = vmatprep.subr.mxu0 0.0
      %382 = vmatpush1.xpose.msra.mxu0 0.0
      %383 = vmatprep.subr.mxu0 0.0
      %384 = vmatpush1.xpose.msra.mxu0 0.0
      %385 = vmatprep.subr.mxu0 0.0
      %386 = vmatpush1.xpose.msra.mxu0 0.0
      %387 = vmatprep.subr.mxu0 0.0
      %388 = vmatpush1.xpose.msra.mxu0 %v355
      %389 = vmatprep.subr.mxu0 0.0
      %390 = vmatpush2.xpose.msra.mxu0 0.0
      %391 = vmatprep.subr.mxu0 0.0
      %392 = vmatpush2.xpose.msra.mxu0 0.0
      %393 = vmatprep.subr.mxu0 0.0
      %394 = vmatpush2.xpose.msra.mxu0 0.0
      %395 = vmatprep.subr.mxu0 0.0
      %396 = vmatpush2.xpose.msra.mxu0 0.0
      %397 = vmatprep.subr.mxu0 0.0
      %398 = vmatpush2.xpose.msra.mxu0 0.0
      %399 = vmatprep.subr.mxu0 0.0
      %400 = vmatpush2.xpose.msra.mxu0 0.0
      %401 = vmatprep.subr.mxu0 0.0
      %402 = vmatpush2.xpose.msra.mxu0 0.0
      %403 = vmatprep.subr.mxu0 0.0
      %404 = vmatpush2.xpose.msra.mxu0 0.0
      %405 = vmatprep.subr.mxu0 0.0
      %406 = vmatpush2.xpose.msra.mxu0 0.0
      %407 = vmatprep.subr.mxu0 0.0
      %408 = vmatpush2.xpose.msra.mxu0 0.0
      %409 = vmatprep.subr.mxu0 0.0
      %410 = vmatpush2.xpose.msra.mxu0 0.0
      %411 = vmatprep.subr.mxu0 0.0
      %412 = vmatpush2.xpose.msra.mxu0 0.0
      %413 = vmatprep.subr.mxu0 0.0
      %414 = vmatpush2.xpose.msra.mxu0 0.0
      %415 = vmatprep.subr.mxu0 0.0
      %416 = vmatpush2.xpose.msra.mxu0 0.0
      %417 = vmatprep.subr.mxu0 0.0
      %418 = vmatpush2.xpose.msra.mxu0 0.0
      %419 = vmatprep.subr.mxu0 0.0
      %420 = vmatpush2.xpose.msra.mxu0 0.0
      %421 = vmatprep.mubr.f32.mxu0 0.0
      %422 = vmatmul.mubr.f32.gmra.mxu0 %v352
      %v423 = vpop.f32.mrf.mxu0
      %v424 = vadd.f32 %v348, %v423
      %v425 = vpop.f32.mrf.mxu0
      %426 = vdwg.mxu0
      %v427 = vsel %vm350, %v424, -inf
      %428 = vmax.xlane.f32.xlu0 %v427
      %v429 = vpop.xlane.xlu0 %428
      %v430 = vsub.f32 %v424, %v429
      %v431 = vmul.f32 %v430, 1.442695
      %v432 = vpow.pop %v431
      %v433 = vsel %vm350, %v432, 0.0
      %434 = vadd.xlane.f32.xlu0 %v433
      %v435 = vpop.xlane.xlu0 %434
      %v436 = vrcp.pop %v435
      %v437 = vmul.f32 %v432, %v436
      %v439 = vsel %vm350, %v437, 0
      %441 = vmatprep.subr.mxu0 0.0
      %442 = vmatpush1.msra.mxu0 0.0
      %443 = vmatprep.subr.mxu0 0.0
      %444 = vmatpush1.msra.mxu0 0.0
      %445 = vmatprep.subr.mxu0 0.0
      %446 = vmatpush1.msra.mxu0 0.0
      %447 = vmatprep.subr.mxu0 0.0
      %448 = vmatpush1.msra.mxu0 0.0
      %449 = vmatprep.subr.mxu0 0.0
      %450 = vmatpush1.msra.mxu0 0.0
      %451 = vmatprep.subr.mxu0 0.0
      %452 = vmatpush1.msra.mxu0 0.0
      %453 = vmatprep.subr.mxu0 0.0
      %454 = vmatpush1.msra.mxu0 0.0
      %455 = vmatprep.subr.mxu0 0.0
      %456 = vmatpush1.msra.mxu0 0.0
      %457 = vmatprep.subr.mxu0 0.0
      %458 = vmatpush1.msra.mxu0 0.0
      %459 = vmatprep.subr.mxu0 0.0
      %460 = vmatpush1.msra.mxu0 0.0
      %461 = vmatprep.subr.mxu0 0.0
      %462 = vmatpush1.msra.mxu0 0.0
      %463 = vmatprep.subr.mxu0 0.0
      %464 = vmatpush1.msra.mxu0 0.0
      %465 = vmatprep.subr.mxu0 0.0
      %466 = vmatpush1.msra.mxu0 0.0
      %467 = vmatprep.subr.mxu0 0.0
      %468 = vmatpush1.msra.mxu0 0.0
      %469 = vmatprep.subr.mxu0 0.0
      %470 = vmatpush1.msra.mxu0 0.0
      %471 = vmatprep.subr.mxu0 0.0
      %472 = vmatpush1.msra.mxu0 %v342
      %473 = vmatprep.subr.mxu0 0.0
      %474 = vmatpush2.msra.mxu0 0.0
      %475 = vmatprep.subr.mxu0 0.0
      %476 = vmatpush2.msra.mxu0 0.0
      %477 = vmatprep.subr.mxu0 0.0
      %478 = vmatpush2.msra.mxu0 0.0
      %479 = vmatprep.subr.mxu0 0.0
      %480 = vmatpush2.msra.mxu0 0.0
      %481 = vmatprep.subr.mxu0 0.0
      %482 = vmatpush2.msra.mxu0 0.0
      %483 = vmatprep.subr.mxu0 0.0
      %484 = vmatpush2.msra.mxu0 0.0
      %485 = vmatprep.subr.mxu0 0.0
      %486 = vmatpush2.msra.mxu0 0.0
      %487 = vmatprep.subr.mxu0 0.0
      %488 = vmatpush2.msra.mxu0 0.0
      %489 = vmatprep.subr.mxu0 0.0
      %490 = vmatpush2.msra.mxu0 0.0
      %491 = vmatprep.subr.mxu0 0.0
      %492 = vmatpush2.msra.mxu0 0.0
      %493 = vmatprep.subr.mxu0 0.0
      %494 = vmatpush2.msra.mxu0 0.0
      %495 = vmatprep.subr.mxu0 0.0
      %496 = vmatpush2.msra.mxu0 0.0
      %497 = vmatprep.subr.mxu0 0.0
      %498 = vmatpush2.msra.mxu0 0.0
      %499 = vmatprep.subr.mxu0 0.0
      %500 = vmatpush2.msra.mxu0 0.0
      %501 = vmatprep.subr.mxu0 0.0
      %502 = vmatpush2.msra.mxu0 0.0
      %503 = vmatprep.subr.mxu0 0.0
      %504 = vmatpush2.msra.mxu0 0.0
      %505 = vmatprep.mubr.f32.mxu0 0.0
      %506 = vmatmul.mubr.f32.gmra.mxu0 %v439
      %v507 = vpop.f32.mrf.mxu0
      %v508 = vadd.f32 0.0, %v507
      %v509 = vpop.f32.mrf.mxu0
      %510 = vdwg.mxu0
      %511 = vrot.lane.b32.xlu0 %v340, 120
      %v512 = vpop.permute.xlu0 %511
      %513 = vrot.lane.b32.xlu0 %v341, 120
      %v514 = vpop.permute.xlu0 %513
      %v515 = vsel %vm350, %v512, 0
      %v517 = vsel %vm350, %v514, 0
      %519 = vmatprep.subr.mxu0 0.0
      %520 = vmatpush1.xpose.msra.mxu0 0.0
      %521 = vmatprep.subr.mxu0 0.0
      %522 = vmatpush1.xpose.msra.mxu0 0.0
      %523 = vmatprep.subr.mxu0 0.0
      %524 = vmatpush1.xpose.msra.mxu0 0.0
      %525 = vmatprep.subr.mxu0 0.0
      %526 = vmatpush1.xpose.msra.mxu0 0.0
      %527 = vmatprep.subr.mxu0 0.0
      %528 = vmatpush1.xpose.msra.mxu0 0.0
      %529 = vmatprep.subr.mxu0 0.0
      %530 = vmatpush1.xpose.msra.mxu0 0.0
      %531 = vmatprep.subr.mxu0 0.0
      %532 = vmatpush1.xpose.msra.mxu0 0.0
      %533 = vmatprep.subr.mxu0 0.0
      %534 = vmatpush1.xpose.msra.mxu0 0.0
      %535 = vmatprep.subr.mxu0 0.0
      %536 = vmatpush1.xpose.msra.mxu0 0.0
      %537 = vmatprep.subr.mxu0 0.0
      %538 = vmatpush1.xpose.msra.mxu0 0.0
      %539 = vmatprep.subr.mxu0 0.0
      %540 = vmatpush1.xpose.msra.mxu0 0.0
      %541 = vmatprep.subr.mxu0 0.0
      %542 = vmatpush1.xpose.msra.mxu0 0.0
      %543 = vmatprep.subr.mxu0 0.0
      %544 = vmatpush1.xpose.msra.mxu0 0.0
      %545 = vmatprep.subr.mxu0 0.0
      %546 = vmatpush1.xpose.msra.mxu0 0.0
      %547 = vmatprep.subr.mxu0 0.0
      %548 = vmatpush1.xpose.msra.mxu0 0.0
      %549 = vmatprep.subr.mxu0 0.0
      %550 = vmatpush1.xpose.msra.mxu0 %v517
      %551 = vmatprep.subr.mxu0 0.0
      %552 = vmatpush2.xpose.msra.mxu0 0.0
      %553 = vmatprep.subr.mxu0 0.0
      %554 = vmatpush2.xpose.msra.mxu0 0.0
      %555 = vmatprep.subr.mxu0 0.0
      %556 = vmatpush2.xpose.msra.mxu0 0.0
      %557 = vmatprep.subr.mxu0 0.0
      %558 = vmatpush2.xpose.msra.mxu0 0.0
      %559 = vmatprep.subr.mxu0 0.0
      %560 = vmatpush2.xpose.msra.mxu0 0.0
      %561 = vmatprep.subr.mxu0 0.0
      %562 = vmatpush2.xpose.msra.mxu0 0.0
      %563 = vmatprep.subr.mxu0 0.0
      %564 = vmatpush2.xpose.msra.mxu0 0.0
      %565 = vmatprep.subr.mxu0 0.0
      %566 = vmatpush2.xpose.msra.mxu0 0.0
      %567 = vmatprep.subr.mxu0 0.0
      %568 = vmatpush2.xpose.msra.mxu0 0.0
      %569 = vmatprep.subr.mxu0 0.0
      %570 = vmatpush2.xpose.msra.mxu0 0.0
      %571 = vmatprep.subr.mxu0 0.0
      %572 = vmatpush2.xpose.msra.mxu0 0.0
      %573 = vmatprep.subr.mxu0 0.0
      %574 = vmatpush2.xpose.msra.mxu0 0.0
      %575 = vmatprep.subr.mxu0 0.0
      %576 = vmatpush2.xpose.msra.mxu0 0.0
      %577 = vmatprep.subr.mxu0 0.0
      %578 = vmatpush2.xpose.msra.mxu0 0.0
      %579 = vmatprep.subr.mxu0 0.0
      %580 = vmatpush2.xpose.msra.mxu0 0.0
      %581 = vmatprep.subr.mxu0 0.0
      %582 = vmatpush2.xpose.msra.mxu0 0.0
      %583 = vmatprep.mubr.f32.mxu0 0.0
      %584 = vmatmul.mubr.f32.gmra.mxu0 %v515
      %v585 = vpop.f32.mrf.mxu0
      %v586 = vadd.f32 %v348, %v585
      %v587 = vpop.f32.mrf.mxu0
      %588 = vdwg.mxu0
      %v589 = vsel %vm350, %v586, -inf
      %590 = vmax.xlane.f32.xlu0 %v589
      %v591 = vpop.xlane.xlu0 %590
      %v592 = vsub.f32 %v586, %v591
      %v593 = vmul.f32 %v592, 1.442695
      %v594 = vpow.pop %v593
      %v595 = vsel %vm350, %v594, 0.0
      %596 = vadd.xlane.f32.xlu0 %v595
      %v597 = vpop.xlane.xlu0 %596
      %v598 = vrcp.pop %v597
      %v599 = vmul.f32 %v594, %v598
      %601 = vrot.lane.b32.xlu0 %v342, 120
      %v602 = vpop.permute.xlu0 %601
      %v605 = vsel %vm350, %v599, 0
      %607 = vmatprep.subr.mxu0 0.0
      %608 = vmatpush1.msra.mxu0 0.0
      %609 = vmatprep.subr.mxu0 0.0
      %610 = vmatpush1.msra.mxu0 0.0
      %611 = vmatprep.subr.mxu0 0.0
      %612 = vmatpush1.msra.mxu0 0.0
      %613 = vmatprep.subr.mxu0 0.0
      %614 = vmatpush1.msra.mxu0 0.0
      %615 = vmatprep.subr.mxu0 0.0
      %616 = vmatpush1.msra.mxu0 0.0
      %617 = vmatprep.subr.mxu0 0.0
      %618 = vmatpush1.msra.mxu0 0.0
      %619 = vmatprep.subr.mxu0 0.0
      %620 = vmatpush1.msra.mxu0 0.0
      %621 = vmatprep.subr.mxu0 0.0
      %622 = vmatpush1.msra.mxu0 0.0
      %623 = vmatprep.subr.mxu0 0.0
      %624 = vmatpush1.msra.mxu0 0.0
      %625 = vmatprep.subr.mxu0 0.0
      %626 = vmatpush1.msra.mxu0 0.0
      %627 = vmatprep.subr.mxu0 0.0
      %628 = vmatpush1.msra.mxu0 0.0
      %629 = vmatprep.subr.mxu0 0.0
      %630 = vmatpush1.msra.mxu0 0.0
      %631 = vmatprep.subr.mxu0 0.0
      %632 = vmatpush1.msra.mxu0 0.0
      %633 = vmatprep.subr.mxu0 0.0
      %634 = vmatpush1.msra.mxu0 0.0
      %635 = vmatprep.subr.mxu0 0.0
      %636 = vmatpush1.msra.mxu0 0.0
      %637 = vmatprep.subr.mxu0 0.0
      %638 = vmatpush1.msra.mxu0 %v602
      %639 = vmatprep.subr.mxu0 0.0
      %640 = vmatpush2.msra.mxu0 0.0
      %641 = vmatprep.subr.mxu0 0.0
      %642 = vmatpush2.msra.mxu0 0.0
      %643 = vmatprep.subr.mxu0 0.0
      %644 = vmatpush2.msra.mxu0 0.0
      %645 = vmatprep.subr.mxu0 0.0
      %646 = vmatpush2.msra.mxu0 0.0
      %647 = vmatprep.subr.mxu0 0.0
      %648 = vmatpush2.msra.mxu0 0.0
      %649 = vmatprep.subr.mxu0 0.0
      %650 = vmatpush2.msra.mxu0 0.0
      %651 = vmatprep.subr.mxu0 0.0
      %652 = vmatpush2.msra.mxu0 0.0
      %653 = vmatprep.subr.mxu0 0.0
      %654 = vmatpush2.msra.mxu0 0.0
      %655 = vmatprep.subr.mxu0 0.0
      %656 = vmatpush2.msra.mxu0 0.0
      %657 = vmatprep.subr.mxu0 0.0
      %658 = vmatpush2.msra.mxu0 0.0
      %659 = vmatprep.subr.mxu0 0.0
      %660 = vmatpush2.msra.mxu0 0.0
      %661 = vmatprep.subr.mxu0 0.0
      %662 = vmatpush2.msra.mxu0 0.0
      %663 = vmatprep.subr.mxu0 0.0
      %664 = vmatpush2.msra.mxu0 0.0
      %665 = vmatprep.subr.mxu0 0.0
      %666 = vmatpush2.msra.mxu0 0.0
      %667 = vmatprep.subr.mxu0 0.0
      %668 = vmatpush2.msra.mxu0 0.0
      %669 = vmatprep.subr.mxu0 0.0
      %670 = vmatpush2.msra.mxu0 0.0
      %671 = vmatprep.mubr.f32.mxu0 0.0
      %672 = vmatmul.mubr.f32.gmra.mxu0 %v605
      %v673 = vpop.f32.mrf.mxu0
      %v674 = vadd.f32 0.0, %v673
      %v675 = vpop.f32.mrf.mxu0
      %676 = vdwg.mxu0
      %677 = vrot.lane.b32.xlu0 %v340, 112
      %v678 = vpop.permute.xlu0 %677
      %679 = vrot.lane.b32.xlu0 %v341, 112
      %v680 = vpop.permute.xlu0 %679
      %v681 = vsel %vm350, %v678, 0
      %v683 = vsel %vm350, %v680, 0
      %685 = vmatprep.subr.mxu0 0.0
      %686 = vmatpush1.xpose.msra.mxu0 0.0
      %687 = vmatprep.subr.mxu0 0.0
      %688 = vmatpush1.xpose.msra.mxu0 0.0
      %689 = vmatprep.subr.mxu0 0.0
      %690 = vmatpush1.xpose.msra.mxu0 0.0
      %691 = vmatprep.subr.mxu0 0.0
      %692 = vmatpush1.xpose.msra.mxu0 0.0
      %693 = vmatprep.subr.mxu0 0.0
      %694 = vmatpush1.xpose.msra.mxu0 0.0
      %695 = vmatprep.subr.mxu0 0.0
      %696 = vmatpush1.xpose.msra.mxu0 0.0
      %697 = vmatprep.subr.mxu0 0.0
      %698 = vmatpush1.xpose.msra.mxu0 0.0
      %699 = vmatprep.subr.mxu0 0.0
      %700 = vmatpush1.xpose.msra.mxu0 0.0
      %701 = vmatprep.subr.mxu0 0.0
      %702 = vmatpush1.xpose.msra.mxu0 0.0
      %703 = vmatprep.subr.mxu0 0.0
      %704 = vmatpush1.xpose.msra.mxu0 0.0
      %705 = vmatprep.subr.mxu0 0.0
      %706 = vmatpush1.xpose.msra.mxu0 0.0
      %707 = vmatprep.subr.mxu0 0.0
      %708 = vmatpush1.xpose.msra.mxu0 0.0
      %709 = vmatprep.subr.mxu0 0.0
      %710 = vmatpush1.xpose.msra.mxu0 0.0
      %711 = vmatprep.subr.mxu0 0.0
      %712 = vmatpush1.xpose.msra.mxu0 0.0
      %713 = vmatprep.subr.mxu0 0.0
      %714 = vmatpush1.xpose.msra.mxu0 0.0
      %715 = vmatprep.subr.mxu0 0.0
      %716 = vmatpush1.xpose.msra.mxu0 %v683
      %717 = vmatprep.subr.mxu0 0.0
      %718 = vmatpush2.xpose.msra.mxu0 0.0
      %719 = vmatprep.subr.mxu0 0.0
      %720 = vmatpush2.xpose.msra.mxu0 0.0
      %721 = vmatprep.subr.mxu0 0.0
      %722 = vmatpush2.xpose.msra.mxu0 0.0
      %723 = vmatprep.subr.mxu0 0.0
      %724 = vmatpush2.xpose.msra.mxu0 0.0
      %725 = vmatprep.subr.mxu0 0.0
      %726 = vmatpush2.xpose.msra.mxu0 0.0
      %727 = vmatprep.subr.mxu0 0.0
      %728 = vmatpush2.xpose.msra.mxu0 0.0
      %729 = vmatprep.subr.mxu0 0.0
      %730 = vmatpush2.xpose.msra.mxu0 0.0
      %731 = vmatprep.subr.mxu0 0.0
      %732 = vmatpush2.xpose.msra.mxu0 0.0
      %733 = vmatprep.subr.mxu0 0.0
      %734 = vmatpush2.xpose.msra.mxu0 0.0
      %735 = vmatprep.subr.mxu0 0.0
      %736 = vmatpush2.xpose.msra.mxu0 0.0
      %737 = vmatprep.subr.mxu0 0.0
      %738 = vmatpush2.xpose.msra.mxu0 0.0
      %739 = vmatprep.subr.mxu0 0.0
      %740 = vmatpush2.xpose.msra.mxu0 0.0
      %741 = vmatprep.subr.mxu0 0.0
      %742 = vmatpush2.xpose.msra.mxu0 0.0
      %743 = vmatprep.subr.mxu0 0.0
      %744 = vmatpush2.xpose.msra.mxu0 0.0
      %745 = vmatprep.subr.mxu0 0.0
      %746 = vmatpush2.xpose.msra.mxu0 0.0
      %747 = vmatprep.subr.mxu0 0.0
      %748 = vmatpush2.xpose.msra.mxu0 0.0
      %749 = vmatprep.mubr.f32.mxu0 0.0
      %750 = vmatmul.mubr.f32.gmra.mxu0 %v681
      %v751 = vpop.f32.mrf.mxu0
      %v752 = vadd.f32 %v348, %v751
      %v753 = vpop.f32.mrf.mxu0
      %754 = vdwg.mxu0
      %v755 = vsel %vm350, %v752, -inf
      %756 = vmax.xlane.f32.xlu0 %v755
      %v757 = vpop.xlane.xlu0 %756
      %v758 = vsub.f32 %v752, %v757
      %v759 = vmul.f32 %v758, 1.442695
      %v760 = vpow.pop %v759
      %v761 = vsel %vm350, %v760, 0.0
      %762 = vadd.xlane.f32.xlu0 %v761
      %v763 = vpop.xlane.xlu0 %762
      %v764 = vrcp.pop %v763
      %v765 = vmul.f32 %v760, %v764
      %766 = vrot.lane.b32.xlu0 %v342, 112
      %v767 = vpop.permute.xlu0 %766
      %v770 = vsel %vm350, %v765, 0
      %772 = vmatprep.subr.mxu0 0.0
      %773 = vmatpush1.msra.mxu0 0.0
      %774 = vmatprep.subr.mxu0 0.0
      %775 = vmatpush1.msra.mxu0 0.0
      %776 = vmatprep.subr.mxu0 0.0
      %777 = vmatpush1.msra.mxu0 0.0
      %778 = vmatprep.subr.mxu0 0.0
      %779 = vmatpush1.msra.mxu0 0.0
      %780 = vmatprep.subr.mxu0 0.0
      %781 = vmatpush1.msra.mxu0 0.0
      %782 = vmatprep.subr.mxu0 0.0
      %783 = vmatpush1.msra.mxu0 0.0
      %784 = vmatprep.subr.mxu0 0.0
      %785 = vmatpush1.msra.mxu0 0.0
      %786 = vmatprep.subr.mxu0 0.0
      %787 = vmatpush1.msra.mxu0 0.0
      %788 = vmatprep.subr.mxu0 0.0
      %789 = vmatpush1.msra.mxu0 0.0
      %790 = vmatprep.subr.mxu0 0.0
      %791 = vmatpush1.msra.mxu0 0.0
      %792 = vmatprep.subr.mxu0 0.0
      %793 = vmatpush1.msra.mxu0 0.0
      %794 = vmatprep.subr.mxu0 0.0
      %795 = vmatpush1.msra.mxu0 0.0
      %796 = vmatprep.subr.mxu0 0.0
      %797 = vmatpush1.msra.mxu0 0.0
      %798 = vmatprep.subr.mxu0 0.0
      %799 = vmatpush1.msra.mxu0 0.0
      %800 = vmatprep.subr.mxu0 0.0
      %801 = vmatpush1.msra.mxu0 0.0
      %802 = vmatprep.subr.mxu0 0.0
      %803 = vmatpush1.msra.mxu0 %v767
      %804 = vmatprep.subr.mxu0 0.0
      %805 = vmatpush2.msra.mxu0 0.0
      %806 = vmatprep.subr.mxu0 0.0
      %807 = vmatpush2.msra.mxu0 0.0
      %808 = vmatprep.subr.mxu0 0.0
      %809 = vmatpush2.msra.mxu0 0.0
      %810 = vmatprep.subr.mxu0 0.0
      %811 = vmatpush2.msra.mxu0 0.0
      %812 = vmatprep.subr.mxu0 0.0
      %813 = vmatpush2.msra.mxu0 0.0
      %814 = vmatprep.subr.mxu0 0.0
      %815 = vmatpush2.msra.mxu0 0.0
      %816 = vmatprep.subr.mxu0 0.0
      %817 = vmatpush2.msra.mxu0 0.0
      %818 = vmatprep.subr.mxu0 0.0
      %819 = vmatpush2.msra.mxu0 0.0
      %820 = vmatprep.subr.mxu0 0.0
      %821 = vmatpush2.msra.mxu0 0.0
      %822 = vmatprep.subr.mxu0 0.0
      %823 = vmatpush2.msra.mxu0 0.0
      %824 = vmatprep.subr.mxu0 0.0
      %825 = vmatpush2.msra.mxu0 0.0
      %826 = vmatprep.subr.mxu0 0.0
      %827 = vmatpush2.msra.mxu0 0.0
      %828 = vmatprep.subr.mxu0 0.0
      %829 = vmatpush2.msra.mxu0 0.0
      %830 = vmatprep.subr.mxu0 0.0
      %831 = vmatpush2.msra.mxu0 0.0
      %832 = vmatprep.subr.mxu0 0.0
      %833 = vmatpush2.msra.mxu0 0.0
      %834 = vmatprep.subr.mxu0 0.0
      %835 = vmatpush2.msra.mxu0 0.0
      %836 = vmatprep.mubr.f32.mxu0 0.0
      %837 = vmatmul.mubr.f32.gmra.mxu0 %v770
      %v838 = vpop.f32.mrf.mxu0
      %v839 = vadd.f32 0.0, %v838
      %v840 = vpop.f32.mrf.mxu0
      %841 = vdwg.mxu0
      %842 = vrot.lane.b32.xlu0 %v340, 104
      %v843 = vpop.permute.xlu0 %842
      %844 = vrot.lane.b32.xlu0 %v341, 104
      %v845 = vpop.permute.xlu0 %844
      %v846 = vsel %vm350, %v843, 0
      %v848 = vsel %vm350, %v845, 0
      %850 = vmatprep.subr.mxu0 0.0
      %851 = vmatpush1.xpose.msra.mxu0 0.0
      %852 = vmatprep.subr.mxu0 0.0
      %853 = vmatpush1.xpose.msra.mxu0 0.0
      %854 = vmatprep.subr.mxu0 0.0
      %855 = vmatpush1.xpose.msra.mxu0 0.0
      %856 = vmatprep.subr.mxu0 0.0
      %857 = vmatpush1.xpose.msra.mxu0 0.0
      %858 = vmatprep.subr.mxu0 0.0
      %859 = vmatpush1.xpose.msra.mxu0 0.0
      %860 = vmatprep.subr.mxu0 0.0
      %861 = vmatpush1.xpose.msra.mxu0 0.0
      %862 = vmatprep.subr.mxu0 0.0
      %863 = vmatpush1.xpose.msra.mxu0 0.0
      %864 = vmatprep.subr.mxu0 0.0
      %865 = vmatpush1.xpose.msra.mxu0 0.0
      %866 = vmatprep.subr.mxu0 0.0
      %867 = vmatpush1.xpose.msra.mxu0 0.0
      %868 = vmatprep.subr.mxu0 0.0
      %869 = vmatpush1.xpose.msra.mxu0 0.0
      %870 = vmatprep.subr.mxu0 0.0
      %871 = vmatpush1.xpose.msra.mxu0 0.0
      %872 = vmatprep.subr.mxu0 0.0
      %873 = vmatpush1.xpose.msra.mxu0 0.0
      %874 = vmatprep.subr.mxu0 0.0
      %875 = vmatpush1.xpose.msra.mxu0 0.0
      %876 = vmatprep.subr.mxu0 0.0
      %877 = vmatpush1.xpose.msra.mxu0 0.0
      %878 = vmatprep.subr.mxu0 0.0
      %879 = vmatpush1.xpose.msra.mxu0 0.0
      %880 = vmatprep.subr.mxu0 0.0
      %881 = vmatpush1.xpose.msra.mxu0 %v848
      %882 = vmatprep.subr.mxu0 0.0
      %883 = vmatpush2.xpose.msra.mxu0 0.0
      %884 = vmatprep.subr.mxu0 0.0
      %885 = vmatpush2.xpose.msra.mxu0 0.0
      %886 = vmatprep.subr.mxu0 0.0
      %887 = vmatpush2.xpose.msra.mxu0 0.0
      %888 = vmatprep.subr.mxu0 0.0
      %889 = vmatpush2.xpose.msra.mxu0 0.0
      %890 = vmatprep.subr.mxu0 0.0
      %891 = vmatpush2.xpose.msra.mxu0 0.0
      %892 = vmatprep.subr.mxu0 0.0
      %893 = vmatpush2.xpose.msra.mxu0 0.0
      %894 = vmatprep.subr.mxu0 0.0
      %895 = vmatpush2.xpose.msra.mxu0 0.0
      %896 = vmatprep.subr.mxu0 0.0
      %897 = vmatpush2.xpose.msra.mxu0 0.0
      %898 = vmatprep.subr.mxu0 0.0
      %899 = vmatpush2.xpose.msra.mxu0 0.0
      %900 = vmatprep.subr.mxu0 0.0
      %901 = vmatpush2.xpose.msra.mxu0 0.0
      %902 = vmatprep.subr.mxu0 0.0
      %903 = vmatpush2.xpose.msra.mxu0 0.0
      %904 = vmatprep.subr.mxu0 0.0
      %905 = vmatpush2.xpose.msra.mxu0 0.0
      %906 = vmatprep.subr.mxu0 0.0
      %907 = vmatpush2.xpose.msra.mxu0 0.0
      %908 = vmatprep.subr.mxu0 0.0
      %909 = vmatpush2.xpose.msra.mxu0 0.0
      %910 = vmatprep.subr.mxu0 0.0
      %911 = vmatpush2.xpose.msra.mxu0 0.0
      %912 = vmatprep.subr.mxu0 0.0
      %913 = vmatpush2.xpose.msra.mxu0 0.0
      %914 = vmatprep.mubr.f32.mxu0 0.0
      %915 = vmatmul.mubr.f32.gmra.mxu0 %v846
      %v916 = vpop.f32.mrf.mxu0
      %v917 = vadd.f32 %v348, %v916
      %v918 = vpop.f32.mrf.mxu0
      %919 = vdwg.mxu0
      %v920 = vsel %vm350, %v917, -inf
      %921 = vmax.xlane.f32.xlu0 %v920
      %v922 = vpop.xlane.xlu0 %921
      %v923 = vsub.f32 %v917, %v922
      %v924 = vmul.f32 %v923, 1.442695
      %v925 = vpow.pop %v924
      %v926 = vsel %vm350, %v925, 0.0
      %927 = vadd.xlane.f32.xlu0 %v926
      %v928 = vpop.xlane.xlu0 %927
      %v929 = vrcp.pop %v928
      %v930 = vmul.f32 %v925, %v929
      %931 = vrot.lane.b32.xlu0 %v342, 104
      %v932 = vpop.permute.xlu0 %931
      %v935 = vsel %vm350, %v930, 0
      %937 = vmatprep.subr.mxu0 0.0
      %938 = vmatpush1.msra.mxu0 0.0
      %939 = vmatprep.subr.mxu0 0.0
      %940 = vmatpush1.msra.mxu0 0.0
      %941 = vmatprep.subr.mxu0 0.0
      %942 = vmatpush1.msra.mxu0 0.0
      %943 = vmatprep.subr.mxu0 0.0
      %944 = vmatpush1.msra.mxu0 0.0
      %945 = vmatprep.subr.mxu0 0.0
      %946 = vmatpush1.msra.mxu0 0.0
      %947 = vmatprep.subr.mxu0 0.0
      %948 = vmatpush1.msra.mxu0 0.0
      %949 = vmatprep.subr.mxu0 0.0
      %950 = vmatpush1.msra.mxu0 0.0
      %951 = vmatprep.subr.mxu0 0.0
      %952 = vmatpush1.msra.mxu0 0.0
      %953 = vmatprep.subr.mxu0 0.0
      %954 = vmatpush1.msra.mxu0 0.0
      %955 = vmatprep.subr.mxu0 0.0
      %956 = vmatpush1.msra.mxu0 0.0
      %957 = vmatprep.subr.mxu0 0.0
      %958 = vmatpush1.msra.mxu0 0.0
      %959 = vmatprep.subr.mxu0 0.0
      %960 = vmatpush1.msra.mxu0 0.0
      %961 = vmatprep.subr.mxu0 0.0
      %962 = vmatpush1.msra.mxu0 0.0
      %963 = vmatprep.subr.mxu0 0.0
      %964 = vmatpush1.msra.mxu0 0.0
      %965 = vmatprep.subr.mxu0 0.0
      %966 = vmatpush1.msra.mxu0 0.0
      %967 = vmatprep.subr.mxu0 0.0
      %968 = vmatpush1.msra.mxu0 %v932
      %969 = vmatprep.subr.mxu0 0.0
      %970 = vmatpush2.msra.mxu0 0.0
      %971 = vmatprep.subr.mxu0 0.0
      %972 = vmatpush2.msra.mxu0 0.0
      %973 = vmatprep.subr.mxu0 0.0
      %974 = vmatpush2.msra.mxu0 0.0
      %975 = vmatprep.subr.mxu0 0.0
      %976 = vmatpush2.msra.mxu0 0.0
      %977 = vmatprep.subr.mxu0 0.0
      %978 = vmatpush2.msra.mxu0 0.0
      %979 = vmatprep.subr.mxu0 0.0
      %980 = vmatpush2.msra.mxu0 0.0
      %981 = vmatprep.subr.mxu0 0.0
      %982 = vmatpush2.msra.mxu0 0.0
      %983 = vmatprep.subr.mxu0 0.0
      %984 = vmatpush2.msra.mxu0 0.0
      %985 = vmatprep.subr.mxu0 0.0
      %986 = vmatpush2.msra.mxu0 0.0
      %987 = vmatprep.subr.mxu0 0.0
      %988 = vmatpush2.msra.mxu0 0.0
      %989 = vmatprep.subr.mxu0 0.0
      %990 = vmatpush2.msra.mxu0 0.0
      %991 = vmatprep.subr.mxu0 0.0
      %992 = vmatpush2.msra.mxu0 0.0
      %993 = vmatprep.subr.mxu0 0.0
      %994 = vmatpush2.msra.mxu0 0.0
      %995 = vmatprep.subr.mxu0 0.0
      %996 = vmatpush2.msra.mxu0 0.0
      %997 = vmatprep.subr.mxu0 0.0
      %998 = vmatpush2.msra.mxu0 0.0
      %999 = vmatprep.subr.mxu0 0.0
      %1000 = vmatpush2.msra.mxu0 0.0
      %1001 = vmatprep.mubr.f32.mxu0 0.0
      %1002 = vmatmul.mubr.f32.gmra.mxu0 %v935
      %v1003 = vpop.f32.mrf.mxu0
      %v1004 = vadd.f32 0.0, %v1003
      %v1005 = vpop.f32.mrf.mxu0
      %1006 = vdwg.mxu0
      %1008 = vrot.lane.b32.xlu0 %v674, 8
      %v1009 = vpop.permute.xlu0 %1008
      %1012 = vrot.lane.b32.xlu0 %v839, 16
      %v1013 = vpop.permute.xlu0 %1012
      %1016 = vrot.lane.b32.xlu0 %v1004, 24
      %v1017 = vpop.permute.xlu0 %1016
      %v1019 = vsel %vm350, %v508, %v1009
      %vm1020 = vcmask 130048
      %v1021 = vsel %vm1020, %v1019, %v1013
      %vm1022 = vcmask 195584
      %v1023 = vsel %vm1022, %v1021, %v1017
      %v1024 = vld [vmem:[%s5] sm:$0xff]
      %v1025 = vld [vmem:[%s5 + $0x8] sm:$0xff]
      %v1026 = vld [vmem:[%s5 + $0x10] sm:$0xff]
      %v1027 = vld [vmem:[%s5 + $0x18] sm:$0xff]
      %v1028 = vld [vmem:[%s6] sm:$0x1]
      %v1030 = vlaneseq
      %v1031 = vshrl.u32 %v1030, 7
      %v1032 = vsub.s32 0, %v1031
      %v1033 = vrot.slane %v1028, %v1032
      %vm1035 = vcmask 261120
      %v1037 = vsel %vm1035, %v1023, 0
      %1039 = vmatprep.subr.mxu0 0.0
      %1040 = vmatpush1.msra.mxu0 0.0
      %1041 = vmatprep.subr.mxu0 0.0
      %1042 = vmatpush1.msra.mxu0 0.0
      %1043 = vmatprep.subr.mxu0 0.0
      %1044 = vmatpush1.msra.mxu0 0.0
      %1045 = vmatprep.subr.mxu0 0.0
      %1046 = vmatpush1.msra.mxu0 0.0
      %1047 = vmatprep.subr.mxu0 0.0
      %1048 = vmatpush1.msra.mxu0 0.0
      %1049 = vmatprep.subr.mxu0 0.0
      %1050 = vmatpush1.msra.mxu0 0.0
      %1051 = vmatprep.subr.mxu0 0.0
      %1052 = vmatpush1.msra.mxu0 0.0
      %1053 = vmatprep.subr.mxu0 0.0
      %1054 = vmatpush1.msra.mxu0 0.0
      %1055 = vmatprep.subr.mxu0 0.0
      %1056 = vmatpush1.msra.mxu0 0.0
      %1057 = vmatprep.subr.mxu0 0.0
      %1058 = vmatpush1.msra.mxu0 0.0
      %1059 = vmatprep.subr.mxu0 0.0
      %1060 = vmatpush1.msra.mxu0 0.0
      %1061 = vmatprep.subr.mxu0 0.0
      %1062 = vmatpush1.msra.mxu0 0.0
      %1063 = vmatprep.subr.mxu0 0.0
      %1064 = vmatpush1.msra.mxu0 %v1027
      %1065 = vmatprep.subr.mxu0 0.0
      %1066 = vmatpush1.msra.mxu0 %v1026
      %1067 = vmatprep.subr.mxu0 0.0
      %1068 = vmatpush1.msra.mxu0 %v1025
      %1069 = vmatprep.subr.mxu0 0.0
      %1070 = vmatpush1.msra.mxu0 %v1024
      %1071 = vmatprep.subr.mxu0 0.0
      %1072 = vmatpush2.msra.mxu0 0.0
      %1073 = vmatprep.subr.mxu0 0.0
      %1074 = vmatpush2.msra.mxu0 0.0
      %1075 = vmatprep.subr.mxu0 0.0
      %1076 = vmatpush2.msra.mxu0 0.0
      %1077 = vmatprep.subr.mxu0 0.0
      %1078 = vmatpush2.msra.mxu0 0.0
      %1079 = vmatprep.subr.mxu0 0.0
      %1080 = vmatpush2.msra.mxu0 0.0
      %1081 = vmatprep.subr.mxu0 0.0
      %1082 = vmatpush2.msra.mxu0 0.0
      %1083 = vmatprep.subr.mxu0 0.0
      %1084 = vmatpush2.msra.mxu0 0.0
      %1085 = vmatprep.subr.mxu0 0.0
      %1086 = vmatpush2.msra.mxu0 0.0
      %1087 = vmatprep.subr.mxu0 0.0
      %1088 = vmatpush2.msra.mxu0 0.0
      %1089 = vmatprep.subr.mxu0 0.0
      %1090 = vmatpush2.msra.mxu0 0.0
      %1091 = vmatprep.subr.mxu0 0.0
      %1092 = vmatpush2.msra.mxu0 0.0
      %1093 = vmatprep.subr.mxu0 0.0
      %1094 = vmatpush2.msra.mxu0 0.0
      %1095 = vmatprep.subr.mxu0 0.0
      %1096 = vmatpush2.msra.mxu0 0.0
      %1097 = vmatprep.subr.mxu0 0.0
      %1098 = vmatpush2.msra.mxu0 0.0
      %1099 = vmatprep.subr.mxu0 0.0
      %1100 = vmatpush2.msra.mxu0 0.0
      %1101 = vmatprep.subr.mxu0 0.0
      %1102 = vmatpush2.msra.mxu0 0.0
      %1103 = vmatprep.mubr.f32.mxu0 0.0
      %1104 = vmatmul.mubr.f32.gmra.mxu0 %v1037
      %v1105 = vpop.f32.mrf.mxu0
      %v1106 = vadd.f32 %v1033, %v1105
      %v1107 = vpop.f32.mrf.mxu0
      %1108 = vdwg.mxu0
      %v1109 = vld [vmem:[%s334] sm:$0xff]
      %v1110 = vadd.f32 %v1106, %v1109
      %1111 = vst.msk [vmem:[%s338] sm:$0xff] %vm1035, %v1110
      %p1112 = scmp.lt.s32.totalorder %s18, 1
      %s1113 = scalar_select %p1112, %s18, 1
      %s1114 = smul.addr %s1113, 8
      %s1115 = scalar_lea.vmem %s7, %s1114
      // Predicated region
      $region49: #{decoder_block_forward.10} parent=47 // pred_check
        %p1116 = pneg %p208
      $region50: #{decoder_block_forward.10} parent=47 // pred_check_branch
        %1118 = sbr.rel (%p1116) target = $region52
      $region51: #{decoder_block_forward.10} parent=47 // pred_region
        _
      $region52: #{decoder_block_forward.10} parent=47 // pred_fallthru
        _
    $region48: #{decoder_block_forward.10} parent=5 // pred_fallthru
      _
    %p1119 = scmp.le.s32.totalorder 2, %s13
    // Predicated region
    $region53: #{decoder_block_forward.10} parent=5 // pred_check
      %p1120 = pneg %p1119
    $region54: #{decoder_block_forward.10} parent=5 // pred_check_branch
      %1122 = sbr.rel (%p1120) target = $region56
    $region55: #{decoder_block_forward.10} parent=5 // pred_region
      %s1123 = ssub.s32 %s13, 2
      // Predicated region
      $region57: #{decoder_block_forward.10} parent=55 // pred_check
        %p1124 = pneg %p214
      $region58: #{decoder_block_forward.10} parent=55 // pred_check_branch
        %1126 = sbr.rel (%p1124) target = $region60
      $region59: #{decoder_block_forward.10} parent=55 // pred_region
        %p1127 = scmp.lt.s32.totalorder %s19, 1
        %s1128 = scalar_select %p1127, %s19, 1
        %s1129 = smul.addr %s1128, 8
        %s1130 = scalar_lea.vmem %s7, %s1129
      $region60: #{decoder_block_forward.10} parent=55 // pred_fallthru
        _
    $region56: #{decoder_block_forward.10} parent=5 // pred_fallthru
      _
  $region6: #{decoder_block_forward.10} parent=0 // loop_footer
    %s17 = sadd.s32 1, %s13
  $region7: #{decoder_block_forward.10} parent=0 // loop_footer_branch
    %12 = sbr.rel target = $region3
  $region8: #{decoder_block_forward.10} parent=0 // loop_exit
    _

</llo_original>
